<compile_context>
chip_gen: v6e
topology: v6e:2x2x1
jax: 0.10.0
libtpu: 0.0.40
codegen_flags: <defaults>
</compile_context>

<pallas_src>
import jax
import jax.numpy as jnp
from jax.experimental import pallas as pl
from jax.experimental.pallas import tpu as pltpu


# --------------------------------------------------------------------------
# Fused kernel: 1x1 conv (matmul) + folded BN + SiLU + 2x nearest upsample
# --------------------------------------------------------------------------
def _fused_lateral_up2x_kernel(x_ref, w_ref, b_ref, fpn_ref, up_ref):
    # x_ref  : (rows, C_in)        bf16 activations (rows = th * W)
    # w_ref  : (C_in, C_out)       bf16 1x1 conv weight, BN scale folded in
    # b_ref  : (1, C_out)          f32  folded BN bias
    # fpn_ref: (rows, C_out)       lateral_conv0 output tile (out dtype)
    # up_ref : (th, 2, 2W, C_out)  2x nearest upsample tile (out dtype),
    #                              row-dup axis outer, column-dup interleaved
    y = jnp.dot(x_ref[...], w_ref[...], preferred_element_type=jnp.float32)
    y = y + b_ref[...]                      # BatchNorm2d (eval) bias, f32
    y = y * jax.nn.sigmoid(y)               # SiLU, f32 epilogue (v5e-safe)
    y = y.astype(fpn_ref.dtype)             # single narrowing cast
    fpn_ref[...] = y

    th, _, w2, c = up_ref.shape             # static block shape
    w = w2 // 2
    # NOTE: if W is not a multiple of 8 the reshape below implies an in-VMEM
    # relayout (correct, XLU-slot work); real FPN sizes (16/20/40/80) are fine.
    y3 = y.reshape(th, w, c)
    # Column duplication: (th, W, C) -> (th, 2W, C), sublane interleave (XLU).
    slab = jnp.broadcast_to(y3[:, :, None, :], (th, w, 2, c)).reshape(th, w2, c)
    # Row duplication: two lane/sublane-dense slab stores (no masked vst.msk).
    up_ref[:, 0, :, :] = slab
    up_ref[:, 1, :, :] = slab


# --------------------------------------------------------------------------
# Tile selection helpers
# --------------------------------------------------------------------------
def _tpu_vmem_capacity_bytes():
    try:
        return int(pltpu.get_tpu_info().vmem_capacity_bytes)
    except Exception:
        return 64 << 20          # conservative fallback (v7x per-core VMEM)


def _pick_row_tile(nh, w, per_row_bytes, fixed_bytes, vmem_budget, *,
                   target_rows=1024, min_grid=2):
    """Largest th with th | nh that fits the VMEM budget.

    Prefers (th*W) % 8 == 0 (dense stores), keeps >= min_grid grid steps so
    v7x's two TensorCores both get work, and targets ~target_rows matmul rows
    per step (measured mem-bound kernels reach ~85% of HBM roofline there).
    """
    divs = [t for t in range(1, nh + 1) if nh % t == 0]

    def fits(t):
        return fixed_bytes + t * per_row_bytes <= vmem_budget

    def dense(t):
        return (t * w) % 8 == 0 or t == nh   # full extent is always legal

    good = [t for t in divs if fits(t) and dense(t)]
    if not good:
        good = [t for t in divs if dense(t)] or [nh]
    split = [t for t in good if nh // t >= min_grid] or good
    under = [t for t in split if t * w <= max(target_rows, w)]
    return max(under) if under else min(split)


# --------------------------------------------------------------------------
# NHWC core: lateral_conv0 (1x1 conv + BN + SiLU) + 2x nearest upsample
# --------------------------------------------------------------------------
def fused_lateral_conv_upsample_nhwc(x_nhwc, w_io, scale, bias, *,
                                     out_dtype=jnp.bfloat16,
                                     target_rows=1024):
    """Returns (fpn_out0_nhwc, f_out0_nhwc).

    Activations are cast to bf16 at this boundary (MXU operands); math is
    f32-accumulate with an f32 SiLU epilogue; outputs default to bf16
    (intentional inference-mode quantization -> halves HBM writeback)."""
    N, H, W, C_in = x_nhwc.shape
    C_out = w_io.shape[1]
    NH = N * H
    M = NH * W

    # Enforce bf16 at the kernel boundary so the input DMA reads half bytes.
    x_nhwc = x_nhwc.astype(jnp.bfloat16)
    x2d = x_nhwc.reshape(M, C_in)                      # contiguous view

    # Fold BN scale into the weight (eval mode); MXU operands in bf16.
    w_scaled = (w_io.astype(jnp.float32) * scale[None, :]).astype(jnp.bfloat16)
    b2d = bias.reshape(1, C_out).astype(jnp.float32)

    out_bytes = jnp.dtype(out_dtype).itemsize
    vmem_cap = _tpu_vmem_capacity_bytes()
    vmem_limit = min(vmem_cap // 2, 64 << 20)          # 64 MiB v5e/v6e, 32 MiB v7x
    # Per feature-map-row VMEM footprint (double-buffered in/out + f32 scratch).
    per_row = (2 * W * C_in * 2                        # x tile, bf16, 2 bufs
               + 2 * 5 * W * C_out * out_bytes         # fpn + up tiles, 2 bufs
               + 6 * W * C_out * 4)                    # f32 y + interleave slack
    fixed = 2 * C_in * C_out * 2 + 4 * C_out * 4       # weight + bias
    th = _pick_row_tile(NH, W, per_row, fixed, (vmem_limit * 3) // 4,
                        target_rows=target_rows)
    rows = th * W
    grid = (NH // th,)

    cost = pl.CostEstimate(
        flops=2 * M * C_in * C_out,
        transcendentals=M * C_out,
        bytes_accessed=(M * C_in * 2 + C_in * C_out * 2
                        + 5 * M * C_out * out_bytes))

    fpn2d, up4d = pl.pallas_call(
        _fused_lateral_up2x_kernel,
        out_shape=(
            jax.ShapeDtypeStruct((M, C_out), out_dtype),
            jax.ShapeDtypeStruct((NH, 2, 2 * W, C_out), out_dtype),
        ),
        grid_spec=pltpu.PrefetchScalarGridSpec(
            num_scalar_prefetch=0,
            grid=grid,
            in_specs=[
                pl.BlockSpec((rows, C_in), lambda i: (i, 0)),
                pl.BlockSpec((C_in, C_out), lambda i: (0, 0)),
                pl.BlockSpec((1, C_out), lambda i: (0, 0)),
            ],
            out_specs=[
                pl.BlockSpec((rows, C_out), lambda i: (i, 0)),
                # Row-duplicate axis lives OUTSIDE the last two dims -> the
                # (2W, C) trailing tile is lane/sublane dense (unmasked vst).
                # (pipeline_mode=pl.Buffered(3) is a cheap follow-up sweep if
                #  the up writeback DMA is still exposed at large tiles.)
                pl.BlockSpec((th, 2, 2 * W, C_out), lambda i: (i, 0, 0, 0)),
            ],
        ),
        compiler_params=pltpu.CompilerParams(
            dimension_semantics=("parallel",),
            vmem_limit_bytes=vmem_limit),
        cost_estimate=cost,
    )(x2d, w_scaled, b2d)

    fpn = fpn2d.reshape(N, H, W, C_out)                # free view
    up = up4d.reshape(N, 2 * H, 2 * W, C_out)          # contiguous: no transpose
    return fpn, up


# --------------------------------------------------------------------------
# ALC_FPN forward (well-defined portion); PyTorch-style NCHW adapter
# --------------------------------------------------------------------------
def alc_fpn_forward(x0_nchw, conv_w_oihw, gamma, beta, mean, var, eps=1e-3, *,
                    nhwc_outputs=False, out_dtype=jnp.bfloat16):
    # TODO(synk): CSPDarknet backbone, BLA blocks, bu_conv1 / C3_n4 / pan_out1
    # and `outputs` are undefined in the reference snippet; the `dark5`
    # feature x0 is taken directly as input and we stop after the last
    # well-defined op (the 2x nearest upsample).
    # NOTE: eps=1e-3 matches YOLOX BaseConv's BatchNorm (nn.BatchNorm2d default
    # would be 1e-5).
    N, C_in, H, W = x0_nchw.shape
    C_out = conv_w_oihw.shape[0]

    scale = gamma / jnp.sqrt(var + eps)
    bias = beta - mean * scale

    # PyTorch OIHW (C_out, C_in, 1, 1) -> (C_in, C_out) matmul weight.
    w_io = jnp.transpose(conv_w_oihw.reshape(C_out, C_in), (1, 0))

    # NCHW -> NHWC adapter copy; the bf16 convert fuses into this copy so the
    # kernel DMA reads half the bytes.
    x_nhwc = jnp.transpose(x0_nchw, (0, 2, 3, 1)).astype(jnp.bfloat16)

    fpn_nhwc, up_nhwc = fused_lateral_conv_upsample_nhwc(
        x_nhwc, w_io, scale, bias, out_dtype=out_dtype)

    if nhwc_outputs:
        # Preferred: avoids relaying the 4x-upsampled activation through HBM
        # again just for NCHW layout (that transpose costs more than the kernel).
        return fpn_nhwc, up_nhwc
    return (jnp.transpose(fpn_nhwc, (0, 3, 1, 2)),
            jnp.transpose(up_nhwc, (0, 3, 1, 2)))


# --------------------------------------------------------------------------
# Pure-JAX (f32) reference for correctness checking
# --------------------------------------------------------------------------
def _reference(x0_nchw, conv_w_oihw, gamma, beta, mean, var, eps=1e-3):
    C_out, C_in = conv_w_oihw.shape[:2]
    scale = gamma / jnp.sqrt(var + eps)
    bias = beta - mean * scale
    y = jnp.einsum('nchw,oc->nohw', x0_nchw, conv_w_oihw.reshape(C_out, C_in))
    y = y * scale[None, :, None, None] + bias[None, :, None, None]
    y = y * jax.nn.sigmoid(y)
    up = jnp.repeat(jnp.repeat(y, 2, axis=2), 2, axis=3)
    return y, up


if __name__ == "__main__":
    key = jax.random.PRNGKey(0)
    k0, k1, k2, k3, k4, k5 = jax.random.split(key, 6)

    # ALC_FPN(width=0.25): lateral_conv0 maps 1024*0.25=256 -> 512*0.25=128
    width = 0.25
    in_channels = [256, 512, 1024]
    c_in = int(in_channels[2] * width)    # 256
    c_out = int(in_channels[1] * width)   # 128
    N, H, W = 2, 16, 16

    x0 = jax.random.normal(k0, (N, c_in, H, W), jnp.float32)       # dark5, NCHW
    conv_w = jax.random.normal(k1, (c_out, c_in, 1, 1), jnp.float32) * 0.05
    gamma = 1.0 + 0.1 * jax.random.normal(k2, (c_out,), jnp.float32)
    beta = 0.1 * jax.random.normal(k3, (c_out,), jnp.float32)
    mean = 0.1 * jax.random.normal(k4, (c_out,), jnp.float32)
    var = jnp.abs(jax.random.normal(k5, (c_out,), jnp.float32)) + 1.0

    # PyTorch-facing NCHW interface.
    fpn_out0, f_out0 = alc_fpn_forward(x0, conv_w, gamma, beta, mean, var)
    fpn_out0 = jax.block_until_ready(fpn_out0)
    f_out0 = jax.block_until_ready(f_out0)

    # Preferred performance path (no NCHW relayout of the upsampled tensor).
    fpn_nhwc, up_nhwc = alc_fpn_forward(x0, conv_w, gamma, beta, mean, var,
                                        nhwc_outputs=True)
    fpn_nhwc = jax.block_until_ready(fpn_nhwc)
    up_nhwc = jax.block_until_ready(up_nhwc)

    ref_fpn, ref_up = _reference(x0, conv_w, gamma, beta, mean, var)
    assert fpn_out0.shape == (N, c_out, H, W)
    assert f_out0.shape == (N, c_out, 2 * H, 2 * W)
    assert fpn_nhwc.shape == (N, H, W, c_out)
    assert up_nhwc.shape == (N, 2 * H, 2 * W, c_out)
    # bf16 matmul operands + bf16 outputs with f32 accumulation/epilogue:
    # intentional inference-mode quantization -> ~1e-2 tolerance.
    assert jnp.allclose(fpn_out0.astype(jnp.float32), ref_fpn,
                        atol=3e-2, rtol=3e-2)
    assert jnp.allclose(f_out0.astype(jnp.float32), ref_up,
                        atol=3e-2, rtol=3e-2)
    assert jnp.allclose(up_nhwc.astype(jnp.float32),
                        jnp.transpose(ref_up, (0, 2, 3, 1)),
                        atol=3e-2, rtol=3e-2)

    print("KERNEL_OK")
</pallas_src>

<mosaic_0001>
module attributes {stable_mosaic.version = 11 : i64} {
  func.func @_fused_lateral_up2x_kernel(%arg0: i32, %arg1: memref<256x256xbf16, #tpu.memory_space<vmem>>, %arg2: memref<256x128xbf16, #tpu.memory_space<vmem>>, %arg3: memref<1x128xf32, #tpu.memory_space<vmem>>, %arg4: memref<256x128xbf16, #tpu.memory_space<vmem>>, %arg5: memref<16x2x32x128xbf16, #tpu.memory_space<vmem>>) attributes {dimension_semantics = [#tpu.dimension_semantics<parallel>], iteration_bounds = array<i64: 2>, scalar_prefetch = 0 : i64, scratch_operands = 0 : i64, tpu.core_type = #tpu.core_type<tc>, window_params = [{transform_indices = @transform_0, window_bounds = array<i64: 256, 256>}, {pipeline_mode = #tpu.pipeline_mode<synchronous>, transform_indices = @transform_1, window_bounds = array<i64: 256, 128>}, {pipeline_mode = #tpu.pipeline_mode<synchronous>, transform_indices = @transform_2, window_bounds = array<i64: 1, 128>}, {transform_indices = @transform_3, window_bounds = array<i64: 256, 128>}, {transform_indices = @transform_4, window_bounds = array<i64: 16, 2, 32, 128>}]} {
    %c0 = arith.constant 0 : index
    %c0_0 = arith.constant 0 : index
    %0 = vector.load %arg1[%c0, %c0_0] : memref<256x256xbf16, #tpu.memory_space<vmem>>, vector<256x256xbf16>
    %c0_1 = arith.constant 0 : index
    %c0_2 = arith.constant 0 : index
    %1 = vector.load %arg2[%c0_1, %c0_2] : memref<256x128xbf16, #tpu.memory_space<vmem>>, vector<256x128xbf16>
    %cst = arith.constant dense<0.000000e+00> : vector<256x128xf32>
    %2 = tpu.matmul %0, %1, %cst {dimension_numbers = #tpu.dot_dimension_numbers<[1], [0], [0], [1], [0, 0, 1, 1], [], []>} : vector<256x256xbf16>, vector<256x128xbf16>, vector<256x128xf32> -> vector<256x128xf32>
    %c0_3 = arith.constant 0 : index
    %c0_4 = arith.constant 0 : index
    %3 = vector.load %arg3[%c0_3, %c0_4] : memref<1x128xf32, #tpu.memory_space<vmem>>, vector<1x128xf32>
    %4 = vector.broadcast %3 : vector<1x128xf32> to vector<256x128xf32>
    %5 = arith.addf %2, %4 : vector<256x128xf32>
    %6 = arith.negf %5 : vector<256x128xf32>
    %7 = math.exp %6 : vector<256x128xf32>
    %cst_5 = arith.constant 1.000000e+00 : f32
    %8 = vector.broadcast %cst_5 : f32 to vector<256x128xf32>
    %9 = arith.addf %8, %7 : vector<256x128xf32>
    %10 = arith.divf %8, %9 : vector<256x128xf32>
    %11 = arith.mulf %5, %10 : vector<256x128xf32>
    %12 = arith.truncf %11 : vector<256x128xf32> to vector<256x128xbf16>
    %c0_6 = arith.constant 0 : index
    %c0_7 = arith.constant 0 : index
    %13 = vector.load %arg4[%c0_6, %c0_7] : memref<256x128xbf16, #tpu.memory_space<vmem>>, vector<256x128xbf16>
    tpu.vector_store %arg4[%c0_6, %c0_7], %12 {strides = array<i32>} : memref<256x128xbf16, #tpu.memory_space<vmem>>, vector<256x128xbf16>,
    %14 = vector.shape_cast %12 : vector<256x128xbf16> to vector<16x16x128xbf16>
    %15 = vector.shape_cast %14 : vector<16x16x128xbf16> to vector<16x16x1x128xbf16>
    %16 = vector.shape_cast %15 : vector<16x16x1x128xbf16> to vector<16x16x1x128xbf16>
    %17 = vector.broadcast %16 : vector<16x16x1x128xbf16> to vector<16x16x2x128xbf16>
    %18 = vector.shape_cast %17 : vector<16x16x2x128xbf16> to vector<16x32x128xbf16>
    %c0_8 = arith.constant 0 : index
    %c0_9 = arith.constant 0 : index
    %c0_10 = arith.constant 0 : index
    %c0_11 = arith.constant 0 : index
    %19 = vector.load %arg5[%c0_8, %c0_9, %c0_10, %c0_11] : memref<16x2x32x128xbf16, #tpu.memory_space<vmem>>, vector<16x1x32x128xbf16>
    %20 = vector.shape_cast %19 : vector<16x1x32x128xbf16> to vector<16x32x128xbf16>
    %21 = vector.shape_cast %18 : vector<16x32x128xbf16> to vector<16x1x32x128xbf16>
    tpu.vector_store %arg5[%c0_8, %c0_9, %c0_10, %c0_11], %21 {strides = array<i32>} : memref<16x2x32x128xbf16, #tpu.memory_space<vmem>>, vector<16x1x32x128xbf16>,
    %c0_12 = arith.constant 0 : index
    %c1 = arith.constant 1 : index
    %c0_13 = arith.constant 0 : index
    %c0_14 = arith.constant 0 : index
    %22 = vector.load %arg5[%c0_12, %c1, %c0_13, %c0_14] : memref<16x2x32x128xbf16, #tpu.memory_space<vmem>>, vector<16x1x32x128xbf16>
    %23 = vector.shape_cast %22 : vector<16x1x32x128xbf16> to vector<16x32x128xbf16>
    %24 = vector.shape_cast %18 : vector<16x32x128xbf16> to vector<16x1x32x128xbf16>
    tpu.vector_store %arg5[%c0_12, %c1, %c0_13, %c0_14], %24 {strides = array<i32>} : memref<16x2x32x128xbf16, #tpu.memory_space<vmem>>, vector<16x1x32x128xbf16>,
    return
  }
  func.func @transform_0(%arg0: i32) -> (i32, i32) {
    %c0_i32 = arith.constant 0 : i32
    %c0_i32_0 = arith.constant 0 : i32
    return %arg0, %c0_i32 : i32, i32
  }
  func.func @transform_1(%arg0: i32) -> (i32, i32) {
    %c0_i32 = arith.constant 0 : i32
    %c0_i32_0 = arith.constant 0 : i32
    %c0_i32_1 = arith.constant 0 : i32
    return %c0_i32, %c0_i32_0 : i32, i32
  }
  func.func @transform_2(%arg0: i32) -> (i32, i32) {
    %c0_i32 = arith.constant 0 : i32
    %c0_i32_0 = arith.constant 0 : i32
    %c0_i32_1 = arith.constant 0 : i32
    return %c0_i32, %c0_i32_0 : i32, i32
  }
  func.func @transform_3(%arg0: i32) -> (i32, i32) {
    %c0_i32 = arith.constant 0 : i32
    %c0_i32_0 = arith.constant 0 : i32
    return %arg0, %c0_i32 : i32, i32
  }
  func.func @transform_4(%arg0: i32) -> (i32, i32, i32, i32) {
    %c0_i32 = arith.constant 0 : i32
    %c0_i32_0 = arith.constant 0 : i32
    %c0_i32_1 = arith.constant 0 : i32
    %c0_i32_2 = arith.constant 0 : i32
    return %arg0, %c0_i32, %c0_i32_0, %c0_i32_1 : i32, i32, i32, i32
  }
}

</mosaic_0001>

<llo_original>
// kernel: tpu_custom_call.1
$region0: #{tpu_custom_call.1}
  #allocation0 [shape = 'u32[]', space=smem, size = 0x4, offset = 0x4, fixed_abs, tag = 'smem constant byte address 0x4 - core index']
  #allocation1 [shape = 'u32[144,128]{1,0:T(1,128)}', space=vmem, size = 0x12000, scoped, tag = 'internal scratch']
  %s0 = inlined_call_operand.hbm [shape: bf16[512,256], index: 0, kind: input, shape index: {}]
  %s1 = inlined_call_operand.hbm [shape: bf16[256,128], index: 1, kind: input, shape index: {}]
  %s2 = inlined_call_operand.vmem [shape: f32[1,128], index: 2, kind: input, shape index: {}]
  %s3 = inlined_call_operand.hbm [shape: bf16[512,128], index: 3, kind: output, shape index: {0}]
  %s4 = inlined_call_operand.hbm [shape: bf16[32,2,32,128], index: 4, kind: output, shape index: {1}]
  %5 = xla_tuple %s3, %s4
  %s6 = sld [smem:[#allocation0]]
  $region61: #{tpu_custom_call.1} parent=0
    _
  %s8 = ssub.s32 1, %s6
  %s9 = scalar_select 0, %s8, %s6
  $region1: #{tpu_custom_call.1} parent=0
    #allocation2 [shape = 'u8[262144]{0}', space=vmem, size = 0x40000, scoped, tag = 'input window, operand 0']
    #allocation3 [shape = 's32[2]{0}', space=sflag, size = 0x8, scoped, tag = 'scoped memory for tpu_custom_call.1']
    #allocation4 [shape = 's32[2]{0}', space=sflag, size = 0x8, scoped, tag = 'scoped memory for tpu_custom_call.1']
    #allocation5 [shape = 'u8[65536]{0}', space=vmem, size = 0x10000, scoped, tag = 'input window, operand 1, single buffered']
    #allocation6 [shape = 's32[1]{0}', space=sflag, size = 0x4, scoped, tag = 'scoped memory for tpu_custom_call.1']
    #allocation7 [shape = 'u8[131072]{0}', space=vmem, size = 0x20000, scoped, tag = 'output window, operand 0']
    #allocation8 [shape = 'u8[524288]{0}', space=vmem, size = 0x80000, scoped, tag = 'output window, operand 1']
    #allocation9 [shape = 's32[2]{0}', space=sflag, size = 0x8, scoped, tag = 'scoped memory for tpu_custom_call.1']
    %10 = vsyncpa [#allocation3], 0
    %s11 = scalar_lea.sflag [#allocation3], 1
    %12 = vsyncpa %s11, 0
    %13 = vsyncpa [#allocation6], 0
    %14 = vsyncpa [#allocation4], 0
    %s15 = scalar_lea.sflag [#allocation4], 1
    %16 = vsyncpa %s15, 0
    %17 = vsyncpa [#allocation9], 0
    %s18 = scalar_lea.sflag [#allocation9], 1
    %19 = vsyncpa %s18, 0
    loop: start=0, step=1, limit=4
    $region2: #{tpu_custom_call.1} parent=1 // loop_pre_header
      _
    $region3: #{tpu_custom_call.1} parent=1 // loop_header
      %s21 = sphi 0, %s25
      %p22 = scmp.ge.s32.totalorder %s21, 4
      %s31 = sphi 0, %s33
      %s34 = sphi 0, %s31
      %s35 = sphi 0, %s34
      %s51 = sphi 0, %s35
      %s55 = sphi 0, %s55
      %s57 = sphi 0, %s55
      %s58 = sphi 0, %s57
      %s72 = sphi 0, %s58
      %s76 = sphi 0, %s76
      %s78 = sphi 0, %s76
      %s79 = sphi 0, %s78
      %s93 = sphi 0, %s79
      %s99 = sphi 0, %s101
      %s102 = sphi 0, %s99
      %s103 = sphi 0, %s102
      %s119 = sphi 0, %s103
      %s125 = sphi 0, %s127
      %s128 = sphi 0, %s125
      %s129 = sphi 0, %s128
      %s145 = sphi 0, %s129
    $region4: #{tpu_custom_call.1} parent=1 // loop_header_branch
      %24 = sbr.rel (%p22) target = $region8
    $region5: #{tpu_custom_call.1} parent=1 // loop_body
      %s26 = ssub.s32 %s21, 1
      %s27 = ssub.s32 %s21, 2
      %s28 = sadd.s32 %s21, 1
      %s29 = ssub.s32 %s21, %s28
      %p30 = scmp.eq.s32.totalorder %s29, 0
      %s32 = sadd.s32 %s31, 1
      %s33 = scalar_select %p30, %s31, %s32
      %p36 = pneg %p30
      %p37 = scmp.eq.s32.totalorder %s21, 1
      %p38 = por %p36, %p37
      %p39 = scmp.ne.s32.totalorder %s31, %s34
      %p40 = scmp.eq.s32.totalorder %s21, 0
      %p41 = por %p39, %p40
      %p42 = scmp.ne.s32.totalorder %s31, %s34
      %p43 = scmp.eq.s32.totalorder %s26, 1
      %p44 = por %p42, %p43
      %p45 = scmp.ne.s32.totalorder %s34, %s35
      %p46 = scmp.eq.s32.totalorder %s26, 0
      %p47 = por %p45, %p46
      %p48 = scmp.ne.s32.totalorder %s34, %s35
      %p49 = scmp.eq.s32.totalorder %s27, 1
      %p50 = por %p48, %p49
      %p52 = scmp.ne.s32.totalorder %s35, %s51
      %p53 = scmp.eq.s32.totalorder %s27, 0
      %p54 = por %p52, %p53
      %s56 = sadd.s32 %s55, 1
      %p59 = scmp.eq.s32.totalorder %s21, 1
      %p60 = scmp.ne.s32.totalorder %s55, %s57
      %p61 = scmp.eq.s32.totalorder %s21, 0
      %p62 = por %p60, %p61
      %p63 = scmp.ne.s32.totalorder %s55, %s57
      %p64 = scmp.eq.s32.totalorder %s26, 1
      %p65 = por %p63, %p64
      %p66 = scmp.ne.s32.totalorder %s57, %s58
      %p67 = scmp.eq.s32.totalorder %s26, 0
      %p68 = por %p66, %p67
      %p69 = scmp.ne.s32.totalorder %s57, %s58
      %p70 = scmp.eq.s32.totalorder %s27, 1
      %p71 = por %p69, %p70
      %p73 = scmp.ne.s32.totalorder %s58, %s72
      %p74 = scmp.eq.s32.totalorder %s27, 0
      %p75 = por %p73, %p74
      %s77 = sadd.s32 %s76, 1
      %p80 = scmp.eq.s32.totalorder %s21, 1
      %p81 = scmp.ne.s32.totalorder %s76, %s78
      %p82 = scmp.eq.s32.totalorder %s21, 0
      %p83 = por %p81, %p82
      %p84 = scmp.ne.s32.totalorder %s76, %s78
      %p85 = scmp.eq.s32.totalorder %s26, 1
      %p86 = por %p84, %p85
      %p87 = scmp.ne.s32.totalorder %s78, %s79
      %p88 = scmp.eq.s32.totalorder %s26, 0
      %p89 = por %p87, %p88
      %p90 = scmp.ne.s32.totalorder %s78, %s79
      %p91 = scmp.eq.s32.totalorder %s27, 1
      %p92 = por %p90, %p91
      %p94 = scmp.ne.s32.totalorder %s79, %s93
      %p95 = scmp.eq.s32.totalorder %s27, 0
      %p96 = por %p94, %p95
      %s97 = ssub.s32 %s21, %s28
      %p98 = scmp.eq.s32.totalorder %s97, 0
      %s100 = sadd.s32 %s99, 1
      %s101 = scalar_select %p98, %s99, %s100
      %p104 = pneg %p98
      %p105 = scmp.eq.s32.totalorder %s21, 1
      %p106 = por %p104, %p105
      %p107 = scmp.ne.s32.totalorder %s99, %s102
      %p108 = scmp.eq.s32.totalorder %s21, 0
      %p109 = por %p107, %p108
      %p110 = scmp.ne.s32.totalorder %s99, %s102
      %p111 = scmp.eq.s32.totalorder %s26, 1
      %p112 = por %p110, %p111
      %p113 = scmp.ne.s32.totalorder %s102, %s103
      %p114 = scmp.eq.s32.totalorder %s26, 0
      %p115 = por %p113, %p114
      %p116 = scmp.ne.s32.totalorder %s102, %s103
      %p117 = scmp.eq.s32.totalorder %s27, 1
      %p118 = por %p116, %p117
      %p120 = scmp.ne.s32.totalorder %s103, %s119
      %p121 = scmp.eq.s32.totalorder %s27, 0
      %p122 = por %p120, %p121
      %s123 = ssub.s32 %s21, %s28
      %p124 = scmp.eq.s32.totalorder %s123, 0
      %s126 = sadd.s32 %s125, 1
      %s127 = scalar_select %p124, %s125, %s126
      %p130 = pneg %p124
      %p131 = scmp.eq.s32.totalorder %s21, 1
      %p132 = por %p130, %p131
      %p133 = scmp.ne.s32.totalorder %s125, %s128
      %p134 = scmp.eq.s32.totalorder %s21, 0
      %p135 = por %p133, %p134
      %p136 = scmp.ne.s32.totalorder %s125, %s128
      %p137 = scmp.eq.s32.totalorder %s26, 1
      %p138 = por %p136, %p137
      %p139 = scmp.ne.s32.totalorder %s128, %s129
      %p140 = scmp.eq.s32.totalorder %s26, 0
      %p141 = por %p139, %p140
      %p142 = scmp.ne.s32.totalorder %s128, %s129
      %p143 = scmp.eq.s32.totalorder %s27, 1
      %p144 = por %p142, %p143
      %p146 = scmp.ne.s32.totalorder %s129, %s145
      %p147 = scmp.eq.s32.totalorder %s27, 0
      %p148 = por %p146, %p147
      %p149 = scmp.le.s32.totalorder 1, %s21
      %p150 = scmp.lt.s32.totalorder %s21, 3
      %p151 = pnand %p149, %p150
      %p152 = pneg %p151
      // Predicated region
      $region9: #{tpu_custom_call.1} parent=5 // pred_check
        _
      $region10: #{tpu_custom_call.1} parent=5 // pred_check_branch
        %154 = sbr.rel (%p151) target = $region12
      $region11: #{tpu_custom_call.1} parent=5 // pred_region
        %s155 = ssub.s32 %s21, 1
        // Predicated region
        $region13: #{tpu_custom_call.1} parent=11 // pred_check
          %p156 = pneg %p68
        $region14: #{tpu_custom_call.1} parent=11 // pred_check_branch
          %158 = sbr.rel (%p156) target = $region16
        $region15: #{tpu_custom_call.1} parent=11 // pred_region
          %s160 = ssub.s32 2048, 2048
          %161 = vsyncadd [#allocation6], %s160
          %s162 = sshll.u32 [#allocation5], 4
          %s163 = int_to_ptr.vmem [resolvable:$true] %s162
          %168 = dma.hbm_to_vmem [thread:$0]  %s1, 2048, %s163, [#allocation6], 64, 64, 4
        $region16: #{tpu_custom_call.1} parent=11 // pred_fallthru
          _
        // Predicated region
        $region17: #{tpu_custom_call.1} parent=11 // pred_check
          %p169 = pneg %p89
        $region18: #{tpu_custom_call.1} parent=11 // pred_check_branch
          %171 = sbr.rel (%p169) target = $region20
        $region19: #{tpu_custom_call.1} parent=11 // pred_region
          _
        $region20: #{tpu_custom_call.1} parent=11 // pred_fallthru
          _
      $region12: #{tpu_custom_call.1} parent=5 // pred_fallthru
        _
      %p172 = scmp.lt.s32.totalorder %s21, 2
      // Predicated region
      $region21: #{tpu_custom_call.1} parent=5 // pred_check
        %p173 = pneg %p172
      $region22: #{tpu_custom_call.1} parent=5 // pred_check_branch
        %175 = sbr.rel (%p173) target = $region24
      $region23: #{tpu_custom_call.1} parent=5 // pred_region
        // Predicated region
        $region25: #{tpu_custom_call.1} parent=23 // pred_check
          %p176 = pneg %p41
        $region26: #{tpu_custom_call.1} parent=23 // pred_check_branch
          %178 = sbr.rel (%p176) target = $region28
        $region27: #{tpu_custom_call.1} parent=23 // pred_region
          %s179 = sand.u32 %s31, 1
          %s180 = scalar_lea.sflag [#allocation3], %s179
          %s181 = sand.u32 %s31, 1
          %s182 = smul.addr %s181, 256
          %s183 = scalar_lea.vmem [#allocation2], %s182
          %s184 = smul.u32 32, %s21
          %s186 = ssub.s32 4096, 4096
          %187 = vsyncadd %s180, %s186
          %s188 = smul.addr %s184, 2
          %s189 = smul.addr %s188, 64
          %s190 = scalar_lea.hbm %s0, %s189
          %s191 = sshll.u32 %s183, 4
          %s192 = int_to_ptr.vmem [resolvable:$true] %s191
          %197 = dma.hbm_to_vmem [thread:$0]  %s190, 4096, %s192, %s180, 128, 128, 8
        $region28: #{tpu_custom_call.1} parent=23 // pred_fallthru
          _
      $region24: #{tpu_custom_call.1} parent=5 // pred_fallthru
        _
      %p198 = scmp.le.s32.totalorder 1, %s21
      %p199 = scmp.lt.s32.totalorder %s21, 3
      %p200 = pnand %p198, %p199
      %p201 = pneg %p200
      // Predicated region
      $region29: #{tpu_custom_call.1} parent=5 // pred_check
        _
      $region30: #{tpu_custom_call.1} parent=5 // pred_check_branch
        %203 = sbr.rel (%p200) target = $region32
      $region31: #{tpu_custom_call.1} parent=5 // pred_region
        %s204 = ssub.s32 %s21, 1
        %s205 = sand.u32 %s34, 1
        %s206 = scalar_lea.sflag [#allocation3], %s205
        %s207 = sand.u32 %s34, 1
        %s208 = smul.addr %s207, 256
        %s209 = scalar_lea.vmem [#allocation2], %s208
        // Predicated region
        $region33: #{tpu_custom_call.1} parent=31 // pred_check
          %p210 = pneg %p47
        $region34: #{tpu_custom_call.1} parent=31 // pred_check_branch
          %212 = sbr.rel (%p210) target = $region36
        $region35: #{tpu_custom_call.1} parent=31 // pred_region
          %213 = dma.done %s206, 4096
        $region36: #{tpu_custom_call.1} parent=31 // pred_fallthru
          _
        // Predicated region
        $region37: #{tpu_custom_call.1} parent=31 // pred_check
          %p214 = pneg %p68
        $region38: #{tpu_custom_call.1} parent=31 // pred_check_branch
          %216 = sbr.rel (%p214) target = $region40
        $region39: #{tpu_custom_call.1} parent=31 // pred_region
          %217 = dma.done [#allocation6], 2048
        $region40: #{tpu_custom_call.1} parent=31 // pred_fallthru
          _
        %s218 = sand.u32 %s34, 1
        %s219 = scalar_lea.sflag [#allocation3], %s218
        %s220 = sand.u32 %s34, 1
        %s221 = smul.addr %s220, 256
        %s222 = scalar_lea.vmem [#allocation2], %s221
        %p223 = pneg %p47
        %p224 = pneg %p44
        %p225 = pneg %p68
        %p226 = pneg %p65
        %p227 = pneg %p89
        %p228 = pneg %p86
        %p229 = pneg %p115
        %p230 = pneg %p112
        %s231 = sand.u32 %s102, 1
        %s232 = scalar_lea.sflag [#allocation4], %s231
        %s233 = sand.u32 %s102, 1
        %s234 = smul.addr %s233, 128
        %s235 = scalar_lea.vmem [#allocation7], %s234
        %p236 = pneg %p141
        %p237 = pneg %p138
        %s238 = sand.u32 %s128, 1
        %s239 = scalar_lea.sflag [#allocation9], %s238
        %s240 = sand.u32 %s128, 1
        %s241 = smul.addr %s240, 512
        %s242 = scalar_lea.vmem [#allocation8], %s241
        %s243 = smul.u32 32, %s26
        %s244 = smul.u32 32, %s26
        %s245 = smul.u32 16, %s26
        %v247 = vld [vmem:[%s209] sm:$0xff]
        %v248 = vld [vmem:[%s209 + $0x8] sm:$0xff]
        %v249 = vld [vmem:[%s209 + $0x10] sm:$0xff]
        %v250 = vld [vmem:[%s209 + $0x18] sm:$0xff]
        %v251 = vld [vmem:[%s209 + $0x20] sm:$0xff]
        %v252 = vld [vmem:[%s209 + $0x28] sm:$0xff]
        %v253 = vld [vmem:[%s209 + $0x30] sm:$0xff]
        %v254 = vld [vmem:[%s209 + $0x38] sm:$0xff]
        %v255 = vld [vmem:[%s209 + $0x40] sm:$0xff]
        %v256 = vld [vmem:[%s209 + $0x48] sm:$0xff]
        %v257 = vld [vmem:[%s209 + $0x50] sm:$0xff]
        %v258 = vld [vmem:[%s209 + $0x58] sm:$0xff]
        %v259 = vld [vmem:[%s209 + $0x60] sm:$0xff]
        %v260 = vld [vmem:[%s209 + $0x68] sm:$0xff]
        %v261 = vld [vmem:[%s209 + $0x70] sm:$0xff]
        %v262 = vld [vmem:[%s209 + $0x78] sm:$0xff]
        %v263 = vld [vmem:[%s209 + $0x80] sm:$0xff]
        %v264 = vld [vmem:[%s209 + $0x88] sm:$0xff]
        %v265 = vld [vmem:[%s209 + $0x90] sm:$0xff]
        %v266 = vld [vmem:[%s209 + $0x98] sm:$0xff]
        %v267 = vld [vmem:[%s209 + $0xa0] sm:$0xff]
        %v268 = vld [vmem:[%s209 + $0xa8] sm:$0xff]
        %v269 = vld [vmem:[%s209 + $0xb0] sm:$0xff]
        %v270 = vld [vmem:[%s209 + $0xb8] sm:$0xff]
        %v271 = vld [vmem:[%s209 + $0xc0] sm:$0xff]
        %v272 = vld [vmem:[%s209 + $0xc8] sm:$0xff]
        %v273 = vld [vmem:[%s209 + $0xd0] sm:$0xff]
        %v274 = vld [vmem:[%s209 + $0xd8] sm:$0xff]
        %v275 = vld [vmem:[%s209 + $0xe0] sm:$0xff]
        %v276 = vld [vmem:[%s209 + $0xe8] sm:$0xff]
        %v277 = vld [vmem:[%s209 + $0xf0] sm:$0xff]
        %v278 = vld [vmem:[%s209 + $0xf8] sm:$0xff]
        %v279 = vld [vmem:[#allocation5] sm:$0xf]
        %v280 = vld [vmem:[#allocation5 + $0x4] sm:$0xf]
        %v281 = vld [vmem:[#allocation5 + $0x8] sm:$0xf]
        %v282 = vld [vmem:[#allocation5 + $0xc] sm:$0xf]
        %v283 = vld [vmem:[#allocation5 + $0x10] sm:$0xf]
        %v284 = vld [vmem:[#allocation5 + $0x14] sm:$0xf]
        %v285 = vld [vmem:[#allocation5 + $0x18] sm:$0xf]
        %v286 = vld [vmem:[#allocation5 + $0x1c] sm:$0xf]
        %v287 = vld [vmem:[#allocation5 + $0x20] sm:$0xf]
        %v288 = vld [vmem:[#allocation5 + $0x24] sm:$0xf]
        %v289 = vld [vmem:[#allocation5 + $0x28] sm:$0xf]
        %v290 = vld [vmem:[#allocation5 + $0x2c] sm:$0xf]
        %v291 = vld [vmem:[#allocation5 + $0x30] sm:$0xf]
        %v292 = vld [vmem:[#allocation5 + $0x34] sm:$0xf]
        %v293 = vld [vmem:[#allocation5 + $0x38] sm:$0xf]
        %v294 = vld [vmem:[#allocation5 + $0x3c] sm:$0xf]
        %v295 = vld [vmem:[#allocation5 + $0x40] sm:$0xf]
        %v296 = vld [vmem:[#allocation5 + $0x44] sm:$0xf]
        %v297 = vld [vmem:[#allocation5 + $0x48] sm:$0xf]
        %v298 = vld [vmem:[#allocation5 + $0x4c] sm:$0xf]
        %v299 = vld [vmem:[#allocation5 + $0x50] sm:$0xf]
        %v300 = vld [vmem:[#allocation5 + $0x54] sm:$0xf]
        %v301 = vld [vmem:[#allocation5 + $0x58] sm:$0xf]
        %v302 = vld [vmem:[#allocation5 + $0x5c] sm:$0xf]
        %v303 = vld [vmem:[#allocation5 + $0x60] sm:$0xf]
        %v304 = vld [vmem:[#allocation5 + $0x64] sm:$0xf]
        %v305 = vld [vmem:[#allocation5 + $0x68] sm:$0xf]
        %v306 = vld [vmem:[#allocation5 + $0x6c] sm:$0xf]
        %v307 = vld [vmem:[#allocation5 + $0x70] sm:$0xf]
        %v308 = vld [vmem:[#allocation5 + $0x74] sm:$0xf]
        %v309 = vld [vmem:[#allocation5 + $0x78] sm:$0xf]
        %v310 = vld [vmem:[#allocation5 + $0x7c] sm:$0xf]
        %v311 = vld [vmem:[%s2] sm:$0x1]
        %v313 = vlaneseq
        %v314 = vshrl.u32 %v313, 7
        %v315 = vsub.s32 0, %v314
        %v316 = vrot.slane %v311, %v315
        %v350 = vunpack.c.l.b16 %v247
        %v351 = vunpack.c.h.b16 %v247
        %v352 = vunpack.c.l.b16 %v248
        %v353 = vunpack.c.h.b16 %v248
        %v354 = vunpack.c.l.b16 %v249
        %v355 = vunpack.c.h.b16 %v249
        %v356 = vunpack.c.l.b16 %v250
        %v357 = vunpack.c.h.b16 %v250
        %v358 = vunpack.c.l.b16 %v251
        %v359 = vunpack.c.h.b16 %v251
        %v360 = vunpack.c.l.b16 %v252
        %v361 = vunpack.c.h.b16 %v252
        %v362 = vunpack.c.l.b16 %v253
        %v363 = vunpack.c.h.b16 %v253
        %v364 = vunpack.c.l.b16 %v254
        %v365 = vunpack.c.h.b16 %v254
        %v366 = vunpack.c.l.b16 %v255
        %v367 = vunpack.c.h.b16 %v255
        %v368 = vunpack.c.l.b16 %v256
        %v369 = vunpack.c.h.b16 %v256
        %v370 = vunpack.c.l.b16 %v257
        %v371 = vunpack.c.h.b16 %v257
        %v372 = vunpack.c.l.b16 %v258
        %v373 = vunpack.c.h.b16 %v258
        %v374 = vunpack.c.l.b16 %v259
        %v375 = vunpack.c.h.b16 %v259
        %v376 = vunpack.c.l.b16 %v260
        %v377 = vunpack.c.h.b16 %v260
        %v378 = vunpack.c.l.b16 %v261
        %v379 = vunpack.c.h.b16 %v261
        %v380 = vunpack.c.l.b16 %v262
        %v381 = vunpack.c.h.b16 %v262
        %v382 = vunpack.c.l.b16 %v263
        %v383 = vunpack.c.h.b16 %v263
        %v384 = vunpack.c.l.b16 %v264
        %v385 = vunpack.c.h.b16 %v264
        %v386 = vunpack.c.l.b16 %v265
        %v387 = vunpack.c.h.b16 %v265
        %v388 = vunpack.c.l.b16 %v266
        %v389 = vunpack.c.h.b16 %v266
        %v390 = vunpack.c.l.b16 %v267
        %v391 = vunpack.c.h.b16 %v267
        %v392 = vunpack.c.l.b16 %v268
        %v393 = vunpack.c.h.b16 %v268
        %v394 = vunpack.c.l.b16 %v269
        %v395 = vunpack.c.h.b16 %v269
        %v396 = vunpack.c.l.b16 %v270
        %v397 = vunpack.c.h.b16 %v270
        %v398 = vunpack.c.l.b16 %v271
        %v399 = vunpack.c.h.b16 %v271
        %v400 = vunpack.c.l.b16 %v272
        %v401 = vunpack.c.h.b16 %v272
        %v402 = vunpack.c.l.b16 %v273
        %v403 = vunpack.c.h.b16 %v273
        %v404 = vunpack.c.l.b16 %v274
        %v405 = vunpack.c.h.b16 %v274
        %v406 = vunpack.c.l.b16 %v275
        %v407 = vunpack.c.h.b16 %v275
        %v408 = vunpack.c.l.b16 %v276
        %v409 = vunpack.c.h.b16 %v276
        %v410 = vunpack.c.l.b16 %v277
        %v411 = vunpack.c.h.b16 %v277
        %v412 = vunpack.c.l.b16 %v278
        %v413 = vunpack.c.h.b16 %v278
        %v414 = vpack.c.b16 %v352, %v350
        %v415 = vpack.c.b16 %v353, %v351
        %v416 = vpack.c.b16 %v356, %v354
        %v417 = vpack.c.b16 %v357, %v355
        %v418 = vpack.c.b16 %v360, %v358
        %v419 = vpack.c.b16 %v361, %v359
        %v420 = vpack.c.b16 %v364, %v362
        %v421 = vpack.c.b16 %v365, %v363
        %v422 = vpack.c.b16 %v368, %v366
        %v423 = vpack.c.b16 %v369, %v367
        %v424 = vpack.c.b16 %v372, %v370
        %v425 = vpack.c.b16 %v373, %v371
        %v426 = vpack.c.b16 %v376, %v374
        %v427 = vpack.c.b16 %v377, %v375
        %v428 = vpack.c.b16 %v380, %v378
        %v429 = vpack.c.b16 %v381, %v379
        %v430 = vpack.c.b16 %v384, %v382
        %v431 = vpack.c.b16 %v385, %v383
        %v432 = vpack.c.b16 %v388, %v386
        %v433 = vpack.c.b16 %v389, %v387
        %v434 = vpack.c.b16 %v392, %v390
        %v435 = vpack.c.b16 %v393, %v391
        %v436 = vpack.c.b16 %v396, %v394
        %v437 = vpack.c.b16 %v397, %v395
        %v438 = vpack.c.b16 %v400, %v398
        %v439 = vpack.c.b16 %v401, %v399
        %v440 = vpack.c.b16 %v404, %v402
        %v441 = vpack.c.b16 %v405, %v403
        %v442 = vpack.c.b16 %v408, %v406
        %v443 = vpack.c.b16 %v409, %v407
        %v444 = vpack.c.b16 %v412, %v410
        %v445 = vpack.c.b16 %v413, %v411
        %v510 = vunpack.c.l.b16 %v279
        %v511 = vunpack.c.l.b16 %v280
        %v512 = vunpack.c.l.b16 %v281
        %v513 = vunpack.c.l.b16 %v282
        %v514 = vunpack.c.l.b16 %v283
        %v515 = vunpack.c.l.b16 %v284
        %v516 = vunpack.c.l.b16 %v285
        %v517 = vunpack.c.l.b16 %v286
        %v518 = vunpack.c.l.b16 %v287
        %v519 = vunpack.c.l.b16 %v288
        %v520 = vunpack.c.l.b16 %v289
        %v521 = vunpack.c.l.b16 %v290
        %v522 = vunpack.c.l.b16 %v291
        %v523 = vunpack.c.l.b16 %v292
        %v524 = vunpack.c.l.b16 %v293
        %v525 = vunpack.c.l.b16 %v294
        %v526 = vunpack.c.l.b16 %v295
        %v527 = vunpack.c.l.b16 %v296
        %v528 = vunpack.c.l.b16 %v297
        %v529 = vunpack.c.l.b16 %v298
        %v530 = vunpack.c.l.b16 %v299
        %v531 = vunpack.c.l.b16 %v300
        %v532 = vunpack.c.l.b16 %v301
        %v533 = vunpack.c.l.b16 %v302
        %v534 = vunpack.c.l.b16 %v303
        %v535 = vunpack.c.l.b16 %v304
        %v536 = vunpack.c.l.b16 %v305
        %v537 = vunpack.c.l.b16 %v306
        %v538 = vunpack.c.l.b16 %v307
        %v539 = vunpack.c.l.b16 %v308
        %v540 = vunpack.c.l.b16 %v309
        %v541 = vunpack.c.l.b16 %v310
        %v542 = vpack.c.b16 %v511, %v510
        %v543 = vpack.c.b16 %v513, %v512
        %v544 = vpack.c.b16 %v515, %v514
        %v545 = vpack.c.b16 %v517, %v516
        %v546 = vpack.c.b16 %v519, %v518
        %v547 = vpack.c.b16 %v521, %v520
        %v548 = vpack.c.b16 %v523, %v522
        %v549 = vpack.c.b16 %v525, %v524
        %v550 = vpack.c.b16 %v527, %v526
        %v551 = vpack.c.b16 %v529, %v528
        %v552 = vpack.c.b16 %v531, %v530
        %v553 = vpack.c.b16 %v533, %v532
        %v554 = vpack.c.b16 %v535, %v534
        %v555 = vpack.c.b16 %v537, %v536
        %v556 = vpack.c.b16 %v539, %v538
        %v557 = vpack.c.b16 %v541, %v540
        %574 = vmatprep.subr.bf16.mxu0 0
        %575 = vmatpush1.bf16.msra.mxu0 %v549
        %576 = vmatprep.subr.bf16.mxu0 0
        %577 = vmatpush1.bf16.msra.mxu0 %v548
        %578 = vmatprep.subr.bf16.mxu0 0
        %579 = vmatpush1.bf16.msra.mxu0 %v547
        %580 = vmatprep.subr.bf16.mxu0 0
        %581 = vmatpush1.bf16.msra.mxu0 %v546
        %582 = vmatprep.subr.bf16.mxu0 0
        %583 = vmatpush1.bf16.msra.mxu0 %v545
        %584 = vmatprep.subr.bf16.mxu0 0
        %585 = vmatpush1.bf16.msra.mxu0 %v544
        %586 = vmatprep.subr.bf16.mxu0 0
        %587 = vmatpush1.bf16.msra.mxu0 %v543
        %588 = vmatprep.subr.bf16.mxu0 0
        %589 = vmatpush1.bf16.msra.mxu0 %v542
        %590 = vmatprep.subr.bf16.mxu0 0
        %591 = vmatpush2.bf16.msra.mxu0 %v557
        %592 = vmatprep.subr.bf16.mxu0 0
        %593 = vmatpush2.bf16.msra.mxu0 %v556
        %594 = vmatprep.subr.bf16.mxu0 0
        %595 = vmatpush2.bf16.msra.mxu0 %v555
        %596 = vmatprep.subr.bf16.mxu0 0
        %597 = vmatpush2.bf16.msra.mxu0 %v554
        %598 = vmatprep.subr.bf16.mxu0 0
        %599 = vmatpush2.bf16.msra.mxu0 %v553
        %600 = vmatprep.subr.bf16.mxu0 0
        %601 = vmatpush2.bf16.msra.mxu0 %v552
        %602 = vmatprep.subr.bf16.mxu0 0
        %603 = vmatpush2.bf16.msra.mxu0 %v551
        %604 = vmatprep.subr.bf16.mxu0 0
        %605 = vmatpush2.bf16.msra.mxu0 %v550
        %606 = vmatprep.mubr.bf16.mxu0 %v415
        %607 = vmatmul.mubr.bf16.gmra.mxu0 %v414
        %v608 = vpop.f32.mrf.mxu0
        %v609 = vadd.f32 %v316, %v608
        %v610 = vpop.f32.mrf.mxu0
        %v611 = vpop.f32.mrf.mxu0
        %v612 = vadd.f32 %v316, %v611
        %v613 = vpop.f32.mrf.mxu0
        %614 = vmatprep.mubr.bf16.mxu0 %v417
        %615 = vmatmul.mubr.bf16.gmra.mxu0 %v416
        %v616 = vpop.f32.mrf.mxu0
        %v617 = vadd.f32 %v316, %v616
        %v618 = vpop.f32.mrf.mxu0
        %v619 = vpop.f32.mrf.mxu0
        %v620 = vadd.f32 %v316, %v619
        %v621 = vpop.f32.mrf.mxu0
        %622 = vmatprep.mubr.bf16.mxu0 %v419
        %623 = vmatmul.mubr.bf16.gmra.mxu0 %v418
        %v624 = vpop.f32.mrf.mxu0
        %v625 = vadd.f32 %v316, %v624
        %v626 = vpop.f32.mrf.mxu0
        %v627 = vpop.f32.mrf.mxu0
        %v628 = vadd.f32 %v316, %v627
        %v629 = vpop.f32.mrf.mxu0
        %630 = vmatprep.mubr.bf16.mxu0 %v421
        %631 = vmatmul.mubr.bf16.gmra.mxu0 %v420
        %v632 = vpop.f32.mrf.mxu0
        %v633 = vadd.f32 %v316, %v632
        %v634 = vpop.f32.mrf.mxu0
        %v635 = vpop.f32.mrf.mxu0
        %v636 = vadd.f32 %v316, %v635
        %v637 = vpop.f32.mrf.mxu0
        %638 = vmatprep.mubr.bf16.mxu0 %v423
        %639 = vmatmul.mubr.bf16.gmra.mxu0 %v422
        %v640 = vpop.f32.mrf.mxu0
        %v641 = vadd.f32 %v316, %v640
        %v642 = vpop.f32.mrf.mxu0
        %v643 = vpop.f32.mrf.mxu0
        %v644 = vadd.f32 %v316, %v643
        %v645 = vpop.f32.mrf.mxu0
        %646 = vmatprep.mubr.bf16.mxu0 %v425
        %647 = vmatmul.mubr.bf16.gmra.mxu0 %v424
        %v648 = vpop.f32.mrf.mxu0
        %v649 = vadd.f32 %v316, %v648
        %v650 = vpop.f32.mrf.mxu0
        %v651 = vpop.f32.mrf.mxu0
        %v652 = vadd.f32 %v316, %v651
        %v653 = vpop.f32.mrf.mxu0
        %654 = vmatprep.mubr.bf16.mxu0 %v427
        %655 = vmatmul.mubr.bf16.gmra.mxu0 %v426
        %v656 = vpop.f32.mrf.mxu0
        %v657 = vadd.f32 %v316, %v656
        %v658 = vpop.f32.mrf.mxu0
        %v659 = vpop.f32.mrf.mxu0
        %v660 = vadd.f32 %v316, %v659
        %v661 = vpop.f32.mrf.mxu0
        %662 = vmatprep.mubr.bf16.mxu0 %v429
        %663 = vmatmul.mubr.bf16.gmra.mxu0 %v428
        %v664 = vpop.f32.mrf.mxu0
        %v665 = vadd.f32 %v316, %v664
        %v666 = vpop.f32.mrf.mxu0
        %v667 = vpop.f32.mrf.mxu0
        %v668 = vadd.f32 %v316, %v667
        %v669 = vpop.f32.mrf.mxu0
        %670 = vmatprep.mubr.bf16.mxu0 %v431
        %671 = vmatmul.mubr.bf16.gmra.mxu0 %v430
        %v672 = vpop.f32.mrf.mxu0
        %v673 = vadd.f32 %v316, %v672
        %v674 = vpop.f32.mrf.mxu0
        %v675 = vpop.f32.mrf.mxu0
        %v676 = vadd.f32 %v316, %v675
        %v677 = vpop.f32.mrf.mxu0
        %678 = vmatprep.mubr.bf16.mxu0 %v433
        %679 = vmatmul.mubr.bf16.gmra.mxu0 %v432
        %v680 = vpop.f32.mrf.mxu0
        %v681 = vadd.f32 %v316, %v680
        %v682 = vpop.f32.mrf.mxu0
        %v683 = vpop.f32.mrf.mxu0
        %v684 = vadd.f32 %v316, %v683
        %v685 = vpop.f32.mrf.mxu0
        %686 = vmatprep.mubr.bf16.mxu0 %v435
        %687 = vmatmul.mubr.bf16.gmra.mxu0 %v434
        %v688 = vpop.f32.mrf.mxu0
        %v689 = vadd.f32 %v316, %v688
        %v690 = vpop.f32.mrf.mxu0
        %v691 = vpop.f32.mrf.mxu0
        %v692 = vadd.f32 %v316, %v691
        %v693 = vpop.f32.mrf.mxu0
        %694 = vmatprep.mubr.bf16.mxu0 %v437
        %695 = vmatmul.mubr.bf16.gmra.mxu0 %v436
        %v696 = vpop.f32.mrf.mxu0
        %v697 = vadd.f32 %v316, %v696
        %v698 = vpop.f32.mrf.mxu0
        %v699 = vpop.f32.mrf.mxu0
        %v700 = vadd.f32 %v316, %v699
        %v701 = vpop.f32.mrf.mxu0
        %702 = vmatprep.mubr.bf16.mxu0 %v439
        %703 = vmatmul.mubr.bf16.gmra.mxu0 %v438
        %v704 = vpop.f32.mrf.mxu0
        %v705 = vadd.f32 %v316, %v704
        %v706 = vpop.f32.mrf.mxu0
        %v707 = vpop.f32.mrf.mxu0
        %v708 = vadd.f32 %v316, %v707
        %v709 = vpop.f32.mrf.mxu0
        %710 = vmatprep.mubr.bf16.mxu0 %v441
        %711 = vmatmul.mubr.bf16.gmra.mxu0 %v440
        %v712 = vpop.f32.mrf.mxu0
        %v713 = vadd.f32 %v316, %v712
        %v714 = vpop.f32.mrf.mxu0
        %v715 = vpop.f32.mrf.mxu0
        %v716 = vadd.f32 %v316, %v715
        %v717 = vpop.f32.mrf.mxu0
        %718 = vmatprep.mubr.bf16.mxu0 %v443
        %719 = vmatmul.mubr.bf16.gmra.mxu0 %v442
        %v720 = vpop.f32.mrf.mxu0
        %v721 = vadd.f32 %v316, %v720
        %v722 = vpop.f32.mrf.mxu0
        %v723 = vpop.f32.mrf.mxu0
        %v724 = vadd.f32 %v316, %v723
        %v725 = vpop.f32.mrf.mxu0
        %726 = vmatprep.mubr.bf16.mxu0 %v445
        %727 = vmatmul.mubr.bf16.gmra.mxu0 %v444
        %v728 = vpop.f32.mrf.mxu0
        %v729 = vadd.f32 %v316, %v728
        %v730 = vpop.f32.mrf.mxu0
        %v731 = vpop.f32.mrf.mxu0
        %v732 = vadd.f32 %v316, %v731
        %v733 = vpop.f32.mrf.mxu0
        %734 = vdwg.mxu0
        %v735 = vxor.u32 %v609, 2147483648
        %v736 = vxor.u32 %v612, 2147483648
        %v737 = vxor.u32 %v617, 2147483648
        %v738 = vxor.u32 %v620, 2147483648
        %v739 = vxor.u32 %v625, 2147483648
        %v740 = vxor.u32 %v628, 2147483648
        %v741 = vxor.u32 %v633, 2147483648
        %v742 = vxor.u32 %v636, 2147483648
        %v743 = vxor.u32 %v641, 2147483648
        %v744 = vxor.u32 %v644, 2147483648
        %v745 = vxor.u32 %v649, 2147483648
        %v746 = vxor.u32 %v652, 2147483648
        %v747 = vxor.u32 %v657, 2147483648
        %v748 = vxor.u32 %v660, 2147483648
        %v749 = vxor.u32 %v665, 2147483648
        %v750 = vxor.u32 %v668, 2147483648
        %v751 = vxor.u32 %v673, 2147483648
        %v752 = vxor.u32 %v676, 2147483648
        %v753 = vxor.u32 %v681, 2147483648
        %v754 = vxor.u32 %v684, 2147483648
        %v755 = vxor.u32 %v689, 2147483648
        %v756 = vxor.u32 %v692, 2147483648
        %v757 = vxor.u32 %v697, 2147483648
        %v758 = vxor.u32 %v700, 2147483648
        %v759 = vxor.u32 %v705, 2147483648
        %v760 = vxor.u32 %v708, 2147483648
        %v761 = vxor.u32 %v713, 2147483648
        %v762 = vxor.u32 %v716, 2147483648
        %v763 = vxor.u32 %v721, 2147483648
        %v764 = vxor.u32 %v724, 2147483648
        %v765 = vxor.u32 %v729, 2147483648
        %v766 = vxor.u32 %v732, 2147483648
        %v767 = vmul.f32 %v735, 1.442695
        %v768 = vpow.pop %v767
        %v769 = vmul.f32 %v736, 1.442695
        %v770 = vpow.pop %v769
        %v771 = vmul.f32 %v737, 1.442695
        %v772 = vpow.pop %v771
        %v773 = vmul.f32 %v738, 1.442695
        %v774 = vpow.pop %v773
        %v775 = vmul.f32 %v739, 1.442695
        %v776 = vpow.pop %v775
        %v777 = vmul.f32 %v740, 1.442695
        %v778 = vpow.pop %v777
        %v779 = vmul.f32 %v741, 1.442695
        %v780 = vpow.pop %v779
        %v781 = vmul.f32 %v742, 1.442695
        %v782 = vpow.pop %v781
        %v783 = vmul.f32 %v743, 1.442695
        %v784 = vpow.pop %v783
        %v785 = vmul.f32 %v744, 1.442695
        %v786 = vpow.pop %v785
        %v787 = vmul.f32 %v745, 1.442695
        %v788 = vpow.pop %v787
        %v789 = vmul.f32 %v746, 1.442695
        %v790 = vpow.pop %v789
        %v791 = vmul.f32 %v747, 1.442695
        %v792 = vpow.pop %v791
        %v793 = vmul.f32 %v748, 1.442695
        %v794 = vpow.pop %v793
        %v795 = vmul.f32 %v749, 1.442695
        %v796 = vpow.pop %v795
        %v797 = vmul.f32 %v750, 1.442695
        %v798 = vpow.pop %v797
        %v799 = vmul.f32 %v751, 1.442695
        %v800 = vpow.pop %v799
        %v801 = vmul.f32 %v752, 1.442695
        %v802 = vpow.pop %v801
        %v803 = vmul.f32 %v753, 1.442695
        %v804 = vpow.pop %v803
        %v805 = vmul.f32 %v754, 1.442695
        %v806 = vpow.pop %v805
        %v807 = vmul.f32 %v755, 1.442695
        %v808 = vpow.pop %v807
        %v809 = vmul.f32 %v756, 1.442695
        %v810 = vpow.pop %v809
        %v811 = vmul.f32 %v757, 1.442695
        %v812 = vpow.pop %v811
        %v813 = vmul.f32 %v758, 1.442695
        %v814 = vpow.pop %v813
        %v815 = vmul.f32 %v759, 1.442695
        %v816 = vpow.pop %v815
        %v817 = vmul.f32 %v760, 1.442695
        %v818 = vpow.pop %v817
        %v819 = vmul.f32 %v761, 1.442695
        %v820 = vpow.pop %v819
        %v821 = vmul.f32 %v762, 1.442695
        %v822 = vpow.pop %v821
        %v823 = vmul.f32 %v763, 1.442695
        %v824 = vpow.pop %v823
        %v825 = vmul.f32 %v764, 1.442695
        %v826 = vpow.pop %v825
        %v827 = vmul.f32 %v765, 1.442695
        %v828 = vpow.pop %v827
        %v829 = vmul.f32 %v766, 1.442695
        %v830 = vpow.pop %v829
        %v831 = vadd.f32 %v768, 1.0
        %v832 = vadd.f32 %v770, 1.0
        %v833 = vadd.f32 %v772, 1.0
        %v834 = vadd.f32 %v774, 1.0
        %v835 = vadd.f32 %v776, 1.0
        %v836 = vadd.f32 %v778, 1.0
        %v837 = vadd.f32 %v780, 1.0
        %v838 = vadd.f32 %v782, 1.0
        %v839 = vadd.f32 %v784, 1.0
        %v840 = vadd.f32 %v786, 1.0
        %v841 = vadd.f32 %v788, 1.0
        %v842 = vadd.f32 %v790, 1.0
        %v843 = vadd.f32 %v792, 1.0
        %v844 = vadd.f32 %v794, 1.0
        %v845 = vadd.f32 %v796, 1.0
        %v846 = vadd.f32 %v798, 1.0
        %v847 = vadd.f32 %v800, 1.0
        %v848 = vadd.f32 %v802, 1.0
        %v849 = vadd.f32 %v804, 1.0
        %v850 = vadd.f32 %v806, 1.0
        %v851 = vadd.f32 %v808, 1.0
        %v852 = vadd.f32 %v810, 1.0
        %v853 = vadd.f32 %v812, 1.0
        %v854 = vadd.f32 %v814, 1.0
        %v855 = vadd.f32 %v816, 1.0
        %v856 = vadd.f32 %v818, 1.0
        %v857 = vadd.f32 %v820, 1.0
        %v858 = vadd.f32 %v822, 1.0
        %v859 = vadd.f32 %v824, 1.0
        %v860 = vadd.f32 %v826, 1.0
        %v861 = vadd.f32 %v828, 1.0
        %v862 = vadd.f32 %v830, 1.0
        %v863 = vrcp.pop %v831
        %v864 = vmul.f32 1.0, %v863
        %v865 = vrcp.pop %v832
        %v866 = vmul.f32 1.0, %v865
        %v867 = vrcp.pop %v833
        %v868 = vmul.f32 1.0, %v867
        %v869 = vrcp.pop %v834
        %v870 = vmul.f32 1.0, %v869
        %v871 = vrcp.pop %v835
        %v872 = vmul.f32 1.0, %v871
        %v873 = vrcp.pop %v836
        %v874 = vmul.f32 1.0, %v873
        %v875 = vrcp.pop %v837
        %v876 = vmul.f32 1.0, %v875
        %v877 = vrcp.pop %v838
        %v878 = vmul.f32 1.0, %v877
        %v879 = vrcp.pop %v839
        %v880 = vmul.f32 1.0, %v879
        %v881 = vrcp.pop %v840
        %v882 = vmul.f32 1.0, %v881
        %v883 = vrcp.pop %v841
        %v884 = vmul.f32 1.0, %v883
        %v885 = vrcp.pop %v842
        %v886 = vmul.f32 1.0, %v885
        %v887 = vrcp.pop %v843
        %v888 = vmul.f32 1.0, %v887
        %v889 = vrcp.pop %v844
        %v890 = vmul.f32 1.0, %v889
        %v891 = vrcp.pop %v845
        %v892 = vmul.f32 1.0, %v891
        %v893 = vrcp.pop %v846
        %v894 = vmul.f32 1.0, %v893
        %v895 = vrcp.pop %v847
        %v896 = vmul.f32 1.0, %v895
        %v897 = vrcp.pop %v848
        %v898 = vmul.f32 1.0, %v897
        %v899 = vrcp.pop %v849
        %v900 = vmul.f32 1.0, %v899
        %v901 = vrcp.pop %v850
        %v902 = vmul.f32 1.0, %v901
        %v903 = vrcp.pop %v851
        %v904 = vmul.f32 1.0, %v903
        %v905 = vrcp.pop %v852
        %v906 = vmul.f32 1.0, %v905
        %v907 = vrcp.pop %v853
        %v908 = vmul.f32 1.0, %v907
        %v909 = vrcp.pop %v854
        %v910 = vmul.f32 1.0, %v909
        %v911 = vrcp.pop %v855
        %v912 = vmul.f32 1.0, %v911
        %v913 = vrcp.pop %v856
        %v914 = vmul.f32 1.0, %v913
        %v915 = vrcp.pop %v857
        %v916 = vmul.f32 1.0, %v915
        %v917 = vrcp.pop %v858
        %v918 = vmul.f32 1.0, %v917
        %v919 = vrcp.pop %v859
        %v920 = vmul.f32 1.0, %v919
        %v921 = vrcp.pop %v860
        %v922 = vmul.f32 1.0, %v921
        %v923 = vrcp.pop %v861
        %v924 = vmul.f32 1.0, %v923
        %v925 = vrcp.pop %v862
        %v926 = vmul.f32 1.0, %v925
        %v927 = vmul.f32 %v609, %v864
        %v928 = vmul.f32 %v612, %v866
        %v929 = vmul.f32 %v617, %v868
        %v930 = vmul.f32 %v620, %v870
        %v931 = vmul.f32 %v625, %v872
        %v932 = vmul.f32 %v628, %v874
        %v933 = vmul.f32 %v633, %v876
        %v934 = vmul.f32 %v636, %v878
        %v935 = vmul.f32 %v641, %v880
        %v936 = vmul.f32 %v644, %v882
        %v937 = vmul.f32 %v649, %v884
        %v938 = vmul.f32 %v652, %v886
        %v939 = vmul.f32 %v657, %v888
        %v940 = vmul.f32 %v660, %v890
        %v941 = vmul.f32 %v665, %v892
        %v942 = vmul.f32 %v668, %v894
        %v943 = vmul.f32 %v673, %v896
        %v944 = vmul.f32 %v676, %v898
        %v945 = vmul.f32 %v681, %v900
        %v946 = vmul.f32 %v684, %v902
        %v947 = vmul.f32 %v689, %v904
        %v948 = vmul.f32 %v692, %v906
        %v949 = vmul.f32 %v697, %v908
        %v950 = vmul.f32 %v700, %v910
        %v951 = vmul.f32 %v705, %v912
        %v952 = vmul.f32 %v708, %v914
        %v953 = vmul.f32 %v713, %v916
        %v954 = vmul.f32 %v716, %v918
        %v955 = vmul.f32 %v721, %v920
        %v956 = vmul.f32 %v724, %v922
        %v957 = vmul.f32 %v729, %v924
        %v958 = vmul.f32 %v732, %v926
        %v959 = vpack.c.bf16 %v928, %v927
        %v960 = vpack.c.bf16 %v930, %v929
        %v961 = vpack.c.bf16 %v932, %v931
        %v962 = vpack.c.bf16 %v934, %v933
        %v963 = vpack.c.bf16 %v936, %v935
        %v964 = vpack.c.bf16 %v938, %v937
        %v965 = vpack.c.bf16 %v940, %v939
        %v966 = vpack.c.bf16 %v942, %v941
        %v967 = vpack.c.bf16 %v944, %v943
        %v968 = vpack.c.bf16 %v946, %v945
        %v969 = vpack.c.bf16 %v948, %v947
        %v970 = vpack.c.bf16 %v950, %v949
        %v971 = vpack.c.bf16 %v952, %v951
        %v972 = vpack.c.bf16 %v954, %v953
        %v973 = vpack.c.bf16 %v956, %v955
        %v974 = vpack.c.bf16 %v958, %v957
        %v991 = vunpack.c.l.b16 %v959
        %v992 = vunpack.c.h.b16 %v959
        %v993 = vunpack.c.l.b16 %v960
        %v994 = vunpack.c.h.b16 %v960
        %v995 = vunpack.c.l.b16 %v961
        %v996 = vunpack.c.h.b16 %v961
        %v997 = vunpack.c.l.b16 %v962
        %v998 = vunpack.c.h.b16 %v962
        %v999 = vunpack.c.l.b16 %v963
        %v1000 = vunpack.c.h.b16 %v963
        %v1001 = vunpack.c.l.b16 %v964
        %v1002 = vunpack.c.h.b16 %v964
        %v1003 = vunpack.c.l.b16 %v965
        %v1004 = vunpack.c.h.b16 %v965
        %v1005 = vunpack.c.l.b16 %v966
        %v1006 = vunpack.c.h.b16 %v966
        %v1007 = vunpack.c.l.b16 %v967
        %v1008 = vunpack.c.h.b16 %v967
        %v1009 = vunpack.c.l.b16 %v968
        %v1010 = vunpack.c.h.b16 %v968
        %v1011 = vunpack.c.l.b16 %v969
        %v1012 = vunpack.c.h.b16 %v969
        %v1013 = vunpack.c.l.b16 %v970
        %v1014 = vunpack.c.h.b16 %v970
        %v1015 = vunpack.c.l.b16 %v971
        %v1016 = vunpack.c.h.b16 %v971
        %v1017 = vunpack.c.l.b16 %v972
        %v1018 = vunpack.c.h.b16 %v972
        %v1019 = vunpack.c.l.b16 %v973
        %v1020 = vunpack.c.h.b16 %v973
        %v1021 = vunpack.c.l.b16 %v974
        %v1022 = vunpack.c.h.b16 %v974
        %v1023 = vpack.c.b16 %v991, %v991
        %v1024 = vpack.c.b16 %v992, %v992
        %v1025 = vpack.c.b16 %v993, %v993
        %v1026 = vpack.c.b16 %v994, %v994
        %v1027 = vpack.c.b16 %v995, %v995
        %v1028 = vpack.c.b16 %v996, %v996
        %v1029 = vpack.c.b16 %v997, %v997
        %v1030 = vpack.c.b16 %v998, %v998
        %v1031 = vpack.c.b16 %v999, %v999
        %v1032 = vpack.c.b16 %v1000, %v1000
        %v1033 = vpack.c.b16 %v1001, %v1001
        %v1034 = vpack.c.b16 %v1002, %v1002
        %v1035 = vpack.c.b16 %v1003, %v1003
        %v1036 = vpack.c.b16 %v1004, %v1004
        %v1037 = vpack.c.b16 %v1005, %v1005
        %v1038 = vpack.c.b16 %v1006, %v1006
        %v1039 = vpack.c.b16 %v1007, %v1007
        %v1040 = vpack.c.b16 %v1008, %v1008
        %v1041 = vpack.c.b16 %v1009, %v1009
        %v1042 = vpack.c.b16 %v1010, %v1010
        %v1043 = vpack.c.b16 %v1011, %v1011
        %v1044 = vpack.c.b16 %v1012, %v1012
        %v1045 = vpack.c.b16 %v1013, %v1013
        %v1046 = vpack.c.b16 %v1014, %v1014
        %v1047 = vpack.c.b16 %v1015, %v1015
        %v1048 = vpack.c.b16 %v1016, %v1016
        %v1049 = vpack.c.b16 %v1017, %v1017
        %v1050 = vpack.c.b16 %v1018, %v1018
        %v1051 = vpack.c.b16 %v1019, %v1019
        %v1052 = vpack.c.b16 %v1020, %v1020
        %v1053 = vpack.c.b16 %v1021, %v1021
        %v1054 = vpack.c.b16 %v1022, %v1022
        %1087 = vst [vmem:[%s235] sm:$0xf] %v1023
        %1088 = vst [vmem:[%s235 + $0x4] sm:$0xf] %v1024
        %1089 = vst [vmem:[%s235 + $0x8] sm:$0xf] %v1025
        %1090 = vst [vmem:[%s235 + $0xc] sm:$0xf] %v1026
        %1091 = vst [vmem:[%s235 + $0x10] sm:$0xf] %v1027
        %1092 = vst [vmem:[%s235 + $0x14] sm:$0xf] %v1028
        %1093 = vst [vmem:[%s235 + $0x18] sm:$0xf] %v1029
        %1094 = vst [vmem:[%s235 + $0x1c] sm:$0xf] %v1030
        %1095 = vst [vmem:[%s235 + $0x20] sm:$0xf] %v1031
        %1096 = vst [vmem:[%s235 + $0x24] sm:$0xf] %v1032
        %1097 = vst [vmem:[%s235 + $0x28] sm:$0xf] %v1033
        %1098 = vst [vmem:[%s235 + $0x2c] sm:$0xf] %v1034
        %1099 = vst [vmem:[%s235 + $0x30] sm:$0xf] %v1035
        %1100 = vst [vmem:[%s235 + $0x34] sm:$0xf] %v1036
        %1101 = vst [vmem:[%s235 + $0x38] sm:$0xf] %v1037
        %1102 = vst [vmem:[%s235 + $0x3c] sm:$0xf] %v1038
        %1103 = vst [vmem:[%s235 + $0x40] sm:$0xf] %v1039
        %1104 = vst [vmem:[%s235 + $0x44] sm:$0xf] %v1040
        %1105 = vst [vmem:[%s235 + $0x48] sm:$0xf] %v1041
        %1106 = vst [vmem:[%s235 + $0x4c] sm:$0xf] %v1042
        %1107 = vst [vmem:[%s235 + $0x50] sm:$0xf] %v1043
        %1108 = vst [vmem:[%s235 + $0x54] sm:$0xf] %v1044
        %1109 = vst [vmem:[%s235 + $0x58] sm:$0xf] %v1045
        %1110 = vst [vmem:[%s235 + $0x5c] sm:$0xf] %v1046
        %1111 = vst [vmem:[%s235 + $0x60] sm:$0xf] %v1047
        %1112 = vst [vmem:[%s235 + $0x64] sm:$0xf] %v1048
        %1113 = vst [vmem:[%s235 + $0x68] sm:$0xf] %v1049
        %1114 = vst [vmem:[%s235 + $0x6c] sm:$0xf] %v1050
        %1115 = vst [vmem:[%s235 + $0x70] sm:$0xf] %v1051
        %1116 = vst [vmem:[%s235 + $0x74] sm:$0xf] %v1052
        %1117 = vst [vmem:[%s235 + $0x78] sm:$0xf] %v1053
        %1118 = vst [vmem:[%s235 + $0x7c] sm:$0xf] %v1054
        %v1119 = vcombine.high %v959, %v959
        %v1121 = vunpack.c.l.s4 1966171168
        %v1122 = vunpack.c.0.s8 %v1121
        %v1123 = vlaneseq
        %v1124 = vshrl.u32 %v1123, 7
        %v1125 = vsub.s32 %v1122, %v1124
        %v1126 = vrot.slane %v959, %v1125
        %v1128 = vunpack.c.l.s4 1966171168
        %v1129 = vunpack.c.0.s8 %v1128
        %v1130 = vlaneseq
        %v1131 = vshrl.u32 %v1130, 7
        %v1132 = vsub.s32 %v1129, %v1131
        %v1133 = vrot.slane %v1119, %v1132
        %v1134 = vcombine.high %v1126, %v1126
        %v1135 = vcombine.high %v1133, %v1133
        %v1137 = vunpack.c.l.s4 1966171168
        %v1138 = vunpack.c.0.s8 %v1137
        %v1139 = vlaneseq
        %v1140 = vshrl.u32 %v1139, 7
        %v1141 = vsub.s32 %v1138, %v1140
        %v1142 = vrot.slane %v1126, %v1141
        %v1144 = vunpack.c.l.s4 1966171168
        %v1145 = vunpack.c.0.s8 %v1144
        %v1146 = vlaneseq
        %v1147 = vshrl.u32 %v1146, 7
        %v1148 = vsub.s32 %v1145, %v1147
        %v1149 = vrot.slane %v1133, %v1148
        %v1151 = vunpack.c.l.s4 1966171168
        %v1152 = vunpack.c.0.s8 %v1151
        %v1153 = vlaneseq
        %v1154 = vshrl.u32 %v1153, 7
        %v1155 = vsub.s32 %v1152, %v1154
        %v1156 = vrot.slane %v1134, %v1155
        %v1158 = vunpack.c.l.s4 1966171168
        %v1159 = vunpack.c.0.s8 %v1158
        %v1160 = vlaneseq
        %v1161 = vshrl.u32 %v1160, 7
        %v1162 = vsub.s32 %v1159, %v1161
        %v1163 = vrot.slane %v1135, %v1162
        %v1164 = vcombine.high %v1142, %v1142
        %v1165 = vcombine.high %v1149, %v1149
        %v1166 = vcombine.high %v1156, %v1156
        %v1167 = vcombine.high %v1163, %v1163
        %v1168 = vcombine.high %v960, %v960
        %v1170 = vunpack.c.l.s4 1966171168
        %v1171 = vunpack.c.0.s8 %v1170
        %v1172 = vlaneseq
        %v1173 = vshrl.u32 %v1172, 7
        %v1174 = vsub.s32 %v1171, %v1173
        %v1175 = vrot.slane %v960, %v1174
        %v1177 = vunpack.c.l.s4 1966171168
        %v1178 = vunpack.c.0.s8 %v1177
        %v1179 = vlaneseq
        %v1180 = vshrl.u32 %v1179, 7
        %v1181 = vsub.s32 %v1178, %v1180
        %v1182 = vrot.slane %v1168, %v1181
        %v1183 = vcombine.high %v1175, %v1175
        %v1184 = vcombine.high %v1182, %v1182
        %v1186 = vunpack.c.l.s4 1966171168
        %v1187 = vunpack.c.0.s8 %v1186
        %v1188 = vlaneseq
        %v1189 = vshrl.u32 %v1188, 7
        %v1190 = vsub.s32 %v1187, %v1189
        %v1191 = vrot.slane %v1175, %v1190
        %v1193 = vunpack.c.l.s4 1966171168
        %v1194 = vunpack.c.0.s8 %v1193
        %v1195 = vlaneseq
        %v1196 = vshrl.u32 %v1195, 7
        %v1197 = vsub.s32 %v1194, %v1196
        %v1198 = vrot.slane %v1182, %v1197
        %v1200 = vunpack.c.l.s4 1966171168
        %v1201 = vunpack.c.0.s8 %v1200
        %v1202 = vlaneseq
        %v1203 = vshrl.u32 %v1202, 7
        %v1204 = vsub.s32 %v1201, %v1203
        %v1205 = vrot.slane %v1183, %v1204
        %v1207 = vunpack.c.l.s4 1966171168
        %v1208 = vunpack.c.0.s8 %v1207
        %v1209 = vlaneseq
        %v1210 = vshrl.u32 %v1209, 7
        %v1211 = vsub.s32 %v1208, %v1210
        %v1212 = vrot.slane %v1184, %v1211
        %v1213 = vcombine.high %v1191, %v1191
        %v1214 = vcombine.high %v1198, %v1198
        %v1215 = vcombine.high %v1205, %v1205
        %v1216 = vcombine.high %v1212, %v1212
        %v1217 = vcombine.high %v961, %v961
        %v1219 = vunpack.c.l.s4 1966171168
        %v1220 = vunpack.c.0.s8 %v1219
        %v1221 = vlaneseq
        %v1222 = vshrl.u32 %v1221, 7
        %v1223 = vsub.s32 %v1220, %v1222
        %v1224 = vrot.slane %v961, %v1223
        %v1226 = vunpack.c.l.s4 1966171168
        %v1227 = vunpack.c.0.s8 %v1226
        %v1228 = vlaneseq
        %v1229 = vshrl.u32 %v1228, 7
        %v1230 = vsub.s32 %v1227, %v1229
        %v1231 = vrot.slane %v1217, %v1230
        %v1232 = vcombine.high %v1224, %v1224
        %v1233 = vcombine.high %v1231, %v1231
        %v1235 = vunpack.c.l.s4 1966171168
        %v1236 = vunpack.c.0.s8 %v1235
        %v1237 = vlaneseq
        %v1238 = vshrl.u32 %v1237, 7
        %v1239 = vsub.s32 %v1236, %v1238
        %v1240 = vrot.slane %v1224, %v1239
        %v1242 = vunpack.c.l.s4 1966171168
        %v1243 = vunpack.c.0.s8 %v1242
        %v1244 = vlaneseq
        %v1245 = vshrl.u32 %v1244, 7
        %v1246 = vsub.s32 %v1243, %v1245
        %v1247 = vrot.slane %v1231, %v1246
        %v1249 = vunpack.c.l.s4 1966171168
        %v1250 = vunpack.c.0.s8 %v1249
        %v1251 = vlaneseq
        %v1252 = vshrl.u32 %v1251, 7
        %v1253 = vsub.s32 %v1250, %v1252
        %v1254 = vrot.slane %v1232, %v1253
        %v1256 = vunpack.c.l.s4 1966171168
        %v1257 = vunpack.c.0.s8 %v1256
        %v1258 = vlaneseq
        %v1259 = vshrl.u32 %v1258, 7
        %v1260 = vsub.s32 %v1257, %v1259
        %v1261 = vrot.slane %v1233, %v1260
        %v1262 = vcombine.high %v1240, %v1240
        %v1263 = vcombine.high %v1247, %v1247
        %v1264 = vcombine.high %v1254, %v1254
        %v1265 = vcombine.high %v1261, %v1261
        %v1266 = vcombine.high %v962, %v962
        %v1268 = vunpack.c.l.s4 1966171168
        %v1269 = vunpack.c.0.s8 %v1268
        %v1270 = vlaneseq
        %v1271 = vshrl.u32 %v1270, 7
        %v1272 = vsub.s32 %v1269, %v1271
        %v1273 = vrot.slane %v962, %v1272
        %v1275 = vunpack.c.l.s4 1966171168
        %v1276 = vunpack.c.0.s8 %v1275
        %v1277 = vlaneseq
        %v1278 = vshrl.u32 %v1277, 7
        %v1279 = vsub.s32 %v1276, %v1278
        %v1280 = vrot.slane %v1266, %v1279
        %v1281 = vcombine.high %v1273, %v1273
        %v1282 = vcombine.high %v1280, %v1280
        %v1284 = vunpack.c.l.s4 1966171168
        %v1285 = vunpack.c.0.s8 %v1284
        %v1286 = vlaneseq
        %v1287 = vshrl.u32 %v1286, 7
        %v1288 = vsub.s32 %v1285, %v1287
        %v1289 = vrot.slane %v1273, %v1288
        %v1291 = vunpack.c.l.s4 1966171168
        %v1292 = vunpack.c.0.s8 %v1291
        %v1293 = vlaneseq
        %v1294 = vshrl.u32 %v1293, 7
        %v1295 = vsub.s32 %v1292, %v1294
        %v1296 = vrot.slane %v1280, %v1295
        %v1298 = vunpack.c.l.s4 1966171168
        %v1299 = vunpack.c.0.s8 %v1298
        %v1300 = vlaneseq
        %v1301 = vshrl.u32 %v1300, 7
        %v1302 = vsub.s32 %v1299, %v1301
        %v1303 = vrot.slane %v1281, %v1302
        %v1305 = vunpack.c.l.s4 1966171168
        %v1306 = vunpack.c.0.s8 %v1305
        %v1307 = vlaneseq
        %v1308 = vshrl.u32 %v1307, 7
        %v1309 = vsub.s32 %v1306, %v1308
        %v1310 = vrot.slane %v1282, %v1309
        %v1311 = vcombine.high %v1289, %v1289
        %v1312 = vcombine.high %v1296, %v1296
        %v1313 = vcombine.high %v1303, %v1303
        %v1314 = vcombine.high %v1310, %v1310
        %v1315 = vcombine.high %v963, %v963
        %v1317 = vunpack.c.l.s4 1966171168
        %v1318 = vunpack.c.0.s8 %v1317
        %v1319 = vlaneseq
        %v1320 = vshrl.u32 %v1319, 7
        %v1321 = vsub.s32 %v1318, %v1320
        %v1322 = vrot.slane %v963, %v1321
        %v1324 = vunpack.c.l.s4 1966171168
        %v1325 = vunpack.c.0.s8 %v1324
        %v1326 = vlaneseq
        %v1327 = vshrl.u32 %v1326, 7
        %v1328 = vsub.s32 %v1325, %v1327
        %v1329 = vrot.slane %v1315, %v1328
        %v1330 = vcombine.high %v1322, %v1322
        %v1331 = vcombine.high %v1329, %v1329
        %v1333 = vunpack.c.l.s4 1966171168
        %v1334 = vunpack.c.0.s8 %v1333
        %v1335 = vlaneseq
        %v1336 = vshrl.u32 %v1335, 7
        %v1337 = vsub.s32 %v1334, %v1336
        %v1338 = vrot.slane %v1322, %v1337
        %v1340 = vunpack.c.l.s4 1966171168
        %v1341 = vunpack.c.0.s8 %v1340
        %v1342 = vlaneseq
        %v1343 = vshrl.u32 %v1342, 7
        %v1344 = vsub.s32 %v1341, %v1343
        %v1345 = vrot.slane %v1329, %v1344
        %v1347 = vunpack.c.l.s4 1966171168
        %v1348 = vunpack.c.0.s8 %v1347
        %v1349 = vlaneseq
        %v1350 = vshrl.u32 %v1349, 7
        %v1351 = vsub.s32 %v1348, %v1350
        %v1352 = vrot.slane %v1330, %v1351
        %v1354 = vunpack.c.l.s4 1966171168
        %v1355 = vunpack.c.0.s8 %v1354
        %v1356 = vlaneseq
        %v1357 = vshrl.u32 %v1356, 7
        %v1358 = vsub.s32 %v1355, %v1357
        %v1359 = vrot.slane %v1331, %v1358
        %v1360 = vcombine.high %v1338, %v1338
        %v1361 = vcombine.high %v1345, %v1345
        %v1362 = vcombine.high %v1352, %v1352
        %v1363 = vcombine.high %v1359, %v1359
        %v1364 = vcombine.high %v964, %v964
        %v1366 = vunpack.c.l.s4 1966171168
        %v1367 = vunpack.c.0.s8 %v1366
        %v1368 = vlaneseq
        %v1369 = vshrl.u32 %v1368, 7
        %v1370 = vsub.s32 %v1367, %v1369
        %v1371 = vrot.slane %v964, %v1370
        %v1373 = vunpack.c.l.s4 1966171168
        %v1374 = vunpack.c.0.s8 %v1373
        %v1375 = vlaneseq
        %v1376 = vshrl.u32 %v1375, 7
        %v1377 = vsub.s32 %v1374, %v1376
        %v1378 = vrot.slane %v1364, %v1377
        %v1379 = vcombine.high %v1371, %v1371
        %v1380 = vcombine.high %v1378, %v1378
        %v1382 = vunpack.c.l.s4 1966171168
        %v1383 = vunpack.c.0.s8 %v1382
        %v1384 = vlaneseq
        %v1385 = vshrl.u32 %v1384, 7
        %v1386 = vsub.s32 %v1383, %v1385
        %v1387 = vrot.slane %v1371, %v1386
        %v1389 = vunpack.c.l.s4 1966171168
        %v1390 = vunpack.c.0.s8 %v1389
        %v1391 = vlaneseq
        %v1392 = vshrl.u32 %v1391, 7
        %v1393 = vsub.s32 %v1390, %v1392
        %v1394 = vrot.slane %v1378, %v1393
        %v1396 = vunpack.c.l.s4 1966171168
        %v1397 = vunpack.c.0.s8 %v1396
        %v1398 = vlaneseq
        %v1399 = vshrl.u32 %v1398, 7
        %v1400 = vsub.s32 %v1397, %v1399
        %v1401 = vrot.slane %v1379, %v1400
        %v1403 = vunpack.c.l.s4 1966171168
        %v1404 = vunpack.c.0.s8 %v1403
        %v1405 = vlaneseq
        %v1406 = vshrl.u32 %v1405, 7
        %v1407 = vsub.s32 %v1404, %v1406
        %v1408 = vrot.slane %v1380, %v1407
        %v1409 = vcombine.high %v1387, %v1387
        %v1410 = vcombine.high %v1394, %v1394
        %v1411 = vcombine.high %v1401, %v1401
        %v1412 = vcombine.high %v1408, %v1408
        %v1413 = vcombine.high %v965, %v965
        %v1415 = vunpack.c.l.s4 1966171168
        %v1416 = vunpack.c.0.s8 %v1415
        %v1417 = vlaneseq
        %v1418 = vshrl.u32 %v1417, 7
        %v1419 = vsub.s32 %v1416, %v1418
        %v1420 = vrot.slane %v965, %v1419
        %v1422 = vunpack.c.l.s4 1966171168
        %v1423 = vunpack.c.0.s8 %v1422
        %v1424 = vlaneseq
        %v1425 = vshrl.u32 %v1424, 7
        %v1426 = vsub.s32 %v1423, %v1425
        %v1427 = vrot.slane %v1413, %v1426
        %v1428 = vcombine.high %v1420, %v1420
        %v1429 = vcombine.high %v1427, %v1427
        %v1431 = vunpack.c.l.s4 1966171168
        %v1432 = vunpack.c.0.s8 %v1431
        %v1433 = vlaneseq
        %v1434 = vshrl.u32 %v1433, 7
        %v1435 = vsub.s32 %v1432, %v1434
        %v1436 = vrot.slane %v1420, %v1435
        %v1438 = vunpack.c.l.s4 1966171168
        %v1439 = vunpack.c.0.s8 %v1438
        %v1440 = vlaneseq
        %v1441 = vshrl.u32 %v1440, 7
        %v1442 = vsub.s32 %v1439, %v1441
        %v1443 = vrot.slane %v1427, %v1442
        %v1445 = vunpack.c.l.s4 1966171168
        %v1446 = vunpack.c.0.s8 %v1445
        %v1447 = vlaneseq
        %v1448 = vshrl.u32 %v1447, 7
        %v1449 = vsub.s32 %v1446, %v1448
        %v1450 = vrot.slane %v1428, %v1449
        %v1452 = vunpack.c.l.s4 1966171168
        %v1453 = vunpack.c.0.s8 %v1452
        %v1454 = vlaneseq
        %v1455 = vshrl.u32 %v1454, 7
        %v1456 = vsub.s32 %v1453, %v1455
        %v1457 = vrot.slane %v1429, %v1456
        %v1458 = vcombine.high %v1436, %v1436
        %v1459 = vcombine.high %v1443, %v1443
        %v1460 = vcombine.high %v1450, %v1450
        %v1461 = vcombine.high %v1457, %v1457
        %v1462 = vcombine.high %v966, %v966
        %v1464 = vunpack.c.l.s4 1966171168
        %v1465 = vunpack.c.0.s8 %v1464
        %v1466 = vlaneseq
        %v1467 = vshrl.u32 %v1466, 7
        %v1468 = vsub.s32 %v1465, %v1467
        %v1469 = vrot.slane %v966, %v1468
        %v1471 = vunpack.c.l.s4 1966171168
        %v1472 = vunpack.c.0.s8 %v1471
        %v1473 = vlaneseq
        %v1474 = vshrl.u32 %v1473, 7
        %v1475 = vsub.s32 %v1472, %v1474
        %v1476 = vrot.slane %v1462, %v1475
        %v1477 = vcombine.high %v1469, %v1469
        %v1478 = vcombine.high %v1476, %v1476
        %v1480 = vunpack.c.l.s4 1966171168
        %v1481 = vunpack.c.0.s8 %v1480
        %v1482 = vlaneseq
        %v1483 = vshrl.u32 %v1482, 7
        %v1484 = vsub.s32 %v1481, %v1483
        %v1485 = vrot.slane %v1469, %v1484
        %v1487 = vunpack.c.l.s4 1966171168
        %v1488 = vunpack.c.0.s8 %v1487
        %v1489 = vlaneseq
        %v1490 = vshrl.u32 %v1489, 7
        %v1491 = vsub.s32 %v1488, %v1490
        %v1492 = vrot.slane %v1476, %v1491
        %v1494 = vunpack.c.l.s4 1966171168
        %v1495 = vunpack.c.0.s8 %v1494
        %v1496 = vlaneseq
        %v1497 = vshrl.u32 %v1496, 7
        %v1498 = vsub.s32 %v1495, %v1497
        %v1499 = vrot.slane %v1477, %v1498
        %v1501 = vunpack.c.l.s4 1966171168
        %v1502 = vunpack.c.0.s8 %v1501
        %v1503 = vlaneseq
        %v1504 = vshrl.u32 %v1503, 7
        %v1505 = vsub.s32 %v1502, %v1504
        %v1506 = vrot.slane %v1478, %v1505
        %v1507 = vcombine.high %v1485, %v1485
        %v1508 = vcombine.high %v1492, %v1492
        %v1509 = vcombine.high %v1499, %v1499
        %v1510 = vcombine.high %v1506, %v1506
        %v1511 = vcombine.high %v967, %v967
        %v1513 = vunpack.c.l.s4 1966171168
        %v1514 = vunpack.c.0.s8 %v1513
        %v1515 = vlaneseq
        %v1516 = vshrl.u32 %v1515, 7
        %v1517 = vsub.s32 %v1514, %v1516
        %v1518 = vrot.slane %v967, %v1517
        %v1520 = vunpack.c.l.s4 1966171168
        %v1521 = vunpack.c.0.s8 %v1520
        %v1522 = vlaneseq
        %v1523 = vshrl.u32 %v1522, 7
        %v1524 = vsub.s32 %v1521, %v1523
        %v1525 = vrot.slane %v1511, %v1524
        %v1526 = vcombine.high %v1518, %v1518
        %v1527 = vcombine.high %v1525, %v1525
        %v1529 = vunpack.c.l.s4 1966171168
        %v1530 = vunpack.c.0.s8 %v1529
        %v1531 = vlaneseq
        %v1532 = vshrl.u32 %v1531, 7
        %v1533 = vsub.s32 %v1530, %v1532
        %v1534 = vrot.slane %v1518, %v1533
        %v1536 = vunpack.c.l.s4 1966171168
        %v1537 = vunpack.c.0.s8 %v1536
        %v1538 = vlaneseq
        %v1539 = vshrl.u32 %v1538, 7
        %v1540 = vsub.s32 %v1537, %v1539
        %v1541 = vrot.slane %v1525, %v1540
        %v1543 = vunpack.c.l.s4 1966171168
        %v1544 = vunpack.c.0.s8 %v1543
        %v1545 = vlaneseq
        %v1546 = vshrl.u32 %v1545, 7
        %v1547 = vsub.s32 %v1544, %v1546
        %v1548 = vrot.slane %v1526, %v1547
        %v1550 = vunpack.c.l.s4 1966171168
        %v1551 = vunpack.c.0.s8 %v1550
        %v1552 = vlaneseq
        %v1553 = vshrl.u32 %v1552, 7
        %v1554 = vsub.s32 %v1551, %v1553
        %v1555 = vrot.slane %v1527, %v1554
        %v1556 = vcombine.high %v1534, %v1534
        %v1557 = vcombine.high %v1541, %v1541
        %v1558 = vcombine.high %v1548, %v1548
        %v1559 = vcombine.high %v1555, %v1555
        %v1560 = vcombine.high %v968, %v968
        %v1562 = vunpack.c.l.s4 1966171168
        %v1563 = vunpack.c.0.s8 %v1562
        %v1564 = vlaneseq
        %v1565 = vshrl.u32 %v1564, 7
        %v1566 = vsub.s32 %v1563, %v1565
        %v1567 = vrot.slane %v968, %v1566
        %v1569 = vunpack.c.l.s4 1966171168
        %v1570 = vunpack.c.0.s8 %v1569
        %v1571 = vlaneseq
        %v1572 = vshrl.u32 %v1571, 7
        %v1573 = vsub.s32 %v1570, %v1572
        %v1574 = vrot.slane %v1560, %v1573
        %v1575 = vcombine.high %v1567, %v1567
        %v1576 = vcombine.high %v1574, %v1574
        %v1578 = vunpack.c.l.s4 1966171168
        %v1579 = vunpack.c.0.s8 %v1578
        %v1580 = vlaneseq
        %v1581 = vshrl.u32 %v1580, 7
        %v1582 = vsub.s32 %v1579, %v1581
        %v1583 = vrot.slane %v1567, %v1582
        %v1585 = vunpack.c.l.s4 1966171168
        %v1586 = vunpack.c.0.s8 %v1585
        %v1587 = vlaneseq
        %v1588 = vshrl.u32 %v1587, 7
        %v1589 = vsub.s32 %v1586, %v1588
        %v1590 = vrot.slane %v1574, %v1589
        %v1592 = vunpack.c.l.s4 1966171168
        %v1593 = vunpack.c.0.s8 %v1592
        %v1594 = vlaneseq
        %v1595 = vshrl.u32 %v1594, 7
        %v1596 = vsub.s32 %v1593, %v1595
        %v1597 = vrot.slane %v1575, %v1596
        %v1599 = vunpack.c.l.s4 1966171168
        %v1600 = vunpack.c.0.s8 %v1599
        %v1601 = vlaneseq
        %v1602 = vshrl.u32 %v1601, 7
        %v1603 = vsub.s32 %v1600, %v1602
        %v1604 = vrot.slane %v1576, %v1603
        %v1605 = vcombine.high %v1583, %v1583
        %v1606 = vcombine.high %v1590, %v1590
        %v1607 = vcombine.high %v1597, %v1597
        %v1608 = vcombine.high %v1604, %v1604
        %v1609 = vcombine.high %v969, %v969
        %v1611 = vunpack.c.l.s4 1966171168
        %v1612 = vunpack.c.0.s8 %v1611
        %v1613 = vlaneseq
        %v1614 = vshrl.u32 %v1613, 7
        %v1615 = vsub.s32 %v1612, %v1614
        %v1616 = vrot.slane %v969, %v1615
        %v1618 = vunpack.c.l.s4 1966171168
        %v1619 = vunpack.c.0.s8 %v1618
        %v1620 = vlaneseq
        %v1621 = vshrl.u32 %v1620, 7
        %v1622 = vsub.s32 %v1619, %v1621
        %v1623 = vrot.slane %v1609, %v1622
        %v1624 = vcombine.high %v1616, %v1616
        %v1625 = vcombine.high %v1623, %v1623
        %v1627 = vunpack.c.l.s4 1966171168
        %v1628 = vunpack.c.0.s8 %v1627
        %v1629 = vlaneseq
        %v1630 = vshrl.u32 %v1629, 7
        %v1631 = vsub.s32 %v1628, %v1630
        %v1632 = vrot.slane %v1616, %v1631
        %v1634 = vunpack.c.l.s4 1966171168
        %v1635 = vunpack.c.0.s8 %v1634
        %v1636 = vlaneseq
        %v1637 = vshrl.u32 %v1636, 7
        %v1638 = vsub.s32 %v1635, %v1637
        %v1639 = vrot.slane %v1623, %v1638
        %v1641 = vunpack.c.l.s4 1966171168
        %v1642 = vunpack.c.0.s8 %v1641
        %v1643 = vlaneseq
        %v1644 = vshrl.u32 %v1643, 7
        %v1645 = vsub.s32 %v1642, %v1644
        %v1646 = vrot.slane %v1624, %v1645
        %v1648 = vunpack.c.l.s4 1966171168
        %v1649 = vunpack.c.0.s8 %v1648
        %v1650 = vlaneseq
        %v1651 = vshrl.u32 %v1650, 7
        %v1652 = vsub.s32 %v1649, %v1651
        %v1653 = vrot.slane %v1625, %v1652
        %v1654 = vcombine.high %v1632, %v1632
        %v1655 = vcombine.high %v1639, %v1639
        %v1656 = vcombine.high %v1646, %v1646
        %v1657 = vcombine.high %v1653, %v1653
        %v1658 = vcombine.high %v970, %v970
        %v1660 = vunpack.c.l.s4 1966171168
        %v1661 = vunpack.c.0.s8 %v1660
        %v1662 = vlaneseq
        %v1663 = vshrl.u32 %v1662, 7
        %v1664 = vsub.s32 %v1661, %v1663
        %v1665 = vrot.slane %v970, %v1664
        %v1667 = vunpack.c.l.s4 1966171168
        %v1668 = vunpack.c.0.s8 %v1667
        %v1669 = vlaneseq
        %v1670 = vshrl.u32 %v1669, 7
        %v1671 = vsub.s32 %v1668, %v1670
        %v1672 = vrot.slane %v1658, %v1671
        %v1673 = vcombine.high %v1665, %v1665
        %v1674 = vcombine.high %v1672, %v1672
        %v1676 = vunpack.c.l.s4 1966171168
        %v1677 = vunpack.c.0.s8 %v1676
        %v1678 = vlaneseq
        %v1679 = vshrl.u32 %v1678, 7
        %v1680 = vsub.s32 %v1677, %v1679
        %v1681 = vrot.slane %v1665, %v1680
        %v1683 = vunpack.c.l.s4 1966171168
        %v1684 = vunpack.c.0.s8 %v1683
        %v1685 = vlaneseq
        %v1686 = vshrl.u32 %v1685, 7
        %v1687 = vsub.s32 %v1684, %v1686
        %v1688 = vrot.slane %v1672, %v1687
        %v1690 = vunpack.c.l.s4 1966171168
        %v1691 = vunpack.c.0.s8 %v1690
        %v1692 = vlaneseq
        %v1693 = vshrl.u32 %v1692, 7
        %v1694 = vsub.s32 %v1691, %v1693
        %v1695 = vrot.slane %v1673, %v1694
        %v1697 = vunpack.c.l.s4 1966171168
        %v1698 = vunpack.c.0.s8 %v1697
        %v1699 = vlaneseq
        %v1700 = vshrl.u32 %v1699, 7
        %v1701 = vsub.s32 %v1698, %v1700
        %v1702 = vrot.slane %v1674, %v1701
        %v1703 = vcombine.high %v1681, %v1681
        %v1704 = vcombine.high %v1688, %v1688
        %v1705 = vcombine.high %v1695, %v1695
        %v1706 = vcombine.high %v1702, %v1702
        %v1707 = vcombine.high %v971, %v971
        %v1709 = vunpack.c.l.s4 1966171168
        %v1710 = vunpack.c.0.s8 %v1709
        %v1711 = vlaneseq
        %v1712 = vshrl.u32 %v1711, 7
        %v1713 = vsub.s32 %v1710, %v1712
        %v1714 = vrot.slane %v971, %v1713
        %v1716 = vunpack.c.l.s4 1966171168
        %v1717 = vunpack.c.0.s8 %v1716
        %v1718 = vlaneseq
        %v1719 = vshrl.u32 %v1718, 7
        %v1720 = vsub.s32 %v1717, %v1719
        %v1721 = vrot.slane %v1707, %v1720
        %v1722 = vcombine.high %v1714, %v1714
        %v1723 = vcombine.high %v1721, %v1721
        %v1725 = vunpack.c.l.s4 1966171168
        %v1726 = vunpack.c.0.s8 %v1725
        %v1727 = vlaneseq
        %v1728 = vshrl.u32 %v1727, 7
        %v1729 = vsub.s32 %v1726, %v1728
        %v1730 = vrot.slane %v1714, %v1729
        %v1732 = vunpack.c.l.s4 1966171168
        %v1733 = vunpack.c.0.s8 %v1732
        %v1734 = vlaneseq
        %v1735 = vshrl.u32 %v1734, 7
        %v1736 = vsub.s32 %v1733, %v1735
        %v1737 = vrot.slane %v1721, %v1736
        %v1739 = vunpack.c.l.s4 1966171168
        %v1740 = vunpack.c.0.s8 %v1739
        %v1741 = vlaneseq
        %v1742 = vshrl.u32 %v1741, 7
        %v1743 = vsub.s32 %v1740, %v1742
        %v1744 = vrot.slane %v1722, %v1743
        %v1746 = vunpack.c.l.s4 1966171168
        %v1747 = vunpack.c.0.s8 %v1746
        %v1748 = vlaneseq
        %v1749 = vshrl.u32 %v1748, 7
        %v1750 = vsub.s32 %v1747, %v1749
        %v1751 = vrot.slane %v1723, %v1750
        %v1752 = vcombine.high %v1730, %v1730
        %v1753 = vcombine.high %v1737, %v1737
        %v1754 = vcombine.high %v1744, %v1744
        %v1755 = vcombine.high %v1751, %v1751
        %v1756 = vcombine.high %v972, %v972
        %v1758 = vunpack.c.l.s4 1966171168
        %v1759 = vunpack.c.0.s8 %v1758
        %v1760 = vlaneseq
        %v1761 = vshrl.u32 %v1760, 7
        %v1762 = vsub.s32 %v1759, %v1761
        %v1763 = vrot.slane %v972, %v1762
        %v1765 = vunpack.c.l.s4 1966171168
        %v1766 = vunpack.c.0.s8 %v1765
        %v1767 = vlaneseq
        %v1768 = vshrl.u32 %v1767, 7
        %v1769 = vsub.s32 %v1766, %v1768
        %v1770 = vrot.slane %v1756, %v1769
        %v1771 = vcombine.high %v1763, %v1763
        %v1772 = vcombine.high %v1770, %v1770
        %v1774 = vunpack.c.l.s4 1966171168
        %v1775 = vunpack.c.0.s8 %v1774
        %v1776 = vlaneseq
        %v1777 = vshrl.u32 %v1776, 7
        %v1778 = vsub.s32 %v1775, %v1777
        %v1779 = vrot.slane %v1763, %v1778
        %v1781 = vunpack.c.l.s4 1966171168
        %v1782 = vunpack.c.0.s8 %v1781
        %v1783 = vlaneseq
        %v1784 = vshrl.u32 %v1783, 7
        %v1785 = vsub.s32 %v1782, %v1784
        %v1786 = vrot.slane %v1770, %v1785
        %v1788 = vunpack.c.l.s4 1966171168
        %v1789 = vunpack.c.0.s8 %v1788
        %v1790 = vlaneseq
        %v1791 = vshrl.u32 %v1790, 7
        %v1792 = vsub.s32 %v1789, %v1791
        %v1793 = vrot.slane %v1771, %v1792
        %v1795 = vunpack.c.l.s4 1966171168
        %v1796 = vunpack.c.0.s8 %v1795
        %v1797 = vlaneseq
        %v1798 = vshrl.u32 %v1797, 7
        %v1799 = vsub.s32 %v1796, %v1798
        %v1800 = vrot.slane %v1772, %v1799
        %v1801 = vcombine.high %v1779, %v1779
        %v1802 = vcombine.high %v1786, %v1786
        %v1803 = vcombine.high %v1793, %v1793
        %v1804 = vcombine.high %v1800, %v1800
        %v1805 = vcombine.high %v973, %v973
        %v1807 = vunpack.c.l.s4 1966171168
        %v1808 = vunpack.c.0.s8 %v1807
        %v1809 = vlaneseq
        %v1810 = vshrl.u32 %v1809, 7
        %v1811 = vsub.s32 %v1808, %v1810
        %v1812 = vrot.slane %v973, %v1811
        %v1814 = vunpack.c.l.s4 1966171168
        %v1815 = vunpack.c.0.s8 %v1814
        %v1816 = vlaneseq
        %v1817 = vshrl.u32 %v1816, 7
        %v1818 = vsub.s32 %v1815, %v1817
        %v1819 = vrot.slane %v1805, %v1818
        %v1820 = vcombine.high %v1812, %v1812
        %v1821 = vcombine.high %v1819, %v1819
        %v1823 = vunpack.c.l.s4 1966171168
        %v1824 = vunpack.c.0.s8 %v1823
        %v1825 = vlaneseq
        %v1826 = vshrl.u32 %v1825, 7
        %v1827 = vsub.s32 %v1824, %v1826
        %v1828 = vrot.slane %v1812, %v1827
        %v1830 = vunpack.c.l.s4 1966171168
        %v1831 = vunpack.c.0.s8 %v1830
        %v1832 = vlaneseq
        %v1833 = vshrl.u32 %v1832, 7
        %v1834 = vsub.s32 %v1831, %v1833
        %v1835 = vrot.slane %v1819, %v1834
        %v1837 = vunpack.c.l.s4 1966171168
        %v1838 = vunpack.c.0.s8 %v1837
        %v1839 = vlaneseq
        %v1840 = vshrl.u32 %v1839, 7
        %v1841 = vsub.s32 %v1838, %v1840
        %v1842 = vrot.slane %v1820, %v1841
        %v1844 = vunpack.c.l.s4 1966171168
        %v1845 = vunpack.c.0.s8 %v1844
        %v1846 = vlaneseq
        %v1847 = vshrl.u32 %v1846, 7
        %v1848 = vsub.s32 %v1845, %v1847
        %v1849 = vrot.slane %v1821, %v1848
        %v1850 = vcombine.high %v1828, %v1828
        %v1851 = vcombine.high %v1835, %v1835
        %v1852 = vcombine.high %v1842, %v1842
        %v1853 = vcombine.high %v1849, %v1849
        %v1854 = vcombine.high %v974, %v974
        %v1856 = vunpack.c.l.s4 1966171168
        %v1857 = vunpack.c.0.s8 %v1856
        %v1858 = vlaneseq
        %v1859 = vshrl.u32 %v1858, 7
        %v1860 = vsub.s32 %v1857, %v1859
        %v1861 = vrot.slane %v974, %v1860
        %v1863 = vunpack.c.l.s4 1966171168
        %v1864 = vunpack.c.0.s8 %v1863
        %v1865 = vlaneseq
        %v1866 = vshrl.u32 %v1865, 7
        %v1867 = vsub.s32 %v1864, %v1866
        %v1868 = vrot.slane %v1854, %v1867
        %v1869 = vcombine.high %v1861, %v1861
        %v1870 = vcombine.high %v1868, %v1868
        %v1872 = vunpack.c.l.s4 1966171168
        %v1873 = vunpack.c.0.s8 %v1872
        %v1874 = vlaneseq
        %v1875 = vshrl.u32 %v1874, 7
        %v1876 = vsub.s32 %v1873, %v1875
        %v1877 = vrot.slane %v1861, %v1876
        %v1879 = vunpack.c.l.s4 1966171168
        %v1880 = vunpack.c.0.s8 %v1879
        %v1881 = vlaneseq
        %v1882 = vshrl.u32 %v1881, 7
        %v1883 = vsub.s32 %v1880, %v1882
        %v1884 = vrot.slane %v1868, %v1883
        %v1886 = vunpack.c.l.s4 1966171168
        %v1887 = vunpack.c.0.s8 %v1886
        %v1888 = vlaneseq
        %v1889 = vshrl.u32 %v1888, 7
        %v1890 = vsub.s32 %v1887, %v1889
        %v1891 = vrot.slane %v1869, %v1890
        %v1893 = vunpack.c.l.s4 1966171168
        %v1894 = vunpack.c.0.s8 %v1893
        %v1895 = vlaneseq
        %v1896 = vshrl.u32 %v1895, 7
        %v1897 = vsub.s32 %v1894, %v1896
        %v1898 = vrot.slane %v1870, %v1897
        %v1899 = vcombine.high %v1877, %v1877
        %v1900 = vcombine.high %v1884, %v1884
        %v1901 = vcombine.high %v1891, %v1891
        %v1902 = vcombine.high %v1898, %v1898
        %v1903 = vunpack.i.l.s16 %v1142
        %v1904 = vunpack.i.h.s16 %v1142
        %v1905 = vunpack.i.l.s16 %v1156
        %v1906 = vunpack.i.h.s16 %v1156
        %v1907 = vunpack.i.l.s16 %v1164
        %v1908 = vunpack.i.h.s16 %v1164
        %v1909 = vunpack.i.l.s16 %v1166
        %v1910 = vunpack.i.h.s16 %v1166
        %v1911 = vunpack.i.l.s16 %v1149
        %v1912 = vunpack.i.h.s16 %v1149
        %v1913 = vunpack.i.l.s16 %v1163
        %v1914 = vunpack.i.h.s16 %v1163
        %v1915 = vunpack.i.l.s16 %v1165
        %v1916 = vunpack.i.h.s16 %v1165
        %v1917 = vunpack.i.l.s16 %v1167
        %v1918 = vunpack.i.h.s16 %v1167
        %v1919 = vunpack.i.l.s16 %v1191
        %v1920 = vunpack.i.h.s16 %v1191
        %v1921 = vunpack.i.l.s16 %v1205
        %v1922 = vunpack.i.h.s16 %v1205
        %v1923 = vunpack.i.l.s16 %v1213
        %v1924 = vunpack.i.h.s16 %v1213
        %v1925 = vunpack.i.l.s16 %v1215
        %v1926 = vunpack.i.h.s16 %v1215
        %v1927 = vunpack.i.l.s16 %v1198
        %v1928 = vunpack.i.h.s16 %v1198
        %v1929 = vunpack.i.l.s16 %v1212
        %v1930 = vunpack.i.h.s16 %v1212
        %v1931 = vunpack.i.l.s16 %v1214
        %v1932 = vunpack.i.h.s16 %v1214
        %v1933 = vunpack.i.l.s16 %v1216
        %v1934 = vunpack.i.h.s16 %v1216
        %v1935 = vunpack.i.l.s16 %v1240
        %v1936 = vunpack.i.h.s16 %v1240
        %v1937 = vunpack.i.l.s16 %v1254
        %v1938 = vunpack.i.h.s16 %v1254
        %v1939 = vunpack.i.l.s16 %v1262
        %v1940 = vunpack.i.h.s16 %v1262
        %v1941 = vunpack.i.l.s16 %v1264
        %v1942 = vunpack.i.h.s16 %v1264
        %v1943 = vunpack.i.l.s16 %v1247
        %v1944 = vunpack.i.h.s16 %v1247
        %v1945 = vunpack.i.l.s16 %v1261
        %v1946 = vunpack.i.h.s16 %v1261
        %v1947 = vunpack.i.l.s16 %v1263
        %v1948 = vunpack.i.h.s16 %v1263
        %v1949 = vunpack.i.l.s16 %v1265
        %v1950 = vunpack.i.h.s16 %v1265
        %v1951 = vunpack.i.l.s16 %v1289
        %v1952 = vunpack.i.h.s16 %v1289
        %v1953 = vunpack.i.l.s16 %v1303
        %v1954 = vunpack.i.h.s16 %v1303
        %v1955 = vunpack.i.l.s16 %v1311
        %v1956 = vunpack.i.h.s16 %v1311
        %v1957 = vunpack.i.l.s16 %v1313
        %v1958 = vunpack.i.h.s16 %v1313
        %v1959 = vunpack.i.l.s16 %v1296
        %v1960 = vunpack.i.h.s16 %v1296
        %v1961 = vunpack.i.l.s16 %v1310
        %v1962 = vunpack.i.h.s16 %v1310
        %v1963 = vunpack.i.l.s16 %v1312
        %v1964 = vunpack.i.h.s16 %v1312
        %v1965 = vunpack.i.l.s16 %v1314
        %v1966 = vunpack.i.h.s16 %v1314
        %v1967 = vunpack.i.l.s16 %v1338
        %v1968 = vunpack.i.h.s16 %v1338
        %v1969 = vunpack.i.l.s16 %v1352
        %v1970 = vunpack.i.h.s16 %v1352
        %v1971 = vunpack.i.l.s16 %v1360
        %v1972 = vunpack.i.h.s16 %v1360
        %v1973 = vunpack.i.l.s16 %v1362
        %v1974 = vunpack.i.h.s16 %v1362
        %v1975 = vunpack.i.l.s16 %v1345
        %v1976 = vunpack.i.h.s16 %v1345
        %v1977 = vunpack.i.l.s16 %v1359
        %v1978 = vunpack.i.h.s16 %v1359
        %v1979 = vunpack.i.l.s16 %v1361
        %v1980 = vunpack.i.h.s16 %v1361
        %v1981 = vunpack.i.l.s16 %v1363
        %v1982 = vunpack.i.h.s16 %v1363
        %v1983 = vunpack.i.l.s16 %v1387
        %v1984 = vunpack.i.h.s16 %v1387
        %v1985 = vunpack.i.l.s16 %v1401
        %v1986 = vunpack.i.h.s16 %v1401
        %v1987 = vunpack.i.l.s16 %v1409
        %v1988 = vunpack.i.h.s16 %v1409
        %v1989 = vunpack.i.l.s16 %v1411
        %v1990 = vunpack.i.h.s16 %v1411
        %v1991 = vunpack.i.l.s16 %v1394
        %v1992 = vunpack.i.h.s16 %v1394
        %v1993 = vunpack.i.l.s16 %v1408
        %v1994 = vunpack.i.h.s16 %v1408
        %v1995 = vunpack.i.l.s16 %v1410
        %v1996 = vunpack.i.h.s16 %v1410
        %v1997 = vunpack.i.l.s16 %v1412
        %v1998 = vunpack.i.h.s16 %v1412
        %v1999 = vunpack.i.l.s16 %v1436
        %v2000 = vunpack.i.h.s16 %v1436
        %v2001 = vunpack.i.l.s16 %v1450
        %v2002 = vunpack.i.h.s16 %v1450
        %v2003 = vunpack.i.l.s16 %v1458
        %v2004 = vunpack.i.h.s16 %v1458
        %v2005 = vunpack.i.l.s16 %v1460
        %v2006 = vunpack.i.h.s16 %v1460
        %v2007 = vunpack.i.l.s16 %v1443
        %v2008 = vunpack.i.h.s16 %v1443
        %v2009 = vunpack.i.l.s16 %v1457
        %v2010 = vunpack.i.h.s16 %v1457
        %v2011 = vunpack.i.l.s16 %v1459
        %v2012 = vunpack.i.h.s16 %v1459
        %v2013 = vunpack.i.l.s16 %v1461
        %v2014 = vunpack.i.h.s16 %v1461
        %v2015 = vunpack.i.l.s16 %v1485
        %v2016 = vunpack.i.h.s16 %v1485
        %v2017 = vunpack.i.l.s16 %v1499
        %v2018 = vunpack.i.h.s16 %v1499
        %v2019 = vunpack.i.l.s16 %v1507
        %v2020 = vunpack.i.h.s16 %v1507
        %v2021 = vunpack.i.l.s16 %v1509
        %v2022 = vunpack.i.h.s16 %v1509
        %v2023 = vunpack.i.l.s16 %v1492
        %v2024 = vunpack.i.h.s16 %v1492
        %v2025 = vunpack.i.l.s16 %v1506
        %v2026 = vunpack.i.h.s16 %v1506
        %v2027 = vunpack.i.l.s16 %v1508
        %v2028 = vunpack.i.h.s16 %v1508
        %v2029 = vunpack.i.l.s16 %v1510
        %v2030 = vunpack.i.h.s16 %v1510
        %v2031 = vunpack.i.l.s16 %v1534
        %v2032 = vunpack.i.h.s16 %v1534
        %v2033 = vunpack.i.l.s16 %v1548
        %v2034 = vunpack.i.h.s16 %v1548
        %v2035 = vunpack.i.l.s16 %v1556
        %v2036 = vunpack.i.h.s16 %v1556
        %v2037 = vunpack.i.l.s16 %v1558
        %v2038 = vunpack.i.h.s16 %v1558
        %v2039 = vunpack.i.l.s16 %v1541
        %v2040 = vunpack.i.h.s16 %v1541
        %v2041 = vunpack.i.l.s16 %v1555
        %v2042 = vunpack.i.h.s16 %v1555
        %v2043 = vunpack.i.l.s16 %v1557
        %v2044 = vunpack.i.h.s16 %v1557
        %v2045 = vunpack.i.l.s16 %v1559
        %v2046 = vunpack.i.h.s16 %v1559
        %v2047 = vunpack.i.l.s16 %v1583
        %v2048 = vunpack.i.h.s16 %v1583
        %v2049 = vunpack.i.l.s16 %v1597
        %v2050 = vunpack.i.h.s16 %v1597
        %v2051 = vunpack.i.l.s16 %v1605
        %v2052 = vunpack.i.h.s16 %v1605
        %v2053 = vunpack.i.l.s16 %v1607
        %v2054 = vunpack.i.h.s16 %v1607
        %v2055 = vunpack.i.l.s16 %v1590
        %v2056 = vunpack.i.h.s16 %v1590
        %v2057 = vunpack.i.l.s16 %v1604
        %v2058 = vunpack.i.h.s16 %v1604
        %v2059 = vunpack.i.l.s16 %v1606
        %v2060 = vunpack.i.h.s16 %v1606
        %v2061 = vunpack.i.l.s16 %v1608
        %v2062 = vunpack.i.h.s16 %v1608
        %v2063 = vunpack.i.l.s16 %v1632
        %v2064 = vunpack.i.h.s16 %v1632
        %v2065 = vunpack.i.l.s16 %v1646
        %v2066 = vunpack.i.h.s16 %v1646
        %v2067 = vunpack.i.l.s16 %v1654
        %v2068 = vunpack.i.h.s16 %v1654
        %v2069 = vunpack.i.l.s16 %v1656
        %v2070 = vunpack.i.h.s16 %v1656
        %v2071 = vunpack.i.l.s16 %v1639
        %v2072 = vunpack.i.h.s16 %v1639
        %v2073 = vunpack.i.l.s16 %v1653
        %v2074 = vunpack.i.h.s16 %v1653
        %v2075 = vunpack.i.l.s16 %v1655
        %v2076 = vunpack.i.h.s16 %v1655
        %v2077 = vunpack.i.l.s16 %v1657
        %v2078 = vunpack.i.h.s16 %v1657
        %v2079 = vunpack.i.l.s16 %v1681
        %v2080 = vunpack.i.h.s16 %v1681
        %v2081 = vunpack.i.l.s16 %v1695
        %v2082 = vunpack.i.h.s16 %v1695
        %v2083 = vunpack.i.l.s16 %v1703
        %v2084 = vunpack.i.h.s16 %v1703
        %v2085 = vunpack.i.l.s16 %v1705
        %v2086 = vunpack.i.h.s16 %v1705
        %v2087 = vunpack.i.l.s16 %v1688
        %v2088 = vunpack.i.h.s16 %v1688
        %v2089 = vunpack.i.l.s16 %v1702
        %v2090 = vunpack.i.h.s16 %v1702
        %v2091 = vunpack.i.l.s16 %v1704
        %v2092 = vunpack.i.h.s16 %v1704
        %v2093 = vunpack.i.l.s16 %v1706
        %v2094 = vunpack.i.h.s16 %v1706
        %v2095 = vunpack.i.l.s16 %v1730
        %v2096 = vunpack.i.h.s16 %v1730
        %v2097 = vunpack.i.l.s16 %v1744
        %v2098 = vunpack.i.h.s16 %v1744
        %v2099 = vunpack.i.l.s16 %v1752
        %v2100 = vunpack.i.h.s16 %v1752
        %v2101 = vunpack.i.l.s16 %v1754
        %v2102 = vunpack.i.h.s16 %v1754
        %v2103 = vunpack.i.l.s16 %v1737
        %v2104 = vunpack.i.h.s16 %v1737
        %v2105 = vunpack.i.l.s16 %v1751
        %v2106 = vunpack.i.h.s16 %v1751
        %v2107 = vunpack.i.l.s16 %v1753
        %v2108 = vunpack.i.h.s16 %v1753
        %v2109 = vunpack.i.l.s16 %v1755
        %v2110 = vunpack.i.h.s16 %v1755
        %v2111 = vunpack.i.l.s16 %v1779
        %v2112 = vunpack.i.h.s16 %v1779
        %v2113 = vunpack.i.l.s16 %v1793
        %v2114 = vunpack.i.h.s16 %v1793
        %v2115 = vunpack.i.l.s16 %v1801
        %v2116 = vunpack.i.h.s16 %v1801
        %v2117 = vunpack.i.l.s16 %v1803
        %v2118 = vunpack.i.h.s16 %v1803
        %v2119 = vunpack.i.l.s16 %v1786
        %v2120 = vunpack.i.h.s16 %v1786
        %v2121 = vunpack.i.l.s16 %v1800
        %v2122 = vunpack.i.h.s16 %v1800
        %v2123 = vunpack.i.l.s16 %v1802
        %v2124 = vunpack.i.h.s16 %v1802
        %v2125 = vunpack.i.l.s16 %v1804
        %v2126 = vunpack.i.h.s16 %v1804
        %v2127 = vunpack.i.l.s16 %v1828
        %v2128 = vunpack.i.h.s16 %v1828
        %v2129 = vunpack.i.l.s16 %v1842
        %v2130 = vunpack.i.h.s16 %v1842
        %v2131 = vunpack.i.l.s16 %v1850
        %v2132 = vunpack.i.h.s16 %v1850
        %v2133 = vunpack.i.l.s16 %v1852
        %v2134 = vunpack.i.h.s16 %v1852
        %v2135 = vunpack.i.l.s16 %v1835
        %v2136 = vunpack.i.h.s16 %v1835
        %v2137 = vunpack.i.l.s16 %v1849
        %v2138 = vunpack.i.h.s16 %v1849
        %v2139 = vunpack.i.l.s16 %v1851
        %v2140 = vunpack.i.h.s16 %v1851
        %v2141 = vunpack.i.l.s16 %v1853
        %v2142 = vunpack.i.h.s16 %v1853
        %v2143 = vunpack.i.l.s16 %v1877
        %v2144 = vunpack.i.h.s16 %v1877
        %v2145 = vunpack.i.l.s16 %v1891
        %v2146 = vunpack.i.h.s16 %v1891
        %v2147 = vunpack.i.l.s16 %v1899
        %v2148 = vunpack.i.h.s16 %v1899
        %v2149 = vunpack.i.l.s16 %v1901
        %v2150 = vunpack.i.h.s16 %v1901
        %v2151 = vunpack.i.l.s16 %v1884
        %v2152 = vunpack.i.h.s16 %v1884
        %v2153 = vunpack.i.l.s16 %v1898
        %v2154 = vunpack.i.h.s16 %v1898
        %v2155 = vunpack.i.l.s16 %v1900
        %v2156 = vunpack.i.h.s16 %v1900
        %v2157 = vunpack.i.l.s16 %v1902
        %v2158 = vunpack.i.h.s16 %v1902
        %v2159 = vpack.i.b16 %v1903, %v1903
        %v2160 = vpack.i.b16 %v1904, %v1904
        %v2161 = vpack.i.b16 %v1905, %v1905
        %v2162 = vpack.i.b16 %v1906, %v1906
        %v2163 = vpack.i.b16 %v1907, %v1907
        %v2164 = vpack.i.b16 %v1908, %v1908
        %v2165 = vpack.i.b16 %v1909, %v1909
        %v2166 = vpack.i.b16 %v1910, %v1910
        %v2167 = vpack.i.b16 %v1911, %v1911
        %v2168 = vpack.i.b16 %v1912, %v1912
        %v2169 = vpack.i.b16 %v1913, %v1913
        %v2170 = vpack.i.b16 %v1914, %v1914
        %v2171 = vpack.i.b16 %v1915, %v1915
        %v2172 = vpack.i.b16 %v1916, %v1916
        %v2173 = vpack.i.b16 %v1917, %v1917
        %v2174 = vpack.i.b16 %v1918, %v1918
        %v2175 = vpack.i.b16 %v1919, %v1919
        %v2176 = vpack.i.b16 %v1920, %v1920
        %v2177 = vpack.i.b16 %v1921, %v1921
        %v2178 = vpack.i.b16 %v1922, %v1922
        %v2179 = vpack.i.b16 %v1923, %v1923
        %v2180 = vpack.i.b16 %v1924, %v1924
        %v2181 = vpack.i.b16 %v1925, %v1925
        %v2182 = vpack.i.b16 %v1926, %v1926
        %v2183 = vpack.i.b16 %v1927, %v1927
        %v2184 = vpack.i.b16 %v1928, %v1928
        %v2185 = vpack.i.b16 %v1929, %v1929
        %v2186 = vpack.i.b16 %v1930, %v1930
        %v2187 = vpack.i.b16 %v1931, %v1931
        %v2188 = vpack.i.b16 %v1932, %v1932
        %v2189 = vpack.i.b16 %v1933, %v1933
        %v2190 = vpack.i.b16 %v1934, %v1934
        %v2191 = vpack.i.b16 %v1935, %v1935
        %v2192 = vpack.i.b16 %v1936, %v1936
        %v2193 = vpack.i.b16 %v1937, %v1937
        %v2194 = vpack.i.b16 %v1938, %v1938
        %v2195 = vpack.i.b16 %v1939, %v1939
        %v2196 = vpack.i.b16 %v1940, %v1940
        %v2197 = vpack.i.b16 %v1941, %v1941
        %v2198 = vpack.i.b16 %v1942, %v1942
        %v2199 = vpack.i.b16 %v1943, %v1943
        %v2200 = vpack.i.b16 %v1944, %v1944
        %v2201 = vpack.i.b16 %v1945, %v1945
        %v2202 = vpack.i.b16 %v1946, %v1946
        %v2203 = vpack.i.b16 %v1947, %v1947
        %v2204 = vpack.i.b16 %v1948, %v1948
        %v2205 = vpack.i.b16 %v1949, %v1949
        %v2206 = vpack.i.b16 %v1950, %v1950
        %v2207 = vpack.i.b16 %v1951, %v1951
        %v2208 = vpack.i.b16 %v1952, %v1952
        %v2209 = vpack.i.b16 %v1953, %v1953
        %v2210 = vpack.i.b16 %v1954, %v1954
        %v2211 = vpack.i.b16 %v1955, %v1955
        %v2212 = vpack.i.b16 %v1956, %v1956
        %v2213 = vpack.i.b16 %v1957, %v1957
        %v2214 = vpack.i.b16 %v1958, %v1958
        %v2215 = vpack.i.b16 %v1959, %v1959
        %v2216 = vpack.i.b16 %v1960, %v1960
        %v2217 = vpack.i.b16 %v1961, %v1961
        %v2218 = vpack.i.b16 %v1962, %v1962
        %v2219 = vpack.i.b16 %v1963, %v1963
        %v2220 = vpack.i.b16 %v1964, %v1964
        %v2221 = vpack.i.b16 %v1965, %v1965
        %v2222 = vpack.i.b16 %v1966, %v1966
        %v2223 = vpack.i.b16 %v1967, %v1967
        %v2224 = vpack.i.b16 %v1968, %v1968
        %v2225 = vpack.i.b16 %v1969, %v1969
        %v2226 = vpack.i.b16 %v1970, %v1970
        %v2227 = vpack.i.b16 %v1971, %v1971
        %v2228 = vpack.i.b16 %v1972, %v1972
        %v2229 = vpack.i.b16 %v1973, %v1973
        %v2230 = vpack.i.b16 %v1974, %v1974
        %v2231 = vpack.i.b16 %v1975, %v1975
        %v2232 = vpack.i.b16 %v1976, %v1976
        %v2233 = vpack.i.b16 %v1977, %v1977
        %v2234 = vpack.i.b16 %v1978, %v1978
        %v2235 = vpack.i.b16 %v1979, %v1979
        %v2236 = vpack.i.b16 %v1980, %v1980
        %v2237 = vpack.i.b16 %v1981, %v1981
        %v2238 = vpack.i.b16 %v1982, %v1982
        %v2239 = vpack.i.b16 %v1983, %v1983
        %v2240 = vpack.i.b16 %v1984, %v1984
        %v2241 = vpack.i.b16 %v1985, %v1985
        %v2242 = vpack.i.b16 %v1986, %v1986
        %v2243 = vpack.i.b16 %v1987, %v1987
        %v2244 = vpack.i.b16 %v1988, %v1988
        %v2245 = vpack.i.b16 %v1989, %v1989
        %v2246 = vpack.i.b16 %v1990, %v1990
        %v2247 = vpack.i.b16 %v1991, %v1991
        %v2248 = vpack.i.b16 %v1992, %v1992
        %v2249 = vpack.i.b16 %v1993, %v1993
        %v2250 = vpack.i.b16 %v1994, %v1994
        %v2251 = vpack.i.b16 %v1995, %v1995
        %v2252 = vpack.i.b16 %v1996, %v1996
        %v2253 = vpack.i.b16 %v1997, %v1997
        %v2254 = vpack.i.b16 %v1998, %v1998
        %v2255 = vpack.i.b16 %v1999, %v1999
        %v2256 = vpack.i.b16 %v2000, %v2000
        %v2257 = vpack.i.b16 %v2001, %v2001
        %v2258 = vpack.i.b16 %v2002, %v2002
        %v2259 = vpack.i.b16 %v2003, %v2003
        %v2260 = vpack.i.b16 %v2004, %v2004
        %v2261 = vpack.i.b16 %v2005, %v2005
        %v2262 = vpack.i.b16 %v2006, %v2006
        %v2263 = vpack.i.b16 %v2007, %v2007
        %v2264 = vpack.i.b16 %v2008, %v2008
        %v2265 = vpack.i.b16 %v2009, %v2009
        %v2266 = vpack.i.b16 %v2010, %v2010
        %v2267 = vpack.i.b16 %v2011, %v2011
        %v2268 = vpack.i.b16 %v2012, %v2012
        %v2269 = vpack.i.b16 %v2013, %v2013
        %v2270 = vpack.i.b16 %v2014, %v2014
        %v2271 = vpack.i.b16 %v2015, %v2015
        %v2272 = vpack.i.b16 %v2016, %v2016
        %v2273 = vpack.i.b16 %v2017, %v2017
        %v2274 = vpack.i.b16 %v2018, %v2018
        %v2275 = vpack.i.b16 %v2019, %v2019
        %v2276 = vpack.i.b16 %v2020, %v2020
        %v2277 = vpack.i.b16 %v2021, %v2021
        %v2278 = vpack.i.b16 %v2022, %v2022
        %v2279 = vpack.i.b16 %v2023, %v2023
        %v2280 = vpack.i.b16 %v2024, %v2024
        %v2281 = vpack.i.b16 %v2025, %v2025
        %v2282 = vpack.i.b16 %v2026, %v2026
        %v2283 = vpack.i.b16 %v2027, %v2027
        %v2284 = vpack.i.b16 %v2028, %v2028
        %v2285 = vpack.i.b16 %v2029, %v2029
        %v2286 = vpack.i.b16 %v2030, %v2030
        %v2287 = vpack.i.b16 %v2031, %v2031
        %v2288 = vpack.i.b16 %v2032, %v2032
        %v2289 = vpack.i.b16 %v2033, %v2033
        %v2290 = vpack.i.b16 %v2034, %v2034
        %v2291 = vpack.i.b16 %v2035, %v2035
        %v2292 = vpack.i.b16 %v2036, %v2036
        %v2293 = vpack.i.b16 %v2037, %v2037
        %v2294 = vpack.i.b16 %v2038, %v2038
        %v2295 = vpack.i.b16 %v2039, %v2039
        %v2296 = vpack.i.b16 %v2040, %v2040
        %v2297 = vpack.i.b16 %v2041, %v2041
        %v2298 = vpack.i.b16 %v2042, %v2042
        %v2299 = vpack.i.b16 %v2043, %v2043
        %v2300 = vpack.i.b16 %v2044, %v2044
        %v2301 = vpack.i.b16 %v2045, %v2045
        %v2302 = vpack.i.b16 %v2046, %v2046
        %v2303 = vpack.i.b16 %v2047, %v2047
        %v2304 = vpack.i.b16 %v2048, %v2048
        %v2305 = vpack.i.b16 %v2049, %v2049
        %v2306 = vpack.i.b16 %v2050, %v2050
        %v2307 = vpack.i.b16 %v2051, %v2051
        %v2308 = vpack.i.b16 %v2052, %v2052
        %v2309 = vpack.i.b16 %v2053, %v2053
        %v2310 = vpack.i.b16 %v2054, %v2054
        %v2311 = vpack.i.b16 %v2055, %v2055
        %v2312 = vpack.i.b16 %v2056, %v2056
        %v2313 = vpack.i.b16 %v2057, %v2057
        %v2314 = vpack.i.b16 %v2058, %v2058
        %v2315 = vpack.i.b16 %v2059, %v2059
        %v2316 = vpack.i.b16 %v2060, %v2060
        %v2317 = vpack.i.b16 %v2061, %v2061
        %v2318 = vpack.i.b16 %v2062, %v2062
        %v2319 = vpack.i.b16 %v2063, %v2063
        %v2320 = vpack.i.b16 %v2064, %v2064
        %v2321 = vpack.i.b16 %v2065, %v2065
        %v2322 = vpack.i.b16 %v2066, %v2066
        %v2323 = vpack.i.b16 %v2067, %v2067
        %v2324 = vpack.i.b16 %v2068, %v2068
        %v2325 = vpack.i.b16 %v2069, %v2069
        %v2326 = vpack.i.b16 %v2070, %v2070
        %v2327 = vpack.i.b16 %v2071, %v2071
        %v2328 = vpack.i.b16 %v2072, %v2072
        %v2329 = vpack.i.b16 %v2073, %v2073
        %v2330 = vpack.i.b16 %v2074, %v2074
        %v2331 = vpack.i.b16 %v2075, %v2075
        %v2332 = vpack.i.b16 %v2076, %v2076
        %v2333 = vpack.i.b16 %v2077, %v2077
        %v2334 = vpack.i.b16 %v2078, %v2078
        %v2335 = vpack.i.b16 %v2079, %v2079
        %v2336 = vpack.i.b16 %v2080, %v2080
        %v2337 = vpack.i.b16 %v2081, %v2081
        %v2338 = vpack.i.b16 %v2082, %v2082
        %v2339 = vpack.i.b16 %v2083, %v2083
        %v2340 = vpack.i.b16 %v2084, %v2084
        %v2341 = vpack.i.b16 %v2085, %v2085
        %v2342 = vpack.i.b16 %v2086, %v2086
        %v2343 = vpack.i.b16 %v2087, %v2087
        %v2344 = vpack.i.b16 %v2088, %v2088
        %v2345 = vpack.i.b16 %v2089, %v2089
        %v2346 = vpack.i.b16 %v2090, %v2090
        %v2347 = vpack.i.b16 %v2091, %v2091
        %v2348 = vpack.i.b16 %v2092, %v2092
        %v2349 = vpack.i.b16 %v2093, %v2093
        %v2350 = vpack.i.b16 %v2094, %v2094
        %v2351 = vpack.i.b16 %v2095, %v2095
        %v2352 = vpack.i.b16 %v2096, %v2096
        %v2353 = vpack.i.b16 %v2097, %v2097
        %v2354 = vpack.i.b16 %v2098, %v2098
        %v2355 = vpack.i.b16 %v2099, %v2099
        %v2356 = vpack.i.b16 %v2100, %v2100
        %v2357 = vpack.i.b16 %v2101, %v2101
        %v2358 = vpack.i.b16 %v2102, %v2102
        %v2359 = vpack.i.b16 %v2103, %v2103
        %v2360 = vpack.i.b16 %v2104, %v2104
        %v2361 = vpack.i.b16 %v2105, %v2105
        %v2362 = vpack.i.b16 %v2106, %v2106
        %v2363 = vpack.i.b16 %v2107, %v2107
        %v2364 = vpack.i.b16 %v2108, %v2108
        %v2365 = vpack.i.b16 %v2109, %v2109
        %v2366 = vpack.i.b16 %v2110, %v2110
        %v2367 = vpack.i.b16 %v2111, %v2111
        %v2368 = vpack.i.b16 %v2112, %v2112
        %v2369 = vpack.i.b16 %v2113, %v2113
        %v2370 = vpack.i.b16 %v2114, %v2114
        %v2371 = vpack.i.b16 %v2115, %v2115
        %v2372 = vpack.i.b16 %v2116, %v2116
        %v2373 = vpack.i.b16 %v2117, %v2117
        %v2374 = vpack.i.b16 %v2118, %v2118
        %v2375 = vpack.i.b16 %v2119, %v2119
        %v2376 = vpack.i.b16 %v2120, %v2120
        %v2377 = vpack.i.b16 %v2121, %v2121
        %v2378 = vpack.i.b16 %v2122, %v2122
        %v2379 = vpack.i.b16 %v2123, %v2123
        %v2380 = vpack.i.b16 %v2124, %v2124
        %v2381 = vpack.i.b16 %v2125, %v2125
        %v2382 = vpack.i.b16 %v2126, %v2126
        %v2383 = vpack.i.b16 %v2127, %v2127
        %v2384 = vpack.i.b16 %v2128, %v2128
        %v2385 = vpack.i.b16 %v2129, %v2129
        %v2386 = vpack.i.b16 %v2130, %v2130
        %v2387 = vpack.i.b16 %v2131, %v2131
        %v2388 = vpack.i.b16 %v2132, %v2132
        %v2389 = vpack.i.b16 %v2133, %v2133
        %v2390 = vpack.i.b16 %v2134, %v2134
        %v2391 = vpack.i.b16 %v2135, %v2135
        %v2392 = vpack.i.b16 %v2136, %v2136
        %v2393 = vpack.i.b16 %v2137, %v2137
        %v2394 = vpack.i.b16 %v2138, %v2138
        %v2395 = vpack.i.b16 %v2139, %v2139
        %v2396 = vpack.i.b16 %v2140, %v2140
        %v2397 = vpack.i.b16 %v2141, %v2141
        %v2398 = vpack.i.b16 %v2142, %v2142
        %v2399 = vpack.i.b16 %v2143, %v2143
        %v2400 = vpack.i.b16 %v2144, %v2144
        %v2401 = vpack.i.b16 %v2145, %v2145
        %v2402 = vpack.i.b16 %v2146, %v2146
        %v2403 = vpack.i.b16 %v2147, %v2147
        %v2404 = vpack.i.b16 %v2148, %v2148
        %v2405 = vpack.i.b16 %v2149, %v2149
        %v2406 = vpack.i.b16 %v2150, %v2150
        %v2407 = vpack.i.b16 %v2151, %v2151
        %v2408 = vpack.i.b16 %v2152, %v2152
        %v2409 = vpack.i.b16 %v2153, %v2153
        %v2410 = vpack.i.b16 %v2154, %v2154
        %v2411 = vpack.i.b16 %v2155, %v2155
        %v2412 = vpack.i.b16 %v2156, %v2156
        %v2413 = vpack.i.b16 %v2157, %v2157
        %v2414 = vpack.i.b16 %v2158, %v2158
        %v2415 = vlaneseq
        %v2416 = vshrl.u32 %v2415, 7
        %v2417 = vsub.s32 0, %v2416
        %v2418 = vrot.slane %v2159, %v2417
        %v2419 = vlaneseq
        %v2420 = vshrl.u32 %v2419, 7
        %v2421 = vsub.s32 0, %v2420
        %v2422 = vrot.slane %v2160, %v2421
        %v2423 = vlaneseq
        %v2424 = vshrl.u32 %v2423, 7
        %v2425 = vsub.s32 0, %v2424
        %v2426 = vrot.slane %v2161, %v2425
        %v2427 = vlaneseq
        %v2428 = vshrl.u32 %v2427, 7
        %v2429 = vsub.s32 0, %v2428
        %v2430 = vrot.slane %v2162, %v2429
        %v2431 = vlaneseq
        %v2432 = vshrl.u32 %v2431, 7
        %v2433 = vsub.s32 0, %v2432
        %v2434 = vrot.slane %v2163, %v2433
        %v2435 = vlaneseq
        %v2436 = vshrl.u32 %v2435, 7
        %v2437 = vsub.s32 0, %v2436
        %v2438 = vrot.slane %v2164, %v2437
        %v2439 = vlaneseq
        %v2440 = vshrl.u32 %v2439, 7
        %v2441 = vsub.s32 0, %v2440
        %v2442 = vrot.slane %v2165, %v2441
        %v2443 = vlaneseq
        %v2444 = vshrl.u32 %v2443, 7
        %v2445 = vsub.s32 0, %v2444
        %v2446 = vrot.slane %v2166, %v2445
        %v2447 = vlaneseq
        %v2448 = vshrl.u32 %v2447, 7
        %v2449 = vsub.s32 0, %v2448
        %v2450 = vrot.slane %v2167, %v2449
        %v2451 = vlaneseq
        %v2452 = vshrl.u32 %v2451, 7
        %v2453 = vsub.s32 0, %v2452
        %v2454 = vrot.slane %v2168, %v2453
        %v2455 = vlaneseq
        %v2456 = vshrl.u32 %v2455, 7
        %v2457 = vsub.s32 0, %v2456
        %v2458 = vrot.slane %v2169, %v2457
        %v2459 = vlaneseq
        %v2460 = vshrl.u32 %v2459, 7
        %v2461 = vsub.s32 0, %v2460
        %v2462 = vrot.slane %v2170, %v2461
        %v2463 = vlaneseq
        %v2464 = vshrl.u32 %v2463, 7
        %v2465 = vsub.s32 0, %v2464
        %v2466 = vrot.slane %v2171, %v2465
        %v2467 = vlaneseq
        %v2468 = vshrl.u32 %v2467, 7
        %v2469 = vsub.s32 0, %v2468
        %v2470 = vrot.slane %v2172, %v2469
        %v2471 = vlaneseq
        %v2472 = vshrl.u32 %v2471, 7
        %v2473 = vsub.s32 0, %v2472
        %v2474 = vrot.slane %v2173, %v2473
        %v2475 = vlaneseq
        %v2476 = vshrl.u32 %v2475, 7
        %v2477 = vsub.s32 0, %v2476
        %v2478 = vrot.slane %v2174, %v2477
        %v2479 = vlaneseq
        %v2480 = vshrl.u32 %v2479, 7
        %v2481 = vsub.s32 0, %v2480
        %v2482 = vrot.slane %v2175, %v2481
        %v2483 = vlaneseq
        %v2484 = vshrl.u32 %v2483, 7
        %v2485 = vsub.s32 0, %v2484
        %v2486 = vrot.slane %v2176, %v2485
        %v2487 = vlaneseq
        %v2488 = vshrl.u32 %v2487, 7
        %v2489 = vsub.s32 0, %v2488
        %v2490 = vrot.slane %v2177, %v2489
        %v2491 = vlaneseq
        %v2492 = vshrl.u32 %v2491, 7
        %v2493 = vsub.s32 0, %v2492
        %v2494 = vrot.slane %v2178, %v2493
        %v2495 = vlaneseq
        %v2496 = vshrl.u32 %v2495, 7
        %v2497 = vsub.s32 0, %v2496
        %v2498 = vrot.slane %v2179, %v2497
        %v2499 = vlaneseq
        %v2500 = vshrl.u32 %v2499, 7
        %v2501 = vsub.s32 0, %v2500
        %v2502 = vrot.slane %v2180, %v2501
        %v2503 = vlaneseq
        %v2504 = vshrl.u32 %v2503, 7
        %v2505 = vsub.s32 0, %v2504
        %v2506 = vrot.slane %v2181, %v2505
        %v2507 = vlaneseq
        %v2508 = vshrl.u32 %v2507, 7
        %v2509 = vsub.s32 0, %v2508
        %v2510 = vrot.slane %v2182, %v2509
        %v2511 = vlaneseq
        %v2512 = vshrl.u32 %v2511, 7
        %v2513 = vsub.s32 0, %v2512
        %v2514 = vrot.slane %v2183, %v2513
        %v2515 = vlaneseq
        %v2516 = vshrl.u32 %v2515, 7
        %v2517 = vsub.s32 0, %v2516
        %v2518 = vrot.slane %v2184, %v2517
        %v2519 = vlaneseq
        %v2520 = vshrl.u32 %v2519, 7
        %v2521 = vsub.s32 0, %v2520
        %v2522 = vrot.slane %v2185, %v2521
        %v2523 = vlaneseq
        %v2524 = vshrl.u32 %v2523, 7
        %v2525 = vsub.s32 0, %v2524
        %v2526 = vrot.slane %v2186, %v2525
        %v2527 = vlaneseq
        %v2528 = vshrl.u32 %v2527, 7
        %v2529 = vsub.s32 0, %v2528
        %v2530 = vrot.slane %v2187, %v2529
        %v2531 = vlaneseq
        %v2532 = vshrl.u32 %v2531, 7
        %v2533 = vsub.s32 0, %v2532
        %v2534 = vrot.slane %v2188, %v2533
        %v2535 = vlaneseq
        %v2536 = vshrl.u32 %v2535, 7
        %v2537 = vsub.s32 0, %v2536
        %v2538 = vrot.slane %v2189, %v2537
        %v2539 = vlaneseq
        %v2540 = vshrl.u32 %v2539, 7
        %v2541 = vsub.s32 0, %v2540
        %v2542 = vrot.slane %v2190, %v2541
        %v2543 = vlaneseq
        %v2544 = vshrl.u32 %v2543, 7
        %v2545 = vsub.s32 0, %v2544
        %v2546 = vrot.slane %v2191, %v2545
        %v2547 = vlaneseq
        %v2548 = vshrl.u32 %v2547, 7
        %v2549 = vsub.s32 0, %v2548
        %v2550 = vrot.slane %v2192, %v2549
        %v2551 = vlaneseq
        %v2552 = vshrl.u32 %v2551, 7
        %v2553 = vsub.s32 0, %v2552
        %v2554 = vrot.slane %v2193, %v2553
        %v2555 = vlaneseq
        %v2556 = vshrl.u32 %v2555, 7
        %v2557 = vsub.s32 0, %v2556
        %v2558 = vrot.slane %v2194, %v2557
        %v2559 = vlaneseq
        %v2560 = vshrl.u32 %v2559, 7
        %v2561 = vsub.s32 0, %v2560
        %v2562 = vrot.slane %v2195, %v2561
        %v2563 = vlaneseq
        %v2564 = vshrl.u32 %v2563, 7
        %v2565 = vsub.s32 0, %v2564
        %v2566 = vrot.slane %v2196, %v2565
        %v2567 = vlaneseq
        %v2568 = vshrl.u32 %v2567, 7
        %v2569 = vsub.s32 0, %v2568
        %v2570 = vrot.slane %v2197, %v2569
        %v2571 = vlaneseq
        %v2572 = vshrl.u32 %v2571, 7
        %v2573 = vsub.s32 0, %v2572
        %v2574 = vrot.slane %v2198, %v2573
        %v2575 = vlaneseq
        %v2576 = vshrl.u32 %v2575, 7
        %v2577 = vsub.s32 0, %v2576
        %v2578 = vrot.slane %v2199, %v2577
        %v2579 = vlaneseq
        %v2580 = vshrl.u32 %v2579, 7
        %v2581 = vsub.s32 0, %v2580
        %v2582 = vrot.slane %v2200, %v2581
        %v2583 = vlaneseq
        %v2584 = vshrl.u32 %v2583, 7
        %v2585 = vsub.s32 0, %v2584
        %v2586 = vrot.slane %v2201, %v2585
        %v2587 = vlaneseq
        %v2588 = vshrl.u32 %v2587, 7
        %v2589 = vsub.s32 0, %v2588
        %v2590 = vrot.slane %v2202, %v2589
        %v2591 = vlaneseq
        %v2592 = vshrl.u32 %v2591, 7
        %v2593 = vsub.s32 0, %v2592
        %v2594 = vrot.slane %v2203, %v2593
        %v2595 = vlaneseq
        %v2596 = vshrl.u32 %v2595, 7
        %v2597 = vsub.s32 0, %v2596
        %v2598 = vrot.slane %v2204, %v2597
        %v2599 = vlaneseq
        %v2600 = vshrl.u32 %v2599, 7
        %v2601 = vsub.s32 0, %v2600
        %v2602 = vrot.slane %v2205, %v2601
        %v2603 = vlaneseq
        %v2604 = vshrl.u32 %v2603, 7
        %v2605 = vsub.s32 0, %v2604
        %v2606 = vrot.slane %v2206, %v2605
        %v2607 = vlaneseq
        %v2608 = vshrl.u32 %v2607, 7
        %v2609 = vsub.s32 0, %v2608
        %v2610 = vrot.slane %v2207, %v2609
        %v2611 = vlaneseq
        %v2612 = vshrl.u32 %v2611, 7
        %v2613 = vsub.s32 0, %v2612
        %v2614 = vrot.slane %v2208, %v2613
        %v2615 = vlaneseq
        %v2616 = vshrl.u32 %v2615, 7
        %v2617 = vsub.s32 0, %v2616
        %v2618 = vrot.slane %v2209, %v2617
        %v2619 = vlaneseq
        %v2620 = vshrl.u32 %v2619, 7
        %v2621 = vsub.s32 0, %v2620
        %v2622 = vrot.slane %v2210, %v2621
        %v2623 = vlaneseq
        %v2624 = vshrl.u32 %v2623, 7
        %v2625 = vsub.s32 0, %v2624
        %v2626 = vrot.slane %v2211, %v2625
        %v2627 = vlaneseq
        %v2628 = vshrl.u32 %v2627, 7
        %v2629 = vsub.s32 0, %v2628
        %v2630 = vrot.slane %v2212, %v2629
        %v2631 = vlaneseq
        %v2632 = vshrl.u32 %v2631, 7
        %v2633 = vsub.s32 0, %v2632
        %v2634 = vrot.slane %v2213, %v2633
        %v2635 = vlaneseq
        %v2636 = vshrl.u32 %v2635, 7
        %v2637 = vsub.s32 0, %v2636
        %v2638 = vrot.slane %v2214, %v2637
        %v2639 = vlaneseq
        %v2640 = vshrl.u32 %v2639, 7
        %v2641 = vsub.s32 0, %v2640
        %v2642 = vrot.slane %v2215, %v2641
        %v2643 = vlaneseq
        %v2644 = vshrl.u32 %v2643, 7
        %v2645 = vsub.s32 0, %v2644
        %v2646 = vrot.slane %v2216, %v2645
        %v2647 = vlaneseq
        %v2648 = vshrl.u32 %v2647, 7
        %v2649 = vsub.s32 0, %v2648
        %v2650 = vrot.slane %v2217, %v2649
        %v2651 = vlaneseq
        %v2652 = vshrl.u32 %v2651, 7
        %v2653 = vsub.s32 0, %v2652
        %v2654 = vrot.slane %v2218, %v2653
        %v2655 = vlaneseq
        %v2656 = vshrl.u32 %v2655, 7
        %v2657 = vsub.s32 0, %v2656
        %v2658 = vrot.slane %v2219, %v2657
        %v2659 = vlaneseq
        %v2660 = vshrl.u32 %v2659, 7
        %v2661 = vsub.s32 0, %v2660
        %v2662 = vrot.slane %v2220, %v2661
        %v2663 = vlaneseq
        %v2664 = vshrl.u32 %v2663, 7
        %v2665 = vsub.s32 0, %v2664
        %v2666 = vrot.slane %v2221, %v2665
        %v2667 = vlaneseq
        %v2668 = vshrl.u32 %v2667, 7
        %v2669 = vsub.s32 0, %v2668
        %v2670 = vrot.slane %v2222, %v2669
        %v2671 = vlaneseq
        %v2672 = vshrl.u32 %v2671, 7
        %v2673 = vsub.s32 0, %v2672
        %v2674 = vrot.slane %v2223, %v2673
        %v2675 = vlaneseq
        %v2676 = vshrl.u32 %v2675, 7
        %v2677 = vsub.s32 0, %v2676
        %v2678 = vrot.slane %v2224, %v2677
        %v2679 = vlaneseq
        %v2680 = vshrl.u32 %v2679, 7
        %v2681 = vsub.s32 0, %v2680
        %v2682 = vrot.slane %v2225, %v2681
        %v2683 = vlaneseq
        %v2684 = vshrl.u32 %v2683, 7
        %v2685 = vsub.s32 0, %v2684
        %v2686 = vrot.slane %v2226, %v2685
        %v2687 = vlaneseq
        %v2688 = vshrl.u32 %v2687, 7
        %v2689 = vsub.s32 0, %v2688
        %v2690 = vrot.slane %v2227, %v2689
        %v2691 = vlaneseq
        %v2692 = vshrl.u32 %v2691, 7
        %v2693 = vsub.s32 0, %v2692
        %v2694 = vrot.slane %v2228, %v2693
        %v2695 = vlaneseq
        %v2696 = vshrl.u32 %v2695, 7
        %v2697 = vsub.s32 0, %v2696
        %v2698 = vrot.slane %v2229, %v2697
        %v2699 = vlaneseq
        %v2700 = vshrl.u32 %v2699, 7
        %v2701 = vsub.s32 0, %v2700
        %v2702 = vrot.slane %v2230, %v2701
        %v2703 = vlaneseq
        %v2704 = vshrl.u32 %v2703, 7
        %v2705 = vsub.s32 0, %v2704
        %v2706 = vrot.slane %v2231, %v2705
        %v2707 = vlaneseq
        %v2708 = vshrl.u32 %v2707, 7
        %v2709 = vsub.s32 0, %v2708
        %v2710 = vrot.slane %v2232, %v2709
        %v2711 = vlaneseq
        %v2712 = vshrl.u32 %v2711, 7
        %v2713 = vsub.s32 0, %v2712
        %v2714 = vrot.slane %v2233, %v2713
        %v2715 = vlaneseq
        %v2716 = vshrl.u32 %v2715, 7
        %v2717 = vsub.s32 0, %v2716
        %v2718 = vrot.slane %v2234, %v2717
        %v2719 = vlaneseq
        %v2720 = vshrl.u32 %v2719, 7
        %v2721 = vsub.s32 0, %v2720
        %v2722 = vrot.slane %v2235, %v2721
        %v2723 = vlaneseq
        %v2724 = vshrl.u32 %v2723, 7
        %v2725 = vsub.s32 0, %v2724
        %v2726 = vrot.slane %v2236, %v2725
        %v2727 = vlaneseq
        %v2728 = vshrl.u32 %v2727, 7
        %v2729 = vsub.s32 0, %v2728
        %v2730 = vrot.slane %v2237, %v2729
        %v2731 = vlaneseq
        %v2732 = vshrl.u32 %v2731, 7
        %v2733 = vsub.s32 0, %v2732
        %v2734 = vrot.slane %v2238, %v2733
        %v2735 = vlaneseq
        %v2736 = vshrl.u32 %v2735, 7
        %v2737 = vsub.s32 0, %v2736
        %v2738 = vrot.slane %v2239, %v2737
        %v2739 = vlaneseq
        %v2740 = vshrl.u32 %v2739, 7
        %v2741 = vsub.s32 0, %v2740
        %v2742 = vrot.slane %v2240, %v2741
        %v2743 = vlaneseq
        %v2744 = vshrl.u32 %v2743, 7
        %v2745 = vsub.s32 0, %v2744
        %v2746 = vrot.slane %v2241, %v2745
        %v2747 = vlaneseq
        %v2748 = vshrl.u32 %v2747, 7
        %v2749 = vsub.s32 0, %v2748
        %v2750 = vrot.slane %v2242, %v2749
        %v2751 = vlaneseq
        %v2752 = vshrl.u32 %v2751, 7
        %v2753 = vsub.s32 0, %v2752
        %v2754 = vrot.slane %v2243, %v2753
        %v2755 = vlaneseq
        %v2756 = vshrl.u32 %v2755, 7
        %v2757 = vsub.s32 0, %v2756
        %v2758 = vrot.slane %v2244, %v2757
        %v2759 = vlaneseq
        %v2760 = vshrl.u32 %v2759, 7
        %v2761 = vsub.s32 0, %v2760
        %v2762 = vrot.slane %v2245, %v2761
        %v2763 = vlaneseq
        %v2764 = vshrl.u32 %v2763, 7
        %v2765 = vsub.s32 0, %v2764
        %v2766 = vrot.slane %v2246, %v2765
        %v2767 = vlaneseq
        %v2768 = vshrl.u32 %v2767, 7
        %v2769 = vsub.s32 0, %v2768
        %v2770 = vrot.slane %v2247, %v2769
        %v2771 = vlaneseq
        %v2772 = vshrl.u32 %v2771, 7
        %v2773 = vsub.s32 0, %v2772
        %v2774 = vrot.slane %v2248, %v2773
        %v2775 = vlaneseq
        %v2776 = vshrl.u32 %v2775, 7
        %v2777 = vsub.s32 0, %v2776
        %v2778 = vrot.slane %v2249, %v2777
        %v2779 = vlaneseq
        %v2780 = vshrl.u32 %v2779, 7
        %v2781 = vsub.s32 0, %v2780
        %v2782 = vrot.slane %v2250, %v2781
        %v2783 = vlaneseq
        %v2784 = vshrl.u32 %v2783, 7
        %v2785 = vsub.s32 0, %v2784
        %v2786 = vrot.slane %v2251, %v2785
        %v2787 = vlaneseq
        %v2788 = vshrl.u32 %v2787, 7
        %v2789 = vsub.s32 0, %v2788
        %v2790 = vrot.slane %v2252, %v2789
        %v2791 = vlaneseq
        %v2792 = vshrl.u32 %v2791, 7
        %v2793 = vsub.s32 0, %v2792
        %v2794 = vrot.slane %v2253, %v2793
        %v2795 = vlaneseq
        %v2796 = vshrl.u32 %v2795, 7
        %v2797 = vsub.s32 0, %v2796
        %v2798 = vrot.slane %v2254, %v2797
        %v2799 = vlaneseq
        %v2800 = vshrl.u32 %v2799, 7
        %v2801 = vsub.s32 0, %v2800
        %v2802 = vrot.slane %v2255, %v2801
        %v2803 = vlaneseq
        %v2804 = vshrl.u32 %v2803, 7
        %v2805 = vsub.s32 0, %v2804
        %v2806 = vrot.slane %v2256, %v2805
        %v2807 = vlaneseq
        %v2808 = vshrl.u32 %v2807, 7
        %v2809 = vsub.s32 0, %v2808
        %v2810 = vrot.slane %v2257, %v2809
        %v2811 = vlaneseq
        %v2812 = vshrl.u32 %v2811, 7
        %v2813 = vsub.s32 0, %v2812
        %v2814 = vrot.slane %v2258, %v2813
        %v2815 = vlaneseq
        %v2816 = vshrl.u32 %v2815, 7
        %v2817 = vsub.s32 0, %v2816
        %v2818 = vrot.slane %v2259, %v2817
        %v2819 = vlaneseq
        %v2820 = vshrl.u32 %v2819, 7
        %v2821 = vsub.s32 0, %v2820
        %v2822 = vrot.slane %v2260, %v2821
        %v2823 = vlaneseq
        %v2824 = vshrl.u32 %v2823, 7
        %v2825 = vsub.s32 0, %v2824
        %v2826 = vrot.slane %v2261, %v2825
        %v2827 = vlaneseq
        %v2828 = vshrl.u32 %v2827, 7
        %v2829 = vsub.s32 0, %v2828
        %v2830 = vrot.slane %v2262, %v2829
        %v2831 = vlaneseq
        %v2832 = vshrl.u32 %v2831, 7
        %v2833 = vsub.s32 0, %v2832
        %v2834 = vrot.slane %v2263, %v2833
        %v2835 = vlaneseq
        %v2836 = vshrl.u32 %v2835, 7
        %v2837 = vsub.s32 0, %v2836
        %v2838 = vrot.slane %v2264, %v2837
        %v2839 = vlaneseq
        %v2840 = vshrl.u32 %v2839, 7
        %v2841 = vsub.s32 0, %v2840
        %v2842 = vrot.slane %v2265, %v2841
        %v2843 = vlaneseq
        %v2844 = vshrl.u32 %v2843, 7
        %v2845 = vsub.s32 0, %v2844
        %v2846 = vrot.slane %v2266, %v2845
        %v2847 = vlaneseq
        %v2848 = vshrl.u32 %v2847, 7
        %v2849 = vsub.s32 0, %v2848
        %v2850 = vrot.slane %v2267, %v2849
        %v2851 = vlaneseq
        %v2852 = vshrl.u32 %v2851, 7
        %v2853 = vsub.s32 0, %v2852
        %v2854 = vrot.slane %v2268, %v2853
        %v2855 = vlaneseq
        %v2856 = vshrl.u32 %v2855, 7
        %v2857 = vsub.s32 0, %v2856
        %v2858 = vrot.slane %v2269, %v2857
        %v2859 = vlaneseq
        %v2860 = vshrl.u32 %v2859, 7
        %v2861 = vsub.s32 0, %v2860
        %v2862 = vrot.slane %v2270, %v2861
        %v2863 = vlaneseq
        %v2864 = vshrl.u32 %v2863, 7
        %v2865 = vsub.s32 0, %v2864
        %v2866 = vrot.slane %v2271, %v2865
        %v2867 = vlaneseq
        %v2868 = vshrl.u32 %v2867, 7
        %v2869 = vsub.s32 0, %v2868
        %v2870 = vrot.slane %v2272, %v2869
        %v2871 = vlaneseq
        %v2872 = vshrl.u32 %v2871, 7
        %v2873 = vsub.s32 0, %v2872
        %v2874 = vrot.slane %v2273, %v2873
        %v2875 = vlaneseq
        %v2876 = vshrl.u32 %v2875, 7
        %v2877 = vsub.s32 0, %v2876
        %v2878 = vrot.slane %v2274, %v2877
        %v2879 = vlaneseq
        %v2880 = vshrl.u32 %v2879, 7
        %v2881 = vsub.s32 0, %v2880
        %v2882 = vrot.slane %v2275, %v2881
        %v2883 = vlaneseq
        %v2884 = vshrl.u32 %v2883, 7
        %v2885 = vsub.s32 0, %v2884
        %v2886 = vrot.slane %v2276, %v2885
        %v2887 = vlaneseq
        %v2888 = vshrl.u32 %v2887, 7
        %v2889 = vsub.s32 0, %v2888
        %v2890 = vrot.slane %v2277, %v2889
        %v2891 = vlaneseq
        %v2892 = vshrl.u32 %v2891, 7
        %v2893 = vsub.s32 0, %v2892
        %v2894 = vrot.slane %v2278, %v2893
        %v2895 = vlaneseq
        %v2896 = vshrl.u32 %v2895, 7
        %v2897 = vsub.s32 0, %v2896
        %v2898 = vrot.slane %v2279, %v2897
        %v2899 = vlaneseq
        %v2900 = vshrl.u32 %v2899, 7
        %v2901 = vsub.s32 0, %v2900
        %v2902 = vrot.slane %v2280, %v2901
        %v2903 = vlaneseq
        %v2904 = vshrl.u32 %v2903, 7
        %v2905 = vsub.s32 0, %v2904
        %v2906 = vrot.slane %v2281, %v2905
        %v2907 = vlaneseq
        %v2908 = vshrl.u32 %v2907, 7
        %v2909 = vsub.s32 0, %v2908
        %v2910 = vrot.slane %v2282, %v2909
        %v2911 = vlaneseq
        %v2912 = vshrl.u32 %v2911, 7
        %v2913 = vsub.s32 0, %v2912
        %v2914 = vrot.slane %v2283, %v2913
        %v2915 = vlaneseq
        %v2916 = vshrl.u32 %v2915, 7
        %v2917 = vsub.s32 0, %v2916
        %v2918 = vrot.slane %v2284, %v2917
        %v2919 = vlaneseq
        %v2920 = vshrl.u32 %v2919, 7
        %v2921 = vsub.s32 0, %v2920
        %v2922 = vrot.slane %v2285, %v2921
        %v2923 = vlaneseq
        %v2924 = vshrl.u32 %v2923, 7
        %v2925 = vsub.s32 0, %v2924
        %v2926 = vrot.slane %v2286, %v2925
        %v2927 = vlaneseq
        %v2928 = vshrl.u32 %v2927, 7
        %v2929 = vsub.s32 0, %v2928
        %v2930 = vrot.slane %v2287, %v2929
        %v2931 = vlaneseq
        %v2932 = vshrl.u32 %v2931, 7
        %v2933 = vsub.s32 0, %v2932
        %v2934 = vrot.slane %v2288, %v2933
        %v2935 = vlaneseq
        %v2936 = vshrl.u32 %v2935, 7
        %v2937 = vsub.s32 0, %v2936
        %v2938 = vrot.slane %v2289, %v2937
        %v2939 = vlaneseq
        %v2940 = vshrl.u32 %v2939, 7
        %v2941 = vsub.s32 0, %v2940
        %v2942 = vrot.slane %v2290, %v2941
        %v2943 = vlaneseq
        %v2944 = vshrl.u32 %v2943, 7
        %v2945 = vsub.s32 0, %v2944
        %v2946 = vrot.slane %v2291, %v2945
        %v2947 = vlaneseq
        %v2948 = vshrl.u32 %v2947, 7
        %v2949 = vsub.s32 0, %v2948
        %v2950 = vrot.slane %v2292, %v2949
        %v2951 = vlaneseq
        %v2952 = vshrl.u32 %v2951, 7
        %v2953 = vsub.s32 0, %v2952
        %v2954 = vrot.slane %v2293, %v2953
        %v2955 = vlaneseq
        %v2956 = vshrl.u32 %v2955, 7
        %v2957 = vsub.s32 0, %v2956
        %v2958 = vrot.slane %v2294, %v2957
        %v2959 = vlaneseq
        %v2960 = vshrl.u32 %v2959, 7
        %v2961 = vsub.s32 0, %v2960
        %v2962 = vrot.slane %v2295, %v2961
        %v2963 = vlaneseq
        %v2964 = vshrl.u32 %v2963, 7
        %v2965 = vsub.s32 0, %v2964
        %v2966 = vrot.slane %v2296, %v2965
        %v2967 = vlaneseq
        %v2968 = vshrl.u32 %v2967, 7
        %v2969 = vsub.s32 0, %v2968
        %v2970 = vrot.slane %v2297, %v2969
        %v2971 = vlaneseq
        %v2972 = vshrl.u32 %v2971, 7
        %v2973 = vsub.s32 0, %v2972
        %v2974 = vrot.slane %v2298, %v2973
        %v2975 = vlaneseq
        %v2976 = vshrl.u32 %v2975, 7
        %v2977 = vsub.s32 0, %v2976
        %v2978 = vrot.slane %v2299, %v2977
        %v2979 = vlaneseq
        %v2980 = vshrl.u32 %v2979, 7
        %v2981 = vsub.s32 0, %v2980
        %v2982 = vrot.slane %v2300, %v2981
        %v2983 = vlaneseq
        %v2984 = vshrl.u32 %v2983, 7
        %v2985 = vsub.s32 0, %v2984
        %v2986 = vrot.slane %v2301, %v2985
        %v2987 = vlaneseq
        %v2988 = vshrl.u32 %v2987, 7
        %v2989 = vsub.s32 0, %v2988
        %v2990 = vrot.slane %v2302, %v2989
        %v2991 = vlaneseq
        %v2992 = vshrl.u32 %v2991, 7
        %v2993 = vsub.s32 0, %v2992
        %v2994 = vrot.slane %v2303, %v2993
        %v2995 = vlaneseq
        %v2996 = vshrl.u32 %v2995, 7
        %v2997 = vsub.s32 0, %v2996
        %v2998 = vrot.slane %v2304, %v2997
        %v2999 = vlaneseq
        %v3000 = vshrl.u32 %v2999, 7
        %v3001 = vsub.s32 0, %v3000
        %v3002 = vrot.slane %v2305, %v3001
        %v3003 = vlaneseq
        %v3004 = vshrl.u32 %v3003, 7
        %v3005 = vsub.s32 0, %v3004
        %v3006 = vrot.slane %v2306, %v3005
        %v3007 = vlaneseq
        %v3008 = vshrl.u32 %v3007, 7
        %v3009 = vsub.s32 0, %v3008
        %v3010 = vrot.slane %v2307, %v3009
        %v3011 = vlaneseq
        %v3012 = vshrl.u32 %v3011, 7
        %v3013 = vsub.s32 0, %v3012
        %v3014 = vrot.slane %v2308, %v3013
        %v3015 = vlaneseq
        %v3016 = vshrl.u32 %v3015, 7
        %v3017 = vsub.s32 0, %v3016
        %v3018 = vrot.slane %v2309, %v3017
        %v3019 = vlaneseq
        %v3020 = vshrl.u32 %v3019, 7
        %v3021 = vsub.s32 0, %v3020
        %v3022 = vrot.slane %v2310, %v3021
        %v3023 = vlaneseq
        %v3024 = vshrl.u32 %v3023, 7
        %v3025 = vsub.s32 0, %v3024
        %v3026 = vrot.slane %v2311, %v3025
        %v3027 = vlaneseq
        %v3028 = vshrl.u32 %v3027, 7
        %v3029 = vsub.s32 0, %v3028
        %v3030 = vrot.slane %v2312, %v3029
        %v3031 = vlaneseq
        %v3032 = vshrl.u32 %v3031, 7
        %v3033 = vsub.s32 0, %v3032
        %v3034 = vrot.slane %v2313, %v3033
        %v3035 = vlaneseq
        %v3036 = vshrl.u32 %v3035, 7
        %v3037 = vsub.s32 0, %v3036
        %v3038 = vrot.slane %v2314, %v3037
        %v3039 = vlaneseq
        %v3040 = vshrl.u32 %v3039, 7
        %v3041 = vsub.s32 0, %v3040
        %v3042 = vrot.slane %v2315, %v3041
        %v3043 = vlaneseq
        %v3044 = vshrl.u32 %v3043, 7
        %v3045 = vsub.s32 0, %v3044
        %v3046 = vrot.slane %v2316, %v3045
        %v3047 = vlaneseq
        %v3048 = vshrl.u32 %v3047, 7
        %v3049 = vsub.s32 0, %v3048
        %v3050 = vrot.slane %v2317, %v3049
        %v3051 = vlaneseq
        %v3052 = vshrl.u32 %v3051, 7
        %v3053 = vsub.s32 0, %v3052
        %v3054 = vrot.slane %v2318, %v3053
        %v3055 = vlaneseq
        %v3056 = vshrl.u32 %v3055, 7
        %v3057 = vsub.s32 0, %v3056
        %v3058 = vrot.slane %v2319, %v3057
        %v3059 = vlaneseq
        %v3060 = vshrl.u32 %v3059, 7
        %v3061 = vsub.s32 0, %v3060
        %v3062 = vrot.slane %v2320, %v3061
        %v3063 = vlaneseq
        %v3064 = vshrl.u32 %v3063, 7
        %v3065 = vsub.s32 0, %v3064
        %v3066 = vrot.slane %v2321, %v3065
        %v3067 = vlaneseq
        %v3068 = vshrl.u32 %v3067, 7
        %v3069 = vsub.s32 0, %v3068
        %v3070 = vrot.slane %v2322, %v3069
        %v3071 = vlaneseq
        %v3072 = vshrl.u32 %v3071, 7
        %v3073 = vsub.s32 0, %v3072
        %v3074 = vrot.slane %v2323, %v3073
        %v3075 = vlaneseq
        %v3076 = vshrl.u32 %v3075, 7
        %v3077 = vsub.s32 0, %v3076
        %v3078 = vrot.slane %v2324, %v3077
        %v3079 = vlaneseq
        %v3080 = vshrl.u32 %v3079, 7
        %v3081 = vsub.s32 0, %v3080
        %v3082 = vrot.slane %v2325, %v3081
        %v3083 = vlaneseq
        %v3084 = vshrl.u32 %v3083, 7
        %v3085 = vsub.s32 0, %v3084
        %v3086 = vrot.slane %v2326, %v3085
        %v3087 = vlaneseq
        %v3088 = vshrl.u32 %v3087, 7
        %v3089 = vsub.s32 0, %v3088
        %v3090 = vrot.slane %v2327, %v3089
        %v3091 = vlaneseq
        %v3092 = vshrl.u32 %v3091, 7
        %v3093 = vsub.s32 0, %v3092
        %v3094 = vrot.slane %v2328, %v3093
        %v3095 = vlaneseq
        %v3096 = vshrl.u32 %v3095, 7
        %v3097 = vsub.s32 0, %v3096
        %v3098 = vrot.slane %v2329, %v3097
        %v3099 = vlaneseq
        %v3100 = vshrl.u32 %v3099, 7
        %v3101 = vsub.s32 0, %v3100
        %v3102 = vrot.slane %v2330, %v3101
        %v3103 = vlaneseq
        %v3104 = vshrl.u32 %v3103, 7
        %v3105 = vsub.s32 0, %v3104
        %v3106 = vrot.slane %v2331, %v3105
        %v3107 = vlaneseq
        %v3108 = vshrl.u32 %v3107, 7
        %v3109 = vsub.s32 0, %v3108
        %v3110 = vrot.slane %v2332, %v3109
        %v3111 = vlaneseq
        %v3112 = vshrl.u32 %v3111, 7
        %v3113 = vsub.s32 0, %v3112
        %v3114 = vrot.slane %v2333, %v3113
        %v3115 = vlaneseq
        %v3116 = vshrl.u32 %v3115, 7
        %v3117 = vsub.s32 0, %v3116
        %v3118 = vrot.slane %v2334, %v3117
        %v3119 = vlaneseq
        %v3120 = vshrl.u32 %v3119, 7
        %v3121 = vsub.s32 0, %v3120
        %v3122 = vrot.slane %v2335, %v3121
        %v3123 = vlaneseq
        %v3124 = vshrl.u32 %v3123, 7
        %v3125 = vsub.s32 0, %v3124
        %v3126 = vrot.slane %v2336, %v3125
        %v3127 = vlaneseq
        %v3128 = vshrl.u32 %v3127, 7
        %v3129 = vsub.s32 0, %v3128
        %v3130 = vrot.slane %v2337, %v3129
        %v3131 = vlaneseq
        %v3132 = vshrl.u32 %v3131, 7
        %v3133 = vsub.s32 0, %v3132
        %v3134 = vrot.slane %v2338, %v3133
        %v3135 = vlaneseq
        %v3136 = vshrl.u32 %v3135, 7
        %v3137 = vsub.s32 0, %v3136
        %v3138 = vrot.slane %v2339, %v3137
        %v3139 = vlaneseq
        %v3140 = vshrl.u32 %v3139, 7
        %v3141 = vsub.s32 0, %v3140
        %v3142 = vrot.slane %v2340, %v3141
        %v3143 = vlaneseq
        %v3144 = vshrl.u32 %v3143, 7
        %v3145 = vsub.s32 0, %v3144
        %v3146 = vrot.slane %v2341, %v3145
        %v3147 = vlaneseq
        %v3148 = vshrl.u32 %v3147, 7
        %v3149 = vsub.s32 0, %v3148
        %v3150 = vrot.slane %v2342, %v3149
        %v3151 = vlaneseq
        %v3152 = vshrl.u32 %v3151, 7
        %v3153 = vsub.s32 0, %v3152
        %v3154 = vrot.slane %v2343, %v3153
        %v3155 = vlaneseq
        %v3156 = vshrl.u32 %v3155, 7
        %v3157 = vsub.s32 0, %v3156
        %v3158 = vrot.slane %v2344, %v3157
        %v3159 = vlaneseq
        %v3160 = vshrl.u32 %v3159, 7
        %v3161 = vsub.s32 0, %v3160
        %v3162 = vrot.slane %v2345, %v3161
        %v3163 = vlaneseq
        %v3164 = vshrl.u32 %v3163, 7
        %v3165 = vsub.s32 0, %v3164
        %v3166 = vrot.slane %v2346, %v3165
        %v3167 = vlaneseq
        %v3168 = vshrl.u32 %v3167, 7
        %v3169 = vsub.s32 0, %v3168
        %v3170 = vrot.slane %v2347, %v3169
        %v3171 = vlaneseq
        %v3172 = vshrl.u32 %v3171, 7
        %v3173 = vsub.s32 0, %v3172
        %v3174 = vrot.slane %v2348, %v3173
        %v3175 = vlaneseq
        %v3176 = vshrl.u32 %v3175, 7
        %v3177 = vsub.s32 0, %v3176
        %v3178 = vrot.slane %v2349, %v3177
        %v3179 = vlaneseq
        %v3180 = vshrl.u32 %v3179, 7
        %v3181 = vsub.s32 0, %v3180
        %v3182 = vrot.slane %v2350, %v3181
        %v3183 = vlaneseq
        %v3184 = vshrl.u32 %v3183, 7
        %v3185 = vsub.s32 0, %v3184
        %v3186 = vrot.slane %v2351, %v3185
        %v3187 = vlaneseq
        %v3188 = vshrl.u32 %v3187, 7
        %v3189 = vsub.s32 0, %v3188
        %v3190 = vrot.slane %v2352, %v3189
        %v3191 = vlaneseq
        %v3192 = vshrl.u32 %v3191, 7
        %v3193 = vsub.s32 0, %v3192
        %v3194 = vrot.slane %v2353, %v3193
        %v3195 = vlaneseq
        %v3196 = vshrl.u32 %v3195, 7
        %v3197 = vsub.s32 0, %v3196
        %v3198 = vrot.slane %v2354, %v3197
        %v3199 = vlaneseq
        %v3200 = vshrl.u32 %v3199, 7
        %v3201 = vsub.s32 0, %v3200
        %v3202 = vrot.slane %v2355, %v3201
        %v3203 = vlaneseq
        %v3204 = vshrl.u32 %v3203, 7
        %v3205 = vsub.s32 0, %v3204
        %v3206 = vrot.slane %v2356, %v3205
        %v3207 = vlaneseq
        %v3208 = vshrl.u32 %v3207, 7
        %v3209 = vsub.s32 0, %v3208
        %v3210 = vrot.slane %v2357, %v3209
        %v3211 = vlaneseq
        %v3212 = vshrl.u32 %v3211, 7
        %v3213 = vsub.s32 0, %v3212
        %v3214 = vrot.slane %v2358, %v3213
        %v3215 = vlaneseq
        %v3216 = vshrl.u32 %v3215, 7
        %v3217 = vsub.s32 0, %v3216
        %v3218 = vrot.slane %v2359, %v3217
        %v3219 = vlaneseq
        %v3220 = vshrl.u32 %v3219, 7
        %v3221 = vsub.s32 0, %v3220
        %v3222 = vrot.slane %v2360, %v3221
        %v3223 = vlaneseq
        %v3224 = vshrl.u32 %v3223, 7
        %v3225 = vsub.s32 0, %v3224
        %v3226 = vrot.slane %v2361, %v3225
        %v3227 = vlaneseq
        %v3228 = vshrl.u32 %v3227, 7
        %v3229 = vsub.s32 0, %v3228
        %v3230 = vrot.slane %v2362, %v3229
        %v3231 = vlaneseq
        %v3232 = vshrl.u32 %v3231, 7
        %v3233 = vsub.s32 0, %v3232
        %v3234 = vrot.slane %v2363, %v3233
        %v3235 = vlaneseq
        %v3236 = vshrl.u32 %v3235, 7
        %v3237 = vsub.s32 0, %v3236
        %v3238 = vrot.slane %v2364, %v3237
        %v3239 = vlaneseq
        %v3240 = vshrl.u32 %v3239, 7
        %v3241 = vsub.s32 0, %v3240
        %v3242 = vrot.slane %v2365, %v3241
        %v3243 = vlaneseq
        %v3244 = vshrl.u32 %v3243, 7
        %v3245 = vsub.s32 0, %v3244
        %v3246 = vrot.slane %v2366, %v3245
        %v3247 = vlaneseq
        %v3248 = vshrl.u32 %v3247, 7
        %v3249 = vsub.s32 0, %v3248
        %v3250 = vrot.slane %v2367, %v3249
        %v3251 = vlaneseq
        %v3252 = vshrl.u32 %v3251, 7
        %v3253 = vsub.s32 0, %v3252
        %v3254 = vrot.slane %v2368, %v3253
        %v3255 = vlaneseq
        %v3256 = vshrl.u32 %v3255, 7
        %v3257 = vsub.s32 0, %v3256
        %v3258 = vrot.slane %v2369, %v3257
        %v3259 = vlaneseq
        %v3260 = vshrl.u32 %v3259, 7
        %v3261 = vsub.s32 0, %v3260
        %v3262 = vrot.slane %v2370, %v3261
        %v3263 = vlaneseq
        %v3264 = vshrl.u32 %v3263, 7
        %v3265 = vsub.s32 0, %v3264
        %v3266 = vrot.slane %v2371, %v3265
        %v3267 = vlaneseq
        %v3268 = vshrl.u32 %v3267, 7
        %v3269 = vsub.s32 0, %v3268
        %v3270 = vrot.slane %v2372, %v3269
        %v3271 = vlaneseq
        %v3272 = vshrl.u32 %v3271, 7
        %v3273 = vsub.s32 0, %v3272
        %v3274 = vrot.slane %v2373, %v3273
        %v3275 = vlaneseq
        %v3276 = vshrl.u32 %v3275, 7
        %v3277 = vsub.s32 0, %v3276
        %v3278 = vrot.slane %v2374, %v3277
        %v3279 = vlaneseq
        %v3280 = vshrl.u32 %v3279, 7
        %v3281 = vsub.s32 0, %v3280
        %v3282 = vrot.slane %v2375, %v3281
        %v3283 = vlaneseq
        %v3284 = vshrl.u32 %v3283, 7
        %v3285 = vsub.s32 0, %v3284
        %v3286 = vrot.slane %v2376, %v3285
        %v3287 = vlaneseq
        %v3288 = vshrl.u32 %v3287, 7
        %v3289 = vsub.s32 0, %v3288
        %v3290 = vrot.slane %v2377, %v3289
        %v3291 = vlaneseq
        %v3292 = vshrl.u32 %v3291, 7
        %v3293 = vsub.s32 0, %v3292
        %v3294 = vrot.slane %v2378, %v3293
        %v3295 = vlaneseq
        %v3296 = vshrl.u32 %v3295, 7
        %v3297 = vsub.s32 0, %v3296
        %v3298 = vrot.slane %v2379, %v3297
        %v3299 = vlaneseq
        %v3300 = vshrl.u32 %v3299, 7
        %v3301 = vsub.s32 0, %v3300
        %v3302 = vrot.slane %v2380, %v3301
        %v3303 = vlaneseq
        %v3304 = vshrl.u32 %v3303, 7
        %v3305 = vsub.s32 0, %v3304
        %v3306 = vrot.slane %v2381, %v3305
        %v3307 = vlaneseq
        %v3308 = vshrl.u32 %v3307, 7
        %v3309 = vsub.s32 0, %v3308
        %v3310 = vrot.slane %v2382, %v3309
        %v3311 = vlaneseq
        %v3312 = vshrl.u32 %v3311, 7
        %v3313 = vsub.s32 0, %v3312
        %v3314 = vrot.slane %v2383, %v3313
        %v3315 = vlaneseq
        %v3316 = vshrl.u32 %v3315, 7
        %v3317 = vsub.s32 0, %v3316
        %v3318 = vrot.slane %v2384, %v3317
        %v3319 = vlaneseq
        %v3320 = vshrl.u32 %v3319, 7
        %v3321 = vsub.s32 0, %v3320
        %v3322 = vrot.slane %v2385, %v3321
        %v3323 = vlaneseq
        %v3324 = vshrl.u32 %v3323, 7
        %v3325 = vsub.s32 0, %v3324
        %v3326 = vrot.slane %v2386, %v3325
        %v3327 = vlaneseq
        %v3328 = vshrl.u32 %v3327, 7
        %v3329 = vsub.s32 0, %v3328
        %v3330 = vrot.slane %v2387, %v3329
        %v3331 = vlaneseq
        %v3332 = vshrl.u32 %v3331, 7
        %v3333 = vsub.s32 0, %v3332
        %v3334 = vrot.slane %v2388, %v3333
        %v3335 = vlaneseq
        %v3336 = vshrl.u32 %v3335, 7
        %v3337 = vsub.s32 0, %v3336
        %v3338 = vrot.slane %v2389, %v3337
        %v3339 = vlaneseq
        %v3340 = vshrl.u32 %v3339, 7
        %v3341 = vsub.s32 0, %v3340
        %v3342 = vrot.slane %v2390, %v3341
        %v3343 = vlaneseq
        %v3344 = vshrl.u32 %v3343, 7
        %v3345 = vsub.s32 0, %v3344
        %v3346 = vrot.slane %v2391, %v3345
        %v3347 = vlaneseq
        %v3348 = vshrl.u32 %v3347, 7
        %v3349 = vsub.s32 0, %v3348
        %v3350 = vrot.slane %v2392, %v3349
        %v3351 = vlaneseq
        %v3352 = vshrl.u32 %v3351, 7
        %v3353 = vsub.s32 0, %v3352
        %v3354 = vrot.slane %v2393, %v3353
        %v3355 = vlaneseq
        %v3356 = vshrl.u32 %v3355, 7
        %v3357 = vsub.s32 0, %v3356
        %v3358 = vrot.slane %v2394, %v3357
        %v3359 = vlaneseq
        %v3360 = vshrl.u32 %v3359, 7
        %v3361 = vsub.s32 0, %v3360
        %v3362 = vrot.slane %v2395, %v3361
        %v3363 = vlaneseq
        %v3364 = vshrl.u32 %v3363, 7
        %v3365 = vsub.s32 0, %v3364
        %v3366 = vrot.slane %v2396, %v3365
        %v3367 = vlaneseq
        %v3368 = vshrl.u32 %v3367, 7
        %v3369 = vsub.s32 0, %v3368
        %v3370 = vrot.slane %v2397, %v3369
        %v3371 = vlaneseq
        %v3372 = vshrl.u32 %v3371, 7
        %v3373 = vsub.s32 0, %v3372
        %v3374 = vrot.slane %v2398, %v3373
        %v3375 = vlaneseq
        %v3376 = vshrl.u32 %v3375, 7
        %v3377 = vsub.s32 0, %v3376
        %v3378 = vrot.slane %v2399, %v3377
        %v3379 = vlaneseq
        %v3380 = vshrl.u32 %v3379, 7
        %v3381 = vsub.s32 0, %v3380
        %v3382 = vrot.slane %v2400, %v3381
        %v3383 = vlaneseq
        %v3384 = vshrl.u32 %v3383, 7
        %v3385 = vsub.s32 0, %v3384
        %v3386 = vrot.slane %v2401, %v3385
        %v3387 = vlaneseq
        %v3388 = vshrl.u32 %v3387, 7
        %v3389 = vsub.s32 0, %v3388
        %v3390 = vrot.slane %v2402, %v3389
        %v3391 = vlaneseq
        %v3392 = vshrl.u32 %v3391, 7
        %v3393 = vsub.s32 0, %v3392
        %v3394 = vrot.slane %v2403, %v3393
        %v3395 = vlaneseq
        %v3396 = vshrl.u32 %v3395, 7
        %v3397 = vsub.s32 0, %v3396
        %v3398 = vrot.slane %v2404, %v3397
        %v3399 = vlaneseq
        %v3400 = vshrl.u32 %v3399, 7
        %v3401 = vsub.s32 0, %v3400
        %v3402 = vrot.slane %v2405, %v3401
        %v3403 = vlaneseq
        %v3404 = vshrl.u32 %v3403, 7
        %v3405 = vsub.s32 0, %v3404
        %v3406 = vrot.slane %v2406, %v3405
        %v3407 = vlaneseq
        %v3408 = vshrl.u32 %v3407, 7
        %v3409 = vsub.s32 0, %v3408
        %v3410 = vrot.slane %v2407, %v3409
        %v3411 = vlaneseq
        %v3412 = vshrl.u32 %v3411, 7
        %v3413 = vsub.s32 0, %v3412
        %v3414 = vrot.slane %v2408, %v3413
        %v3415 = vlaneseq
        %v3416 = vshrl.u32 %v3415, 7
        %v3417 = vsub.s32 0, %v3416
        %v3418 = vrot.slane %v2409, %v3417
        %v3419 = vlaneseq
        %v3420 = vshrl.u32 %v3419, 7
        %v3421 = vsub.s32 0, %v3420
        %v3422 = vrot.slane %v2410, %v3421
        %v3423 = vlaneseq
        %v3424 = vshrl.u32 %v3423, 7
        %v3425 = vsub.s32 0, %v3424
        %v3426 = vrot.slane %v2411, %v3425
        %v3427 = vlaneseq
        %v3428 = vshrl.u32 %v3427, 7
        %v3429 = vsub.s32 0, %v3428
        %v3430 = vrot.slane %v2412, %v3429
        %v3431 = vlaneseq
        %v3432 = vshrl.u32 %v3431, 7
        %v3433 = vsub.s32 0, %v3432
        %v3434 = vrot.slane %v2413, %v3433
        %v3435 = vlaneseq
        %v3436 = vshrl.u32 %v3435, 7
        %v3437 = vsub.s32 0, %v3436
        %v3438 = vrot.slane %v2414, %v3437
        %v3440 = vpack.i.b16 %v2418, %v2418
        %v3442 = vlaneseq
        %v3443 = vshrl.u32 %v3442, 7
        %v3444 = vsub.s32 0, %v3443
        %v3445 = vrot.slane %v3440, %v3444
        %v3447 = vpack.i.b16 %v2422, %v2422
        %v3449 = vlaneseq
        %v3450 = vshrl.u32 %v3449, 7
        %v3451 = vsub.s32 0, %v3450
        %v3452 = vrot.slane %v3447, %v3451
        %v3454 = vpack.i.b16 %v2426, %v2426
        %v3456 = vlaneseq
        %v3457 = vshrl.u32 %v3456, 7
        %v3458 = vsub.s32 0, %v3457
        %v3459 = vrot.slane %v3454, %v3458
        %v3461 = vpack.i.b16 %v2430, %v2430
        %v3463 = vlaneseq
        %v3464 = vshrl.u32 %v3463, 7
        %v3465 = vsub.s32 0, %v3464
        %v3466 = vrot.slane %v3461, %v3465
        %v3468 = vpack.i.b16 %v2434, %v2434
        %v3470 = vlaneseq
        %v3471 = vshrl.u32 %v3470, 7
        %v3472 = vsub.s32 0, %v3471
        %v3473 = vrot.slane %v3468, %v3472
        %v3475 = vpack.i.b16 %v2438, %v2438
        %v3477 = vlaneseq
        %v3478 = vshrl.u32 %v3477, 7
        %v3479 = vsub.s32 0, %v3478
        %v3480 = vrot.slane %v3475, %v3479
        %v3482 = vpack.i.b16 %v2442, %v2442
        %v3484 = vlaneseq
        %v3485 = vshrl.u32 %v3484, 7
        %v3486 = vsub.s32 0, %v3485
        %v3487 = vrot.slane %v3482, %v3486
        %v3489 = vpack.i.b16 %v2446, %v2446
        %v3491 = vlaneseq
        %v3492 = vshrl.u32 %v3491, 7
        %v3493 = vsub.s32 0, %v3492
        %v3494 = vrot.slane %v3489, %v3493
        %v3496 = vpack.i.b16 %v2450, %v2450
        %v3498 = vlaneseq
        %v3499 = vshrl.u32 %v3498, 7
        %v3500 = vsub.s32 0, %v3499
        %v3501 = vrot.slane %v3496, %v3500
        %v3503 = vpack.i.b16 %v2454, %v2454
        %v3505 = vlaneseq
        %v3506 = vshrl.u32 %v3505, 7
        %v3507 = vsub.s32 0, %v3506
        %v3508 = vrot.slane %v3503, %v3507
        %v3510 = vpack.i.b16 %v2458, %v2458
        %v3512 = vlaneseq
        %v3513 = vshrl.u32 %v3512, 7
        %v3514 = vsub.s32 0, %v3513
        %v3515 = vrot.slane %v3510, %v3514
        %v3517 = vpack.i.b16 %v2462, %v2462
        %v3519 = vlaneseq
        %v3520 = vshrl.u32 %v3519, 7
        %v3521 = vsub.s32 0, %v3520
        %v3522 = vrot.slane %v3517, %v3521
        %v3524 = vpack.i.b16 %v2466, %v2466
        %v3526 = vlaneseq
        %v3527 = vshrl.u32 %v3526, 7
        %v3528 = vsub.s32 0, %v3527
        %v3529 = vrot.slane %v3524, %v3528
        %v3531 = vpack.i.b16 %v2470, %v2470
        %v3533 = vlaneseq
        %v3534 = vshrl.u32 %v3533, 7
        %v3535 = vsub.s32 0, %v3534
        %v3536 = vrot.slane %v3531, %v3535
        %v3538 = vpack.i.b16 %v2474, %v2474
        %v3540 = vlaneseq
        %v3541 = vshrl.u32 %v3540, 7
        %v3542 = vsub.s32 0, %v3541
        %v3543 = vrot.slane %v3538, %v3542
        %v3545 = vpack.i.b16 %v2478, %v2478
        %v3547 = vlaneseq
        %v3548 = vshrl.u32 %v3547, 7
        %v3549 = vsub.s32 0, %v3548
        %v3550 = vrot.slane %v3545, %v3549
        %v3552 = vpack.i.b16 %v2482, %v2482
        %v3554 = vlaneseq
        %v3555 = vshrl.u32 %v3554, 7
        %v3556 = vsub.s32 0, %v3555
        %v3557 = vrot.slane %v3552, %v3556
        %v3559 = vpack.i.b16 %v2486, %v2486
        %v3561 = vlaneseq
        %v3562 = vshrl.u32 %v3561, 7
        %v3563 = vsub.s32 0, %v3562
        %v3564 = vrot.slane %v3559, %v3563
        %v3566 = vpack.i.b16 %v2490, %v2490
        %v3568 = vlaneseq
        %v3569 = vshrl.u32 %v3568, 7
        %v3570 = vsub.s32 0, %v3569
        %v3571 = vrot.slane %v3566, %v3570
        %v3573 = vpack.i.b16 %v2494, %v2494
        %v3575 = vlaneseq
        %v3576 = vshrl.u32 %v3575, 7
        %v3577 = vsub.s32 0, %v3576
        %v3578 = vrot.slane %v3573, %v3577
        %v3580 = vpack.i.b16 %v2498, %v2498
        %v3582 = vlaneseq
        %v3583 = vshrl.u32 %v3582, 7
        %v3584 = vsub.s32 0, %v3583
        %v3585 = vrot.slane %v3580, %v3584
        %v3587 = vpack.i.b16 %v2502, %v2502
        %v3589 = vlaneseq
        %v3590 = vshrl.u32 %v3589, 7
        %v3591 = vsub.s32 0, %v3590
        %v3592 = vrot.slane %v3587, %v3591
        %v3594 = vpack.i.b16 %v2506, %v2506
        %v3596 = vlaneseq
        %v3597 = vshrl.u32 %v3596, 7
        %v3598 = vsub.s32 0, %v3597
        %v3599 = vrot.slane %v3594, %v3598
        %v3601 = vpack.i.b16 %v2510, %v2510
        %v3603 = vlaneseq
        %v3604 = vshrl.u32 %v3603, 7
        %v3605 = vsub.s32 0, %v3604
        %v3606 = vrot.slane %v3601, %v3605
        %v3608 = vpack.i.b16 %v2514, %v2514
        %v3610 = vlaneseq
        %v3611 = vshrl.u32 %v3610, 7
        %v3612 = vsub.s32 0, %v3611
        %v3613 = vrot.slane %v3608, %v3612
        %v3615 = vpack.i.b16 %v2518, %v2518
        %v3617 = vlaneseq
        %v3618 = vshrl.u32 %v3617, 7
        %v3619 = vsub.s32 0, %v3618
        %v3620 = vrot.slane %v3615, %v3619
        %v3622 = vpack.i.b16 %v2522, %v2522
        %v3624 = vlaneseq
        %v3625 = vshrl.u32 %v3624, 7
        %v3626 = vsub.s32 0, %v3625
        %v3627 = vrot.slane %v3622, %v3626
        %v3629 = vpack.i.b16 %v2526, %v2526
        %v3631 = vlaneseq
        %v3632 = vshrl.u32 %v3631, 7
        %v3633 = vsub.s32 0, %v3632
        %v3634 = vrot.slane %v3629, %v3633
        %v3636 = vpack.i.b16 %v2530, %v2530
        %v3638 = vlaneseq
        %v3639 = vshrl.u32 %v3638, 7
        %v3640 = vsub.s32 0, %v3639
        %v3641 = vrot.slane %v3636, %v3640
        %v3643 = vpack.i.b16 %v2534, %v2534
        %v3645 = vlaneseq
        %v3646 = vshrl.u32 %v3645, 7
        %v3647 = vsub.s32 0, %v3646
        %v3648 = vrot.slane %v3643, %v3647
        %v3650 = vpack.i.b16 %v2538, %v2538
        %v3652 = vlaneseq
        %v3653 = vshrl.u32 %v3652, 7
        %v3654 = vsub.s32 0, %v3653
        %v3655 = vrot.slane %v3650, %v3654
        %v3657 = vpack.i.b16 %v2542, %v2542
        %v3659 = vlaneseq
        %v3660 = vshrl.u32 %v3659, 7
        %v3661 = vsub.s32 0, %v3660
        %v3662 = vrot.slane %v3657, %v3661
        %v3664 = vpack.i.b16 %v2546, %v2546
        %v3666 = vlaneseq
        %v3667 = vshrl.u32 %v3666, 7
        %v3668 = vsub.s32 0, %v3667
        %v3669 = vrot.slane %v3664, %v3668
        %v3671 = vpack.i.b16 %v2550, %v2550
        %v3673 = vlaneseq
        %v3674 = vshrl.u32 %v3673, 7
        %v3675 = vsub.s32 0, %v3674
        %v3676 = vrot.slane %v3671, %v3675
        %v3678 = vpack.i.b16 %v2554, %v2554
        %v3680 = vlaneseq
        %v3681 = vshrl.u32 %v3680, 7
        %v3682 = vsub.s32 0, %v3681
        %v3683 = vrot.slane %v3678, %v3682
        %v3685 = vpack.i.b16 %v2558, %v2558
        %v3687 = vlaneseq
        %v3688 = vshrl.u32 %v3687, 7
        %v3689 = vsub.s32 0, %v3688
        %v3690 = vrot.slane %v3685, %v3689
        %v3692 = vpack.i.b16 %v2562, %v2562
        %v3694 = vlaneseq
        %v3695 = vshrl.u32 %v3694, 7
        %v3696 = vsub.s32 0, %v3695
        %v3697 = vrot.slane %v3692, %v3696
        %v3699 = vpack.i.b16 %v2566, %v2566
        %v3701 = vlaneseq
        %v3702 = vshrl.u32 %v3701, 7
        %v3703 = vsub.s32 0, %v3702
        %v3704 = vrot.slane %v3699, %v3703
        %v3706 = vpack.i.b16 %v2570, %v2570
        %v3708 = vlaneseq
        %v3709 = vshrl.u32 %v3708, 7
        %v3710 = vsub.s32 0, %v3709
        %v3711 = vrot.slane %v3706, %v3710
        %v3713 = vpack.i.b16 %v2574, %v2574
        %v3715 = vlaneseq
        %v3716 = vshrl.u32 %v3715, 7
        %v3717 = vsub.s32 0, %v3716
        %v3718 = vrot.slane %v3713, %v3717
        %v3720 = vpack.i.b16 %v2578, %v2578
        %v3722 = vlaneseq
        %v3723 = vshrl.u32 %v3722, 7
        %v3724 = vsub.s32 0, %v3723
        %v3725 = vrot.slane %v3720, %v3724
        %v3727 = vpack.i.b16 %v2582, %v2582
        %v3729 = vlaneseq
        %v3730 = vshrl.u32 %v3729, 7
        %v3731 = vsub.s32 0, %v3730
        %v3732 = vrot.slane %v3727, %v3731
        %v3734 = vpack.i.b16 %v2586, %v2586
        %v3736 = vlaneseq
        %v3737 = vshrl.u32 %v3736, 7
        %v3738 = vsub.s32 0, %v3737
        %v3739 = vrot.slane %v3734, %v3738
        %v3741 = vpack.i.b16 %v2590, %v2590
        %v3743 = vlaneseq
        %v3744 = vshrl.u32 %v3743, 7
        %v3745 = vsub.s32 0, %v3744
        %v3746 = vrot.slane %v3741, %v3745
        %v3748 = vpack.i.b16 %v2594, %v2594
        %v3750 = vlaneseq
        %v3751 = vshrl.u32 %v3750, 7
        %v3752 = vsub.s32 0, %v3751
        %v3753 = vrot.slane %v3748, %v3752
        %v3755 = vpack.i.b16 %v2598, %v2598
        %v3757 = vlaneseq
        %v3758 = vshrl.u32 %v3757, 7
        %v3759 = vsub.s32 0, %v3758
        %v3760 = vrot.slane %v3755, %v3759
        %v3762 = vpack.i.b16 %v2602, %v2602
        %v3764 = vlaneseq
        %v3765 = vshrl.u32 %v3764, 7
        %v3766 = vsub.s32 0, %v3765
        %v3767 = vrot.slane %v3762, %v3766
        %v3769 = vpack.i.b16 %v2606, %v2606
        %v3771 = vlaneseq
        %v3772 = vshrl.u32 %v3771, 7
        %v3773 = vsub.s32 0, %v3772
        %v3774 = vrot.slane %v3769, %v3773
        %v3776 = vpack.i.b16 %v2610, %v2610
        %v3778 = vlaneseq
        %v3779 = vshrl.u32 %v3778, 7
        %v3780 = vsub.s32 0, %v3779
        %v3781 = vrot.slane %v3776, %v3780
        %v3783 = vpack.i.b16 %v2614, %v2614
        %v3785 = vlaneseq
        %v3786 = vshrl.u32 %v3785, 7
        %v3787 = vsub.s32 0, %v3786
        %v3788 = vrot.slane %v3783, %v3787
        %v3790 = vpack.i.b16 %v2618, %v2618
        %v3792 = vlaneseq
        %v3793 = vshrl.u32 %v3792, 7
        %v3794 = vsub.s32 0, %v3793
        %v3795 = vrot.slane %v3790, %v3794
        %v3797 = vpack.i.b16 %v2622, %v2622
        %v3799 = vlaneseq
        %v3800 = vshrl.u32 %v3799, 7
        %v3801 = vsub.s32 0, %v3800
        %v3802 = vrot.slane %v3797, %v3801
        %v3804 = vpack.i.b16 %v2626, %v2626
        %v3806 = vlaneseq
        %v3807 = vshrl.u32 %v3806, 7
        %v3808 = vsub.s32 0, %v3807
        %v3809 = vrot.slane %v3804, %v3808
        %v3811 = vpack.i.b16 %v2630, %v2630
        %v3813 = vlaneseq
        %v3814 = vshrl.u32 %v3813, 7
        %v3815 = vsub.s32 0, %v3814
        %v3816 = vrot.slane %v3811, %v3815
        %v3818 = vpack.i.b16 %v2634, %v2634
        %v3820 = vlaneseq
        %v3821 = vshrl.u32 %v3820, 7
        %v3822 = vsub.s32 0, %v3821
        %v3823 = vrot.slane %v3818, %v3822
        %v3825 = vpack.i.b16 %v2638, %v2638
        %v3827 = vlaneseq
        %v3828 = vshrl.u32 %v3827, 7
        %v3829 = vsub.s32 0, %v3828
        %v3830 = vrot.slane %v3825, %v3829
        %v3832 = vpack.i.b16 %v2642, %v2642
        %v3834 = vlaneseq
        %v3835 = vshrl.u32 %v3834, 7
        %v3836 = vsub.s32 0, %v3835
        %v3837 = vrot.slane %v3832, %v3836
        %v3839 = vpack.i.b16 %v2646, %v2646
        %v3841 = vlaneseq
        %v3842 = vshrl.u32 %v3841, 7
        %v3843 = vsub.s32 0, %v3842
        %v3844 = vrot.slane %v3839, %v3843
        %v3846 = vpack.i.b16 %v2650, %v2650
        %v3848 = vlaneseq
        %v3849 = vshrl.u32 %v3848, 7
        %v3850 = vsub.s32 0, %v3849
        %v3851 = vrot.slane %v3846, %v3850
        %v3853 = vpack.i.b16 %v2654, %v2654
        %v3855 = vlaneseq
        %v3856 = vshrl.u32 %v3855, 7
        %v3857 = vsub.s32 0, %v3856
        %v3858 = vrot.slane %v3853, %v3857
        %v3860 = vpack.i.b16 %v2658, %v2658
        %v3862 = vlaneseq
        %v3863 = vshrl.u32 %v3862, 7
        %v3864 = vsub.s32 0, %v3863
        %v3865 = vrot.slane %v3860, %v3864
        %v3867 = vpack.i.b16 %v2662, %v2662
        %v3869 = vlaneseq
        %v3870 = vshrl.u32 %v3869, 7
        %v3871 = vsub.s32 0, %v3870
        %v3872 = vrot.slane %v3867, %v3871
        %v3874 = vpack.i.b16 %v2666, %v2666
        %v3876 = vlaneseq
        %v3877 = vshrl.u32 %v3876, 7
        %v3878 = vsub.s32 0, %v3877
        %v3879 = vrot.slane %v3874, %v3878
        %v3881 = vpack.i.b16 %v2670, %v2670
        %v3883 = vlaneseq
        %v3884 = vshrl.u32 %v3883, 7
        %v3885 = vsub.s32 0, %v3884
        %v3886 = vrot.slane %v3881, %v3885
        %v3888 = vpack.i.b16 %v2674, %v2674
        %v3890 = vlaneseq
        %v3891 = vshrl.u32 %v3890, 7
        %v3892 = vsub.s32 0, %v3891
        %v3893 = vrot.slane %v3888, %v3892
        %v3895 = vpack.i.b16 %v2678, %v2678
        %v3897 = vlaneseq
        %v3898 = vshrl.u32 %v3897, 7
        %v3899 = vsub.s32 0, %v3898
        %v3900 = vrot.slane %v3895, %v3899
        %v3902 = vpack.i.b16 %v2682, %v2682
        %v3904 = vlaneseq
        %v3905 = vshrl.u32 %v3904, 7
        %v3906 = vsub.s32 0, %v3905
        %v3907 = vrot.slane %v3902, %v3906
        %v3909 = vpack.i.b16 %v2686, %v2686
        %v3911 = vlaneseq
        %v3912 = vshrl.u32 %v3911, 7
        %v3913 = vsub.s32 0, %v3912
        %v3914 = vrot.slane %v3909, %v3913
        %v3916 = vpack.i.b16 %v2690, %v2690
        %v3918 = vlaneseq
        %v3919 = vshrl.u32 %v3918, 7
        %v3920 = vsub.s32 0, %v3919
        %v3921 = vrot.slane %v3916, %v3920
        %v3923 = vpack.i.b16 %v2694, %v2694
        %v3925 = vlaneseq
        %v3926 = vshrl.u32 %v3925, 7
        %v3927 = vsub.s32 0, %v3926
        %v3928 = vrot.slane %v3923, %v3927
        %v3930 = vpack.i.b16 %v2698, %v2698
        %v3932 = vlaneseq
        %v3933 = vshrl.u32 %v3932, 7
        %v3934 = vsub.s32 0, %v3933
        %v3935 = vrot.slane %v3930, %v3934
        %v3937 = vpack.i.b16 %v2702, %v2702
        %v3939 = vlaneseq
        %v3940 = vshrl.u32 %v3939, 7
        %v3941 = vsub.s32 0, %v3940
        %v3942 = vrot.slane %v3937, %v3941
        %v3944 = vpack.i.b16 %v2706, %v2706
        %v3946 = vlaneseq
        %v3947 = vshrl.u32 %v3946, 7
        %v3948 = vsub.s32 0, %v3947
        %v3949 = vrot.slane %v3944, %v3948
        %v3951 = vpack.i.b16 %v2710, %v2710
        %v3953 = vlaneseq
        %v3954 = vshrl.u32 %v3953, 7
        %v3955 = vsub.s32 0, %v3954
        %v3956 = vrot.slane %v3951, %v3955
        %v3958 = vpack.i.b16 %v2714, %v2714
        %v3960 = vlaneseq
        %v3961 = vshrl.u32 %v3960, 7
        %v3962 = vsub.s32 0, %v3961
        %v3963 = vrot.slane %v3958, %v3962
        %v3965 = vpack.i.b16 %v2718, %v2718
        %v3967 = vlaneseq
        %v3968 = vshrl.u32 %v3967, 7
        %v3969 = vsub.s32 0, %v3968
        %v3970 = vrot.slane %v3965, %v3969
        %v3972 = vpack.i.b16 %v2722, %v2722
        %v3974 = vlaneseq
        %v3975 = vshrl.u32 %v3974, 7
        %v3976 = vsub.s32 0, %v3975
        %v3977 = vrot.slane %v3972, %v3976
        %v3979 = vpack.i.b16 %v2726, %v2726
        %v3981 = vlaneseq
        %v3982 = vshrl.u32 %v3981, 7
        %v3983 = vsub.s32 0, %v3982
        %v3984 = vrot.slane %v3979, %v3983
        %v3986 = vpack.i.b16 %v2730, %v2730
        %v3988 = vlaneseq
        %v3989 = vshrl.u32 %v3988, 7
        %v3990 = vsub.s32 0, %v3989
        %v3991 = vrot.slane %v3986, %v3990
        %v3993 = vpack.i.b16 %v2734, %v2734
        %v3995 = vlaneseq
        %v3996 = vshrl.u32 %v3995, 7
        %v3997 = vsub.s32 0, %v3996
        %v3998 = vrot.slane %v3993, %v3997
        %v4000 = vpack.i.b16 %v2738, %v2738
        %v4002 = vlaneseq
        %v4003 = vshrl.u32 %v4002, 7
        %v4004 = vsub.s32 0, %v4003
        %v4005 = vrot.slane %v4000, %v4004
        %v4007 = vpack.i.b16 %v2742, %v2742
        %v4009 = vlaneseq
        %v4010 = vshrl.u32 %v4009, 7
        %v4011 = vsub.s32 0, %v4010
        %v4012 = vrot.slane %v4007, %v4011
        %v4014 = vpack.i.b16 %v2746, %v2746
        %v4016 = vlaneseq
        %v4017 = vshrl.u32 %v4016, 7
        %v4018 = vsub.s32 0, %v4017
        %v4019 = vrot.slane %v4014, %v4018
        %v4021 = vpack.i.b16 %v2750, %v2750
        %v4023 = vlaneseq
        %v4024 = vshrl.u32 %v4023, 7
        %v4025 = vsub.s32 0, %v4024
        %v4026 = vrot.slane %v4021, %v4025
        %v4028 = vpack.i.b16 %v2754, %v2754
        %v4030 = vlaneseq
        %v4031 = vshrl.u32 %v4030, 7
        %v4032 = vsub.s32 0, %v4031
        %v4033 = vrot.slane %v4028, %v4032
        %v4035 = vpack.i.b16 %v2758, %v2758
        %v4037 = vlaneseq
        %v4038 = vshrl.u32 %v4037, 7
        %v4039 = vsub.s32 0, %v4038
        %v4040 = vrot.slane %v4035, %v4039
        %v4042 = vpack.i.b16 %v2762, %v2762
        %v4044 = vlaneseq
        %v4045 = vshrl.u32 %v4044, 7
        %v4046 = vsub.s32 0, %v4045
        %v4047 = vrot.slane %v4042, %v4046
        %v4049 = vpack.i.b16 %v2766, %v2766
        %v4051 = vlaneseq
        %v4052 = vshrl.u32 %v4051, 7
        %v4053 = vsub.s32 0, %v4052
        %v4054 = vrot.slane %v4049, %v4053
        %v4056 = vpack.i.b16 %v2770, %v2770
        %v4058 = vlaneseq
        %v4059 = vshrl.u32 %v4058, 7
        %v4060 = vsub.s32 0, %v4059
        %v4061 = vrot.slane %v4056, %v4060
        %v4063 = vpack.i.b16 %v2774, %v2774
        %v4065 = vlaneseq
        %v4066 = vshrl.u32 %v4065, 7
        %v4067 = vsub.s32 0, %v4066
        %v4068 = vrot.slane %v4063, %v4067
        %v4070 = vpack.i.b16 %v2778, %v2778
        %v4072 = vlaneseq
        %v4073 = vshrl.u32 %v4072, 7
        %v4074 = vsub.s32 0, %v4073
        %v4075 = vrot.slane %v4070, %v4074
        %v4077 = vpack.i.b16 %v2782, %v2782
        %v4079 = vlaneseq
        %v4080 = vshrl.u32 %v4079, 7
        %v4081 = vsub.s32 0, %v4080
        %v4082 = vrot.slane %v4077, %v4081
        %v4084 = vpack.i.b16 %v2786, %v2786
        %v4086 = vlaneseq
        %v4087 = vshrl.u32 %v4086, 7
        %v4088 = vsub.s32 0, %v4087
        %v4089 = vrot.slane %v4084, %v4088
        %v4091 = vpack.i.b16 %v2790, %v2790
        %v4093 = vlaneseq
        %v4094 = vshrl.u32 %v4093, 7
        %v4095 = vsub.s32 0, %v4094
        %v4096 = vrot.slane %v4091, %v4095
        %v4098 = vpack.i.b16 %v2794, %v2794
        %v4100 = vlaneseq
        %v4101 = vshrl.u32 %v4100, 7
        %v4102 = vsub.s32 0, %v4101
        %v4103 = vrot.slane %v4098, %v4102
        %v4105 = vpack.i.b16 %v2798, %v2798
        %v4107 = vlaneseq
        %v4108 = vshrl.u32 %v4107, 7
        %v4109 = vsub.s32 0, %v4108
        %v4110 = vrot.slane %v4105, %v4109
        %v4112 = vpack.i.b16 %v2802, %v2802
        %v4114 = vlaneseq
        %v4115 = vshrl.u32 %v4114, 7
        %v4116 = vsub.s32 0, %v4115
        %v4117 = vrot.slane %v4112, %v4116
        %v4119 = vpack.i.b16 %v2806, %v2806
        %v4121 = vlaneseq
        %v4122 = vshrl.u32 %v4121, 7
        %v4123 = vsub.s32 0, %v4122
        %v4124 = vrot.slane %v4119, %v4123
        %v4126 = vpack.i.b16 %v2810, %v2810
        %v4128 = vlaneseq
        %v4129 = vshrl.u32 %v4128, 7
        %v4130 = vsub.s32 0, %v4129
        %v4131 = vrot.slane %v4126, %v4130
        %v4133 = vpack.i.b16 %v2814, %v2814
        %v4135 = vlaneseq
        %v4136 = vshrl.u32 %v4135, 7
        %v4137 = vsub.s32 0, %v4136
        %v4138 = vrot.slane %v4133, %v4137
        %v4140 = vpack.i.b16 %v2818, %v2818
        %v4142 = vlaneseq
        %v4143 = vshrl.u32 %v4142, 7
        %v4144 = vsub.s32 0, %v4143
        %v4145 = vrot.slane %v4140, %v4144
        %v4147 = vpack.i.b16 %v2822, %v2822
        %v4149 = vlaneseq
        %v4150 = vshrl.u32 %v4149, 7
        %v4151 = vsub.s32 0, %v4150
        %v4152 = vrot.slane %v4147, %v4151
        %v4154 = vpack.i.b16 %v2826, %v2826
        %v4156 = vlaneseq
        %v4157 = vshrl.u32 %v4156, 7
        %v4158 = vsub.s32 0, %v4157
        %v4159 = vrot.slane %v4154, %v4158
        %v4161 = vpack.i.b16 %v2830, %v2830
        %v4163 = vlaneseq
        %v4164 = vshrl.u32 %v4163, 7
        %v4165 = vsub.s32 0, %v4164
        %v4166 = vrot.slane %v4161, %v4165
        %v4168 = vpack.i.b16 %v2834, %v2834
        %v4170 = vlaneseq
        %v4171 = vshrl.u32 %v4170, 7
        %v4172 = vsub.s32 0, %v4171
        %v4173 = vrot.slane %v4168, %v4172
        %v4175 = vpack.i.b16 %v2838, %v2838
        %v4177 = vlaneseq
        %v4178 = vshrl.u32 %v4177, 7
        %v4179 = vsub.s32 0, %v4178
        %v4180 = vrot.slane %v4175, %v4179
        %v4182 = vpack.i.b16 %v2842, %v2842
        %v4184 = vlaneseq
        %v4185 = vshrl.u32 %v4184, 7
        %v4186 = vsub.s32 0, %v4185
        %v4187 = vrot.slane %v4182, %v4186
        %v4189 = vpack.i.b16 %v2846, %v2846
        %v4191 = vlaneseq
        %v4192 = vshrl.u32 %v4191, 7
        %v4193 = vsub.s32 0, %v4192
        %v4194 = vrot.slane %v4189, %v4193
        %v4196 = vpack.i.b16 %v2850, %v2850
        %v4198 = vlaneseq
        %v4199 = vshrl.u32 %v4198, 7
        %v4200 = vsub.s32 0, %v4199
        %v4201 = vrot.slane %v4196, %v4200
        %v4203 = vpack.i.b16 %v2854, %v2854
        %v4205 = vlaneseq
        %v4206 = vshrl.u32 %v4205, 7
        %v4207 = vsub.s32 0, %v4206
        %v4208 = vrot.slane %v4203, %v4207
        %v4210 = vpack.i.b16 %v2858, %v2858
        %v4212 = vlaneseq
        %v4213 = vshrl.u32 %v4212, 7
        %v4214 = vsub.s32 0, %v4213
        %v4215 = vrot.slane %v4210, %v4214
        %v4217 = vpack.i.b16 %v2862, %v2862
        %v4219 = vlaneseq
        %v4220 = vshrl.u32 %v4219, 7
        %v4221 = vsub.s32 0, %v4220
        %v4222 = vrot.slane %v4217, %v4221
        %v4224 = vpack.i.b16 %v2866, %v2866
        %v4226 = vlaneseq
        %v4227 = vshrl.u32 %v4226, 7
        %v4228 = vsub.s32 0, %v4227
        %v4229 = vrot.slane %v4224, %v4228
        %v4231 = vpack.i.b16 %v2870, %v2870
        %v4233 = vlaneseq
        %v4234 = vshrl.u32 %v4233, 7
        %v4235 = vsub.s32 0, %v4234
        %v4236 = vrot.slane %v4231, %v4235
        %v4238 = vpack.i.b16 %v2874, %v2874
        %v4240 = vlaneseq
        %v4241 = vshrl.u32 %v4240, 7
        %v4242 = vsub.s32 0, %v4241
        %v4243 = vrot.slane %v4238, %v4242
        %v4245 = vpack.i.b16 %v2878, %v2878
        %v4247 = vlaneseq
        %v4248 = vshrl.u32 %v4247, 7
        %v4249 = vsub.s32 0, %v4248
        %v4250 = vrot.slane %v4245, %v4249
        %v4252 = vpack.i.b16 %v2882, %v2882
        %v4254 = vlaneseq
        %v4255 = vshrl.u32 %v4254, 7
        %v4256 = vsub.s32 0, %v4255
        %v4257 = vrot.slane %v4252, %v4256
        %v4259 = vpack.i.b16 %v2886, %v2886
        %v4261 = vlaneseq
        %v4262 = vshrl.u32 %v4261, 7
        %v4263 = vsub.s32 0, %v4262
        %v4264 = vrot.slane %v4259, %v4263
        %v4266 = vpack.i.b16 %v2890, %v2890
        %v4268 = vlaneseq
        %v4269 = vshrl.u32 %v4268, 7
        %v4270 = vsub.s32 0, %v4269
        %v4271 = vrot.slane %v4266, %v4270
        %v4273 = vpack.i.b16 %v2894, %v2894
        %v4275 = vlaneseq
        %v4276 = vshrl.u32 %v4275, 7
        %v4277 = vsub.s32 0, %v4276
        %v4278 = vrot.slane %v4273, %v4277
        %v4280 = vpack.i.b16 %v2898, %v2898
        %v4282 = vlaneseq
        %v4283 = vshrl.u32 %v4282, 7
        %v4284 = vsub.s32 0, %v4283
        %v4285 = vrot.slane %v4280, %v4284
        %v4287 = vpack.i.b16 %v2902, %v2902
        %v4289 = vlaneseq
        %v4290 = vshrl.u32 %v4289, 7
        %v4291 = vsub.s32 0, %v4290
        %v4292 = vrot.slane %v4287, %v4291
        %v4294 = vpack.i.b16 %v2906, %v2906
        %v4296 = vlaneseq
        %v4297 = vshrl.u32 %v4296, 7
        %v4298 = vsub.s32 0, %v4297
        %v4299 = vrot.slane %v4294, %v4298
        %v4301 = vpack.i.b16 %v2910, %v2910
        %v4303 = vlaneseq
        %v4304 = vshrl.u32 %v4303, 7
        %v4305 = vsub.s32 0, %v4304
        %v4306 = vrot.slane %v4301, %v4305
        %v4308 = vpack.i.b16 %v2914, %v2914
        %v4310 = vlaneseq
        %v4311 = vshrl.u32 %v4310, 7
        %v4312 = vsub.s32 0, %v4311
        %v4313 = vrot.slane %v4308, %v4312
        %v4315 = vpack.i.b16 %v2918, %v2918
        %v4317 = vlaneseq
        %v4318 = vshrl.u32 %v4317, 7
        %v4319 = vsub.s32 0, %v4318
        %v4320 = vrot.slane %v4315, %v4319
        %v4322 = vpack.i.b16 %v2922, %v2922
        %v4324 = vlaneseq
        %v4325 = vshrl.u32 %v4324, 7
        %v4326 = vsub.s32 0, %v4325
        %v4327 = vrot.slane %v4322, %v4326
        %v4329 = vpack.i.b16 %v2926, %v2926
        %v4331 = vlaneseq
        %v4332 = vshrl.u32 %v4331, 7
        %v4333 = vsub.s32 0, %v4332
        %v4334 = vrot.slane %v4329, %v4333
        %v4336 = vpack.i.b16 %v2930, %v2930
        %v4338 = vlaneseq
        %v4339 = vshrl.u32 %v4338, 7
        %v4340 = vsub.s32 0, %v4339
        %v4341 = vrot.slane %v4336, %v4340
        %v4343 = vpack.i.b16 %v2934, %v2934
        %v4345 = vlaneseq
        %v4346 = vshrl.u32 %v4345, 7
        %v4347 = vsub.s32 0, %v4346
        %v4348 = vrot.slane %v4343, %v4347
        %v4350 = vpack.i.b16 %v2938, %v2938
        %v4352 = vlaneseq
        %v4353 = vshrl.u32 %v4352, 7
        %v4354 = vsub.s32 0, %v4353
        %v4355 = vrot.slane %v4350, %v4354
        %v4357 = vpack.i.b16 %v2942, %v2942
        %v4359 = vlaneseq
        %v4360 = vshrl.u32 %v4359, 7
        %v4361 = vsub.s32 0, %v4360
        %v4362 = vrot.slane %v4357, %v4361
        %v4364 = vpack.i.b16 %v2946, %v2946
        %v4366 = vlaneseq
        %v4367 = vshrl.u32 %v4366, 7
        %v4368 = vsub.s32 0, %v4367
        %v4369 = vrot.slane %v4364, %v4368
        %v4371 = vpack.i.b16 %v2950, %v2950
        %v4373 = vlaneseq
        %v4374 = vshrl.u32 %v4373, 7
        %v4375 = vsub.s32 0, %v4374
        %v4376 = vrot.slane %v4371, %v4375
        %v4378 = vpack.i.b16 %v2954, %v2954
        %v4380 = vlaneseq
        %v4381 = vshrl.u32 %v4380, 7
        %v4382 = vsub.s32 0, %v4381
        %v4383 = vrot.slane %v4378, %v4382
        %v4385 = vpack.i.b16 %v2958, %v2958
        %v4387 = vlaneseq
        %v4388 = vshrl.u32 %v4387, 7
        %v4389 = vsub.s32 0, %v4388
        %v4390 = vrot.slane %v4385, %v4389
        %v4392 = vpack.i.b16 %v2962, %v2962
        %v4394 = vlaneseq
        %v4395 = vshrl.u32 %v4394, 7
        %v4396 = vsub.s32 0, %v4395
        %v4397 = vrot.slane %v4392, %v4396
        %v4399 = vpack.i.b16 %v2966, %v2966
        %v4401 = vlaneseq
        %v4402 = vshrl.u32 %v4401, 7
        %v4403 = vsub.s32 0, %v4402
        %v4404 = vrot.slane %v4399, %v4403
        %v4406 = vpack.i.b16 %v2970, %v2970
        %v4408 = vlaneseq
        %v4409 = vshrl.u32 %v4408, 7
        %v4410 = vsub.s32 0, %v4409
        %v4411 = vrot.slane %v4406, %v4410
        %v4413 = vpack.i.b16 %v2974, %v2974
        %v4415 = vlaneseq
        %v4416 = vshrl.u32 %v4415, 7
        %v4417 = vsub.s32 0, %v4416
        %v4418 = vrot.slane %v4413, %v4417
        %v4420 = vpack.i.b16 %v2978, %v2978
        %v4422 = vlaneseq
        %v4423 = vshrl.u32 %v4422, 7
        %v4424 = vsub.s32 0, %v4423
        %v4425 = vrot.slane %v4420, %v4424
        %v4427 = vpack.i.b16 %v2982, %v2982
        %v4429 = vlaneseq
        %v4430 = vshrl.u32 %v4429, 7
        %v4431 = vsub.s32 0, %v4430
        %v4432 = vrot.slane %v4427, %v4431
        %v4434 = vpack.i.b16 %v2986, %v2986
        %v4436 = vlaneseq
        %v4437 = vshrl.u32 %v4436, 7
        %v4438 = vsub.s32 0, %v4437
        %v4439 = vrot.slane %v4434, %v4438
        %v4441 = vpack.i.b16 %v2990, %v2990
        %v4443 = vlaneseq
        %v4444 = vshrl.u32 %v4443, 7
        %v4445 = vsub.s32 0, %v4444
        %v4446 = vrot.slane %v4441, %v4445
        %v4448 = vpack.i.b16 %v2994, %v2994
        %v4450 = vlaneseq
        %v4451 = vshrl.u32 %v4450, 7
        %v4452 = vsub.s32 0, %v4451
        %v4453 = vrot.slane %v4448, %v4452
        %v4455 = vpack.i.b16 %v2998, %v2998
        %v4457 = vlaneseq
        %v4458 = vshrl.u32 %v4457, 7
        %v4459 = vsub.s32 0, %v4458
        %v4460 = vrot.slane %v4455, %v4459
        %v4462 = vpack.i.b16 %v3002, %v3002
        %v4464 = vlaneseq
        %v4465 = vshrl.u32 %v4464, 7
        %v4466 = vsub.s32 0, %v4465
        %v4467 = vrot.slane %v4462, %v4466
        %v4469 = vpack.i.b16 %v3006, %v3006
        %v4471 = vlaneseq
        %v4472 = vshrl.u32 %v4471, 7
        %v4473 = vsub.s32 0, %v4472
        %v4474 = vrot.slane %v4469, %v4473
        %v4476 = vpack.i.b16 %v3010, %v3010
        %v4478 = vlaneseq
        %v4479 = vshrl.u32 %v4478, 7
        %v4480 = vsub.s32 0, %v4479
        %v4481 = vrot.slane %v4476, %v4480
        %v4483 = vpack.i.b16 %v3014, %v3014
        %v4485 = vlaneseq
        %v4486 = vshrl.u32 %v4485, 7
        %v4487 = vsub.s32 0, %v4486
        %v4488 = vrot.slane %v4483, %v4487
        %v4490 = vpack.i.b16 %v3018, %v3018
        %v4492 = vlaneseq
        %v4493 = vshrl.u32 %v4492, 7
        %v4494 = vsub.s32 0, %v4493
        %v4495 = vrot.slane %v4490, %v4494
        %v4497 = vpack.i.b16 %v3022, %v3022
        %v4499 = vlaneseq
        %v4500 = vshrl.u32 %v4499, 7
        %v4501 = vsub.s32 0, %v4500
        %v4502 = vrot.slane %v4497, %v4501
        %v4504 = vpack.i.b16 %v3026, %v3026
        %v4506 = vlaneseq
        %v4507 = vshrl.u32 %v4506, 7
        %v4508 = vsub.s32 0, %v4507
        %v4509 = vrot.slane %v4504, %v4508
        %v4511 = vpack.i.b16 %v3030, %v3030
        %v4513 = vlaneseq
        %v4514 = vshrl.u32 %v4513, 7
        %v4515 = vsub.s32 0, %v4514
        %v4516 = vrot.slane %v4511, %v4515
        %v4518 = vpack.i.b16 %v3034, %v3034
        %v4520 = vlaneseq
        %v4521 = vshrl.u32 %v4520, 7
        %v4522 = vsub.s32 0, %v4521
        %v4523 = vrot.slane %v4518, %v4522
        %v4525 = vpack.i.b16 %v3038, %v3038
        %v4527 = vlaneseq
        %v4528 = vshrl.u32 %v4527, 7
        %v4529 = vsub.s32 0, %v4528
        %v4530 = vrot.slane %v4525, %v4529
        %v4532 = vpack.i.b16 %v3042, %v3042
        %v4534 = vlaneseq
        %v4535 = vshrl.u32 %v4534, 7
        %v4536 = vsub.s32 0, %v4535
        %v4537 = vrot.slane %v4532, %v4536
        %v4539 = vpack.i.b16 %v3046, %v3046
        %v4541 = vlaneseq
        %v4542 = vshrl.u32 %v4541, 7
        %v4543 = vsub.s32 0, %v4542
        %v4544 = vrot.slane %v4539, %v4543
        %v4546 = vpack.i.b16 %v3050, %v3050
        %v4548 = vlaneseq
        %v4549 = vshrl.u32 %v4548, 7
        %v4550 = vsub.s32 0, %v4549
        %v4551 = vrot.slane %v4546, %v4550
        %v4553 = vpack.i.b16 %v3054, %v3054
        %v4555 = vlaneseq
        %v4556 = vshrl.u32 %v4555, 7
        %v4557 = vsub.s32 0, %v4556
        %v4558 = vrot.slane %v4553, %v4557
        %v4560 = vpack.i.b16 %v3058, %v3058
        %v4562 = vlaneseq
        %v4563 = vshrl.u32 %v4562, 7
        %v4564 = vsub.s32 0, %v4563
        %v4565 = vrot.slane %v4560, %v4564
        %v4567 = vpack.i.b16 %v3062, %v3062
        %v4569 = vlaneseq
        %v4570 = vshrl.u32 %v4569, 7
        %v4571 = vsub.s32 0, %v4570
        %v4572 = vrot.slane %v4567, %v4571
        %v4574 = vpack.i.b16 %v3066, %v3066
        %v4576 = vlaneseq
        %v4577 = vshrl.u32 %v4576, 7
        %v4578 = vsub.s32 0, %v4577
        %v4579 = vrot.slane %v4574, %v4578
        %v4581 = vpack.i.b16 %v3070, %v3070
        %v4583 = vlaneseq
        %v4584 = vshrl.u32 %v4583, 7
        %v4585 = vsub.s32 0, %v4584
        %v4586 = vrot.slane %v4581, %v4585
        %v4588 = vpack.i.b16 %v3074, %v3074
        %v4590 = vlaneseq
        %v4591 = vshrl.u32 %v4590, 7
        %v4592 = vsub.s32 0, %v4591
        %v4593 = vrot.slane %v4588, %v4592
        %v4595 = vpack.i.b16 %v3078, %v3078
        %v4597 = vlaneseq
        %v4598 = vshrl.u32 %v4597, 7
        %v4599 = vsub.s32 0, %v4598
        %v4600 = vrot.slane %v4595, %v4599
        %v4602 = vpack.i.b16 %v3082, %v3082
        %v4604 = vlaneseq
        %v4605 = vshrl.u32 %v4604, 7
        %v4606 = vsub.s32 0, %v4605
        %v4607 = vrot.slane %v4602, %v4606
        %v4609 = vpack.i.b16 %v3086, %v3086
        %v4611 = vlaneseq
        %v4612 = vshrl.u32 %v4611, 7
        %v4613 = vsub.s32 0, %v4612
        %v4614 = vrot.slane %v4609, %v4613
        %v4616 = vpack.i.b16 %v3090, %v3090
        %v4618 = vlaneseq
        %v4619 = vshrl.u32 %v4618, 7
        %v4620 = vsub.s32 0, %v4619
        %v4621 = vrot.slane %v4616, %v4620
        %v4623 = vpack.i.b16 %v3094, %v3094
        %v4625 = vlaneseq
        %v4626 = vshrl.u32 %v4625, 7
        %v4627 = vsub.s32 0, %v4626
        %v4628 = vrot.slane %v4623, %v4627
        %v4630 = vpack.i.b16 %v3098, %v3098
        %v4632 = vlaneseq
        %v4633 = vshrl.u32 %v4632, 7
        %v4634 = vsub.s32 0, %v4633
        %v4635 = vrot.slane %v4630, %v4634
        %v4637 = vpack.i.b16 %v3102, %v3102
        %v4639 = vlaneseq
        %v4640 = vshrl.u32 %v4639, 7
        %v4641 = vsub.s32 0, %v4640
        %v4642 = vrot.slane %v4637, %v4641
        %v4644 = vpack.i.b16 %v3106, %v3106
        %v4646 = vlaneseq
        %v4647 = vshrl.u32 %v4646, 7
        %v4648 = vsub.s32 0, %v4647
        %v4649 = vrot.slane %v4644, %v4648
        %v4651 = vpack.i.b16 %v3110, %v3110
        %v4653 = vlaneseq
        %v4654 = vshrl.u32 %v4653, 7
        %v4655 = vsub.s32 0, %v4654
        %v4656 = vrot.slane %v4651, %v4655
        %v4658 = vpack.i.b16 %v3114, %v3114
        %v4660 = vlaneseq
        %v4661 = vshrl.u32 %v4660, 7
        %v4662 = vsub.s32 0, %v4661
        %v4663 = vrot.slane %v4658, %v4662
        %v4665 = vpack.i.b16 %v3118, %v3118
        %v4667 = vlaneseq
        %v4668 = vshrl.u32 %v4667, 7
        %v4669 = vsub.s32 0, %v4668
        %v4670 = vrot.slane %v4665, %v4669
        %v4672 = vpack.i.b16 %v3122, %v3122
        %v4674 = vlaneseq
        %v4675 = vshrl.u32 %v4674, 7
        %v4676 = vsub.s32 0, %v4675
        %v4677 = vrot.slane %v4672, %v4676
        %v4679 = vpack.i.b16 %v3126, %v3126
        %v4681 = vlaneseq
        %v4682 = vshrl.u32 %v4681, 7
        %v4683 = vsub.s32 0, %v4682
        %v4684 = vrot.slane %v4679, %v4683
        %v4686 = vpack.i.b16 %v3130, %v3130
        %v4688 = vlaneseq
        %v4689 = vshrl.u32 %v4688, 7
        %v4690 = vsub.s32 0, %v4689
        %v4691 = vrot.slane %v4686, %v4690
        %v4693 = vpack.i.b16 %v3134, %v3134
        %v4695 = vlaneseq
        %v4696 = vshrl.u32 %v4695, 7
        %v4697 = vsub.s32 0, %v4696
        %v4698 = vrot.slane %v4693, %v4697
        %v4700 = vpack.i.b16 %v3138, %v3138
        %v4702 = vlaneseq
        %v4703 = vshrl.u32 %v4702, 7
        %v4704 = vsub.s32 0, %v4703
        %v4705 = vrot.slane %v4700, %v4704
        %v4707 = vpack.i.b16 %v3142, %v3142
        %v4709 = vlaneseq
        %v4710 = vshrl.u32 %v4709, 7
        %v4711 = vsub.s32 0, %v4710
        %v4712 = vrot.slane %v4707, %v4711
        %v4714 = vpack.i.b16 %v3146, %v3146
        %v4716 = vlaneseq
        %v4717 = vshrl.u32 %v4716, 7
        %v4718 = vsub.s32 0, %v4717
        %v4719 = vrot.slane %v4714, %v4718
        %v4721 = vpack.i.b16 %v3150, %v3150
        %v4723 = vlaneseq
        %v4724 = vshrl.u32 %v4723, 7
        %v4725 = vsub.s32 0, %v4724
        %v4726 = vrot.slane %v4721, %v4725
        %v4728 = vpack.i.b16 %v3154, %v3154
        %v4730 = vlaneseq
        %v4731 = vshrl.u32 %v4730, 7
        %v4732 = vsub.s32 0, %v4731
        %v4733 = vrot.slane %v4728, %v4732
        %v4735 = vpack.i.b16 %v3158, %v3158
        %v4737 = vlaneseq
        %v4738 = vshrl.u32 %v4737, 7
        %v4739 = vsub.s32 0, %v4738
        %v4740 = vrot.slane %v4735, %v4739
        %v4742 = vpack.i.b16 %v3162, %v3162
        %v4744 = vlaneseq
        %v4745 = vshrl.u32 %v4744, 7
        %v4746 = vsub.s32 0, %v4745
        %v4747 = vrot.slane %v4742, %v4746
        %v4749 = vpack.i.b16 %v3166, %v3166
        %v4751 = vlaneseq
        %v4752 = vshrl.u32 %v4751, 7
        %v4753 = vsub.s32 0, %v4752
        %v4754 = vrot.slane %v4749, %v4753
        %v4756 = vpack.i.b16 %v3170, %v3170
        %v4758 = vlaneseq
        %v4759 = vshrl.u32 %v4758, 7
        %v4760 = vsub.s32 0, %v4759
        %v4761 = vrot.slane %v4756, %v4760
        %v4763 = vpack.i.b16 %v3174, %v3174
        %v4765 = vlaneseq
        %v4766 = vshrl.u32 %v4765, 7
        %v4767 = vsub.s32 0, %v4766
        %v4768 = vrot.slane %v4763, %v4767
        %v4770 = vpack.i.b16 %v3178, %v3178
        %v4772 = vlaneseq
        %v4773 = vshrl.u32 %v4772, 7
        %v4774 = vsub.s32 0, %v4773
        %v4775 = vrot.slane %v4770, %v4774
        %v4777 = vpack.i.b16 %v3182, %v3182
        %v4779 = vlaneseq
        %v4780 = vshrl.u32 %v4779, 7
        %v4781 = vsub.s32 0, %v4780
        %v4782 = vrot.slane %v4777, %v4781
        %v4784 = vpack.i.b16 %v3186, %v3186
        %v4786 = vlaneseq
        %v4787 = vshrl.u32 %v4786, 7
        %v4788 = vsub.s32 0, %v4787
        %v4789 = vrot.slane %v4784, %v4788
        %v4791 = vpack.i.b16 %v3190, %v3190
        %v4793 = vlaneseq
        %v4794 = vshrl.u32 %v4793, 7
        %v4795 = vsub.s32 0, %v4794
        %v4796 = vrot.slane %v4791, %v4795
        %v4798 = vpack.i.b16 %v3194, %v3194
        %v4800 = vlaneseq
        %v4801 = vshrl.u32 %v4800, 7
        %v4802 = vsub.s32 0, %v4801
        %v4803 = vrot.slane %v4798, %v4802
        %v4805 = vpack.i.b16 %v3198, %v3198
        %v4807 = vlaneseq
        %v4808 = vshrl.u32 %v4807, 7
        %v4809 = vsub.s32 0, %v4808
        %v4810 = vrot.slane %v4805, %v4809
        %v4812 = vpack.i.b16 %v3202, %v3202
        %v4814 = vlaneseq
        %v4815 = vshrl.u32 %v4814, 7
        %v4816 = vsub.s32 0, %v4815
        %v4817 = vrot.slane %v4812, %v4816
        %v4819 = vpack.i.b16 %v3206, %v3206
        %v4821 = vlaneseq
        %v4822 = vshrl.u32 %v4821, 7
        %v4823 = vsub.s32 0, %v4822
        %v4824 = vrot.slane %v4819, %v4823
        %v4826 = vpack.i.b16 %v3210, %v3210
        %v4828 = vlaneseq
        %v4829 = vshrl.u32 %v4828, 7
        %v4830 = vsub.s32 0, %v4829
        %v4831 = vrot.slane %v4826, %v4830
        %v4833 = vpack.i.b16 %v3214, %v3214
        %v4835 = vlaneseq
        %v4836 = vshrl.u32 %v4835, 7
        %v4837 = vsub.s32 0, %v4836
        %v4838 = vrot.slane %v4833, %v4837
        %v4840 = vpack.i.b16 %v3218, %v3218
        %v4842 = vlaneseq
        %v4843 = vshrl.u32 %v4842, 7
        %v4844 = vsub.s32 0, %v4843
        %v4845 = vrot.slane %v4840, %v4844
        %v4847 = vpack.i.b16 %v3222, %v3222
        %v4849 = vlaneseq
        %v4850 = vshrl.u32 %v4849, 7
        %v4851 = vsub.s32 0, %v4850
        %v4852 = vrot.slane %v4847, %v4851
        %v4854 = vpack.i.b16 %v3226, %v3226
        %v4856 = vlaneseq
        %v4857 = vshrl.u32 %v4856, 7
        %v4858 = vsub.s32 0, %v4857
        %v4859 = vrot.slane %v4854, %v4858
        %v4861 = vpack.i.b16 %v3230, %v3230
        %v4863 = vlaneseq
        %v4864 = vshrl.u32 %v4863, 7
        %v4865 = vsub.s32 0, %v4864
        %v4866 = vrot.slane %v4861, %v4865
        %v4868 = vpack.i.b16 %v3234, %v3234
        %v4870 = vlaneseq
        %v4871 = vshrl.u32 %v4870, 7
        %v4872 = vsub.s32 0, %v4871
        %v4873 = vrot.slane %v4868, %v4872
        %v4875 = vpack.i.b16 %v3238, %v3238
        %v4877 = vlaneseq
        %v4878 = vshrl.u32 %v4877, 7
        %v4879 = vsub.s32 0, %v4878
        %v4880 = vrot.slane %v4875, %v4879
        %v4882 = vpack.i.b16 %v3242, %v3242
        %v4884 = vlaneseq
        %v4885 = vshrl.u32 %v4884, 7
        %v4886 = vsub.s32 0, %v4885
        %v4887 = vrot.slane %v4882, %v4886
        %v4889 = vpack.i.b16 %v3246, %v3246
        %v4891 = vlaneseq
        %v4892 = vshrl.u32 %v4891, 7
        %v4893 = vsub.s32 0, %v4892
        %v4894 = vrot.slane %v4889, %v4893
        %v4896 = vpack.i.b16 %v3250, %v3250
        %v4898 = vlaneseq
        %v4899 = vshrl.u32 %v4898, 7
        %v4900 = vsub.s32 0, %v4899
        %v4901 = vrot.slane %v4896, %v4900
        %v4903 = vpack.i.b16 %v3254, %v3254
        %v4905 = vlaneseq
        %v4906 = vshrl.u32 %v4905, 7
        %v4907 = vsub.s32 0, %v4906
        %v4908 = vrot.slane %v4903, %v4907
        %v4910 = vpack.i.b16 %v3258, %v3258
        %v4912 = vlaneseq
        %v4913 = vshrl.u32 %v4912, 7
        %v4914 = vsub.s32 0, %v4913
        %v4915 = vrot.slane %v4910, %v4914
        %v4917 = vpack.i.b16 %v3262, %v3262
        %v4919 = vlaneseq
        %v4920 = vshrl.u32 %v4919, 7
        %v4921 = vsub.s32 0, %v4920
        %v4922 = vrot.slane %v4917, %v4921
        %v4924 = vpack.i.b16 %v3266, %v3266
        %v4926 = vlaneseq
        %v4927 = vshrl.u32 %v4926, 7
        %v4928 = vsub.s32 0, %v4927
        %v4929 = vrot.slane %v4924, %v4928
        %v4931 = vpack.i.b16 %v3270, %v3270
        %v4933 = vlaneseq
        %v4934 = vshrl.u32 %v4933, 7
        %v4935 = vsub.s32 0, %v4934
        %v4936 = vrot.slane %v4931, %v4935
        %v4938 = vpack.i.b16 %v3274, %v3274
        %v4940 = vlaneseq
        %v4941 = vshrl.u32 %v4940, 7
        %v4942 = vsub.s32 0, %v4941
        %v4943 = vrot.slane %v4938, %v4942
        %v4945 = vpack.i.b16 %v3278, %v3278
        %v4947 = vlaneseq
        %v4948 = vshrl.u32 %v4947, 7
        %v4949 = vsub.s32 0, %v4948
        %v4950 = vrot.slane %v4945, %v4949
        %v4952 = vpack.i.b16 %v3282, %v3282
        %v4954 = vlaneseq
        %v4955 = vshrl.u32 %v4954, 7
        %v4956 = vsub.s32 0, %v4955
        %v4957 = vrot.slane %v4952, %v4956
        %v4959 = vpack.i.b16 %v3286, %v3286
        %v4961 = vlaneseq
        %v4962 = vshrl.u32 %v4961, 7
        %v4963 = vsub.s32 0, %v4962
        %v4964 = vrot.slane %v4959, %v4963
        %v4966 = vpack.i.b16 %v3290, %v3290
        %v4968 = vlaneseq
        %v4969 = vshrl.u32 %v4968, 7
        %v4970 = vsub.s32 0, %v4969
        %v4971 = vrot.slane %v4966, %v4970
        %v4973 = vpack.i.b16 %v3294, %v3294
        %v4975 = vlaneseq
        %v4976 = vshrl.u32 %v4975, 7
        %v4977 = vsub.s32 0, %v4976
        %v4978 = vrot.slane %v4973, %v4977
        %v4980 = vpack.i.b16 %v3298, %v3298
        %v4982 = vlaneseq
        %v4983 = vshrl.u32 %v4982, 7
        %v4984 = vsub.s32 0, %v4983
        %v4985 = vrot.slane %v4980, %v4984
        %v4987 = vpack.i.b16 %v3302, %v3302
        %v4989 = vlaneseq
        %v4990 = vshrl.u32 %v4989, 7
        %v4991 = vsub.s32 0, %v4990
        %v4992 = vrot.slane %v4987, %v4991
        %v4994 = vpack.i.b16 %v3306, %v3306
        %v4996 = vlaneseq
        %v4997 = vshrl.u32 %v4996, 7
        %v4998 = vsub.s32 0, %v4997
        %v4999 = vrot.slane %v4994, %v4998
        %v5001 = vpack.i.b16 %v3310, %v3310
        %v5003 = vlaneseq
        %v5004 = vshrl.u32 %v5003, 7
        %v5005 = vsub.s32 0, %v5004
        %v5006 = vrot.slane %v5001, %v5005
        %v5008 = vpack.i.b16 %v3314, %v3314
        %v5010 = vlaneseq
        %v5011 = vshrl.u32 %v5010, 7
        %v5012 = vsub.s32 0, %v5011
        %v5013 = vrot.slane %v5008, %v5012
        %v5015 = vpack.i.b16 %v3318, %v3318
        %v5017 = vlaneseq
        %v5018 = vshrl.u32 %v5017, 7
        %v5019 = vsub.s32 0, %v5018
        %v5020 = vrot.slane %v5015, %v5019
        %v5022 = vpack.i.b16 %v3322, %v3322
        %v5024 = vlaneseq
        %v5025 = vshrl.u32 %v5024, 7
        %v5026 = vsub.s32 0, %v5025
        %v5027 = vrot.slane %v5022, %v5026
        %v5029 = vpack.i.b16 %v3326, %v3326
        %v5031 = vlaneseq
        %v5032 = vshrl.u32 %v5031, 7
        %v5033 = vsub.s32 0, %v5032
        %v5034 = vrot.slane %v5029, %v5033
        %v5036 = vpack.i.b16 %v3330, %v3330
        %v5038 = vlaneseq
        %v5039 = vshrl.u32 %v5038, 7
        %v5040 = vsub.s32 0, %v5039
        %v5041 = vrot.slane %v5036, %v5040
        %v5043 = vpack.i.b16 %v3334, %v3334
        %v5045 = vlaneseq
        %v5046 = vshrl.u32 %v5045, 7
        %v5047 = vsub.s32 0, %v5046
        %v5048 = vrot.slane %v5043, %v5047
        %v5050 = vpack.i.b16 %v3338, %v3338
        %v5052 = vlaneseq
        %v5053 = vshrl.u32 %v5052, 7
        %v5054 = vsub.s32 0, %v5053
        %v5055 = vrot.slane %v5050, %v5054
        %v5057 = vpack.i.b16 %v3342, %v3342
        %v5059 = vlaneseq
        %v5060 = vshrl.u32 %v5059, 7
        %v5061 = vsub.s32 0, %v5060
        %v5062 = vrot.slane %v5057, %v5061
        %v5064 = vpack.i.b16 %v3346, %v3346
        %v5066 = vlaneseq
        %v5067 = vshrl.u32 %v5066, 7
        %v5068 = vsub.s32 0, %v5067
        %v5069 = vrot.slane %v5064, %v5068
        %v5071 = vpack.i.b16 %v3350, %v3350
        %v5073 = vlaneseq
        %v5074 = vshrl.u32 %v5073, 7
        %v5075 = vsub.s32 0, %v5074
        %v5076 = vrot.slane %v5071, %v5075
        %v5078 = vpack.i.b16 %v3354, %v3354
        %v5080 = vlaneseq
        %v5081 = vshrl.u32 %v5080, 7
        %v5082 = vsub.s32 0, %v5081
        %v5083 = vrot.slane %v5078, %v5082
        %v5085 = vpack.i.b16 %v3358, %v3358
        %v5087 = vlaneseq
        %v5088 = vshrl.u32 %v5087, 7
        %v5089 = vsub.s32 0, %v5088
        %v5090 = vrot.slane %v5085, %v5089
        %v5092 = vpack.i.b16 %v3362, %v3362
        %v5094 = vlaneseq
        %v5095 = vshrl.u32 %v5094, 7
        %v5096 = vsub.s32 0, %v5095
        %v5097 = vrot.slane %v5092, %v5096
        %v5099 = vpack.i.b16 %v3366, %v3366
        %v5101 = vlaneseq
        %v5102 = vshrl.u32 %v5101, 7
        %v5103 = vsub.s32 0, %v5102
        %v5104 = vrot.slane %v5099, %v5103
        %v5106 = vpack.i.b16 %v3370, %v3370
        %v5108 = vlaneseq
        %v5109 = vshrl.u32 %v5108, 7
        %v5110 = vsub.s32 0, %v5109
        %v5111 = vrot.slane %v5106, %v5110
        %v5113 = vpack.i.b16 %v3374, %v3374
        %v5115 = vlaneseq
        %v5116 = vshrl.u32 %v5115, 7
        %v5117 = vsub.s32 0, %v5116
        %v5118 = vrot.slane %v5113, %v5117
        %v5120 = vpack.i.b16 %v3378, %v3378
        %v5122 = vlaneseq
        %v5123 = vshrl.u32 %v5122, 7
        %v5124 = vsub.s32 0, %v5123
        %v5125 = vrot.slane %v5120, %v5124
        %v5127 = vpack.i.b16 %v3382, %v3382
        %v5129 = vlaneseq
        %v5130 = vshrl.u32 %v5129, 7
        %v5131 = vsub.s32 0, %v5130
        %v5132 = vrot.slane %v5127, %v5131
        %v5134 = vpack.i.b16 %v3386, %v3386
        %v5136 = vlaneseq
        %v5137 = vshrl.u32 %v5136, 7
        %v5138 = vsub.s32 0, %v5137
        %v5139 = vrot.slane %v5134, %v5138
        %v5141 = vpack.i.b16 %v3390, %v3390
        %v5143 = vlaneseq
        %v5144 = vshrl.u32 %v5143, 7
        %v5145 = vsub.s32 0, %v5144
        %v5146 = vrot.slane %v5141, %v5145
        %v5148 = vpack.i.b16 %v3394, %v3394
        %v5150 = vlaneseq
        %v5151 = vshrl.u32 %v5150, 7
        %v5152 = vsub.s32 0, %v5151
        %v5153 = vrot.slane %v5148, %v5152
        %v5155 = vpack.i.b16 %v3398, %v3398
        %v5157 = vlaneseq
        %v5158 = vshrl.u32 %v5157, 7
        %v5159 = vsub.s32 0, %v5158
        %v5160 = vrot.slane %v5155, %v5159
        %v5162 = vpack.i.b16 %v3402, %v3402
        %v5164 = vlaneseq
        %v5165 = vshrl.u32 %v5164, 7
        %v5166 = vsub.s32 0, %v5165
        %v5167 = vrot.slane %v5162, %v5166
        %v5169 = vpack.i.b16 %v3406, %v3406
        %v5171 = vlaneseq
        %v5172 = vshrl.u32 %v5171, 7
        %v5173 = vsub.s32 0, %v5172
        %v5174 = vrot.slane %v5169, %v5173
        %v5176 = vpack.i.b16 %v3410, %v3410
        %v5178 = vlaneseq
        %v5179 = vshrl.u32 %v5178, 7
        %v5180 = vsub.s32 0, %v5179
        %v5181 = vrot.slane %v5176, %v5180
        %v5183 = vpack.i.b16 %v3414, %v3414
        %v5185 = vlaneseq
        %v5186 = vshrl.u32 %v5185, 7
        %v5187 = vsub.s32 0, %v5186
        %v5188 = vrot.slane %v5183, %v5187
        %v5190 = vpack.i.b16 %v3418, %v3418
        %v5192 = vlaneseq
        %v5193 = vshrl.u32 %v5192, 7
        %v5194 = vsub.s32 0, %v5193
        %v5195 = vrot.slane %v5190, %v5194
        %v5197 = vpack.i.b16 %v3422, %v3422
        %v5199 = vlaneseq
        %v5200 = vshrl.u32 %v5199, 7
        %v5201 = vsub.s32 0, %v5200
        %v5202 = vrot.slane %v5197, %v5201
        %v5204 = vpack.i.b16 %v3426, %v3426
        %v5206 = vlaneseq
        %v5207 = vshrl.u32 %v5206, 7
        %v5208 = vsub.s32 0, %v5207
        %v5209 = vrot.slane %v5204, %v5208
        %v5211 = vpack.i.b16 %v3430, %v3430
        %v5213 = vlaneseq
        %v5214 = vshrl.u32 %v5213, 7
        %v5215 = vsub.s32 0, %v5214
        %v5216 = vrot.slane %v5211, %v5215
        %v5218 = vpack.i.b16 %v3434, %v3434
        %v5220 = vlaneseq
        %v5221 = vshrl.u32 %v5220, 7
        %v5222 = vsub.s32 0, %v5221
        %v5223 = vrot.slane %v5218, %v5222
        %v5225 = vpack.i.b16 %v3438, %v3438
        %v5227 = vlaneseq
        %v5228 = vshrl.u32 %v5227, 7
        %v5229 = vsub.s32 0, %v5228
        %v5230 = vrot.slane %v5225, %v5229
        %v5487 = vcombine.low %v3445, %v3459
        %v5488 = vcombine.low %v3452, %v3466
        %v5490 = vunpack.c.l.s4 1935823168
        %v5491 = vunpack.c.0.s8 %v5490
        %v5492 = vlaneseq
        %v5493 = vshrl.u32 %v5492, 7
        %v5494 = vsub.s32 %v5491, %v5493
        %v5495 = vrot.slane %v5487, %v5494
        %v5497 = vunpack.c.l.s4 1935823168
        %v5498 = vunpack.c.0.s8 %v5497
        %v5499 = vlaneseq
        %v5500 = vshrl.u32 %v5499, 7
        %v5501 = vsub.s32 %v5498, %v5500
        %v5502 = vrot.slane %v5488, %v5501
        %v5503 = vcombine.low %v5495, %v5502
        %v5505 = vunpack.c.l.s4 1935823168
        %v5506 = vunpack.c.0.s8 %v5505
        %v5507 = vlaneseq
        %v5508 = vshrl.u32 %v5507, 7
        %v5509 = vsub.s32 %v5506, %v5508
        %v5510 = vrot.slane %v5503, %v5509
        %v5511 = vcombine.low %v3473, %v3487
        %v5512 = vcombine.low %v3480, %v3494
        %v5514 = vunpack.c.l.s4 1935823168
        %v5515 = vunpack.c.0.s8 %v5514
        %v5516 = vlaneseq
        %v5517 = vshrl.u32 %v5516, 7
        %v5518 = vsub.s32 %v5515, %v5517
        %v5519 = vrot.slane %v5511, %v5518
        %v5521 = vunpack.c.l.s4 1935823168
        %v5522 = vunpack.c.0.s8 %v5521
        %v5523 = vlaneseq
        %v5524 = vshrl.u32 %v5523, 7
        %v5525 = vsub.s32 %v5522, %v5524
        %v5526 = vrot.slane %v5512, %v5525
        %v5527 = vcombine.low %v5519, %v5526
        %v5529 = vunpack.c.l.s4 1935823168
        %v5530 = vunpack.c.0.s8 %v5529
        %v5531 = vlaneseq
        %v5532 = vshrl.u32 %v5531, 7
        %v5533 = vsub.s32 %v5530, %v5532
        %v5534 = vrot.slane %v5527, %v5533
        %v5535 = vcombine.low %v3501, %v3515
        %v5536 = vcombine.low %v3508, %v3522
        %v5538 = vunpack.c.l.s4 1935823168
        %v5539 = vunpack.c.0.s8 %v5538
        %v5540 = vlaneseq
        %v5541 = vshrl.u32 %v5540, 7
        %v5542 = vsub.s32 %v5539, %v5541
        %v5543 = vrot.slane %v5535, %v5542
        %v5545 = vunpack.c.l.s4 1935823168
        %v5546 = vunpack.c.0.s8 %v5545
        %v5547 = vlaneseq
        %v5548 = vshrl.u32 %v5547, 7
        %v5549 = vsub.s32 %v5546, %v5548
        %v5550 = vrot.slane %v5536, %v5549
        %v5551 = vcombine.low %v5543, %v5550
        %v5553 = vunpack.c.l.s4 1935823168
        %v5554 = vunpack.c.0.s8 %v5553
        %v5555 = vlaneseq
        %v5556 = vshrl.u32 %v5555, 7
        %v5557 = vsub.s32 %v5554, %v5556
        %v5558 = vrot.slane %v5551, %v5557
        %v5559 = vcombine.low %v3529, %v3543
        %v5560 = vcombine.low %v3536, %v3550
        %v5562 = vunpack.c.l.s4 1935823168
        %v5563 = vunpack.c.0.s8 %v5562
        %v5564 = vlaneseq
        %v5565 = vshrl.u32 %v5564, 7
        %v5566 = vsub.s32 %v5563, %v5565
        %v5567 = vrot.slane %v5559, %v5566
        %v5569 = vunpack.c.l.s4 1935823168
        %v5570 = vunpack.c.0.s8 %v5569
        %v5571 = vlaneseq
        %v5572 = vshrl.u32 %v5571, 7
        %v5573 = vsub.s32 %v5570, %v5572
        %v5574 = vrot.slane %v5560, %v5573
        %v5575 = vcombine.low %v5567, %v5574
        %v5577 = vunpack.c.l.s4 1935823168
        %v5578 = vunpack.c.0.s8 %v5577
        %v5579 = vlaneseq
        %v5580 = vshrl.u32 %v5579, 7
        %v5581 = vsub.s32 %v5578, %v5580
        %v5582 = vrot.slane %v5575, %v5581
        %v5583 = vcombine.low %v3557, %v3571
        %v5584 = vcombine.low %v3564, %v3578
        %v5586 = vunpack.c.l.s4 1935823168
        %v5587 = vunpack.c.0.s8 %v5586
        %v5588 = vlaneseq
        %v5589 = vshrl.u32 %v5588, 7
        %v5590 = vsub.s32 %v5587, %v5589
        %v5591 = vrot.slane %v5583, %v5590
        %v5593 = vunpack.c.l.s4 1935823168
        %v5594 = vunpack.c.0.s8 %v5593
        %v5595 = vlaneseq
        %v5596 = vshrl.u32 %v5595, 7
        %v5597 = vsub.s32 %v5594, %v5596
        %v5598 = vrot.slane %v5584, %v5597
        %v5599 = vcombine.low %v5591, %v5598
        %v5601 = vunpack.c.l.s4 1935823168
        %v5602 = vunpack.c.0.s8 %v5601
        %v5603 = vlaneseq
        %v5604 = vshrl.u32 %v5603, 7
        %v5605 = vsub.s32 %v5602, %v5604
        %v5606 = vrot.slane %v5599, %v5605
        %v5607 = vcombine.low %v3585, %v3599
        %v5608 = vcombine.low %v3592, %v3606
        %v5610 = vunpack.c.l.s4 1935823168
        %v5611 = vunpack.c.0.s8 %v5610
        %v5612 = vlaneseq
        %v5613 = vshrl.u32 %v5612, 7
        %v5614 = vsub.s32 %v5611, %v5613
        %v5615 = vrot.slane %v5607, %v5614
        %v5617 = vunpack.c.l.s4 1935823168
        %v5618 = vunpack.c.0.s8 %v5617
        %v5619 = vlaneseq
        %v5620 = vshrl.u32 %v5619, 7
        %v5621 = vsub.s32 %v5618, %v5620
        %v5622 = vrot.slane %v5608, %v5621
        %v5623 = vcombine.low %v5615, %v5622
        %v5625 = vunpack.c.l.s4 1935823168
        %v5626 = vunpack.c.0.s8 %v5625
        %v5627 = vlaneseq
        %v5628 = vshrl.u32 %v5627, 7
        %v5629 = vsub.s32 %v5626, %v5628
        %v5630 = vrot.slane %v5623, %v5629
        %v5631 = vcombine.low %v3613, %v3627
        %v5632 = vcombine.low %v3620, %v3634
        %v5634 = vunpack.c.l.s4 1935823168
        %v5635 = vunpack.c.0.s8 %v5634
        %v5636 = vlaneseq
        %v5637 = vshrl.u32 %v5636, 7
        %v5638 = vsub.s32 %v5635, %v5637
        %v5639 = vrot.slane %v5631, %v5638
        %v5641 = vunpack.c.l.s4 1935823168
        %v5642 = vunpack.c.0.s8 %v5641
        %v5643 = vlaneseq
        %v5644 = vshrl.u32 %v5643, 7
        %v5645 = vsub.s32 %v5642, %v5644
        %v5646 = vrot.slane %v5632, %v5645
        %v5647 = vcombine.low %v5639, %v5646
        %v5649 = vunpack.c.l.s4 1935823168
        %v5650 = vunpack.c.0.s8 %v5649
        %v5651 = vlaneseq
        %v5652 = vshrl.u32 %v5651, 7
        %v5653 = vsub.s32 %v5650, %v5652
        %v5654 = vrot.slane %v5647, %v5653
        %v5655 = vcombine.low %v3641, %v3655
        %v5656 = vcombine.low %v3648, %v3662
        %v5658 = vunpack.c.l.s4 1935823168
        %v5659 = vunpack.c.0.s8 %v5658
        %v5660 = vlaneseq
        %v5661 = vshrl.u32 %v5660, 7
        %v5662 = vsub.s32 %v5659, %v5661
        %v5663 = vrot.slane %v5655, %v5662
        %v5665 = vunpack.c.l.s4 1935823168
        %v5666 = vunpack.c.0.s8 %v5665
        %v5667 = vlaneseq
        %v5668 = vshrl.u32 %v5667, 7
        %v5669 = vsub.s32 %v5666, %v5668
        %v5670 = vrot.slane %v5656, %v5669
        %v5671 = vcombine.low %v5663, %v5670
        %v5673 = vunpack.c.l.s4 1935823168
        %v5674 = vunpack.c.0.s8 %v5673
        %v5675 = vlaneseq
        %v5676 = vshrl.u32 %v5675, 7
        %v5677 = vsub.s32 %v5674, %v5676
        %v5678 = vrot.slane %v5671, %v5677
        %v5679 = vcombine.low %v3669, %v3683
        %v5680 = vcombine.low %v3676, %v3690
        %v5682 = vunpack.c.l.s4 1935823168
        %v5683 = vunpack.c.0.s8 %v5682
        %v5684 = vlaneseq
        %v5685 = vshrl.u32 %v5684, 7
        %v5686 = vsub.s32 %v5683, %v5685
        %v5687 = vrot.slane %v5679, %v5686
        %v5689 = vunpack.c.l.s4 1935823168
        %v5690 = vunpack.c.0.s8 %v5689
        %v5691 = vlaneseq
        %v5692 = vshrl.u32 %v5691, 7
        %v5693 = vsub.s32 %v5690, %v5692
        %v5694 = vrot.slane %v5680, %v5693
        %v5695 = vcombine.low %v5687, %v5694
        %v5697 = vunpack.c.l.s4 1935823168
        %v5698 = vunpack.c.0.s8 %v5697
        %v5699 = vlaneseq
        %v5700 = vshrl.u32 %v5699, 7
        %v5701 = vsub.s32 %v5698, %v5700
        %v5702 = vrot.slane %v5695, %v5701
        %v5703 = vcombine.low %v3697, %v3711
        %v5704 = vcombine.low %v3704, %v3718
        %v5706 = vunpack.c.l.s4 1935823168
        %v5707 = vunpack.c.0.s8 %v5706
        %v5708 = vlaneseq
        %v5709 = vshrl.u32 %v5708, 7
        %v5710 = vsub.s32 %v5707, %v5709
        %v5711 = vrot.slane %v5703, %v5710
        %v5713 = vunpack.c.l.s4 1935823168
        %v5714 = vunpack.c.0.s8 %v5713
        %v5715 = vlaneseq
        %v5716 = vshrl.u32 %v5715, 7
        %v5717 = vsub.s32 %v5714, %v5716
        %v5718 = vrot.slane %v5704, %v5717
        %v5719 = vcombine.low %v5711, %v5718
        %v5721 = vunpack.c.l.s4 1935823168
        %v5722 = vunpack.c.0.s8 %v5721
        %v5723 = vlaneseq
        %v5724 = vshrl.u32 %v5723, 7
        %v5725 = vsub.s32 %v5722, %v5724
        %v5726 = vrot.slane %v5719, %v5725
        %v5727 = vcombine.low %v3725, %v3739
        %v5728 = vcombine.low %v3732, %v3746
        %v5730 = vunpack.c.l.s4 1935823168
        %v5731 = vunpack.c.0.s8 %v5730
        %v5732 = vlaneseq
        %v5733 = vshrl.u32 %v5732, 7
        %v5734 = vsub.s32 %v5731, %v5733
        %v5735 = vrot.slane %v5727, %v5734
        %v5737 = vunpack.c.l.s4 1935823168
        %v5738 = vunpack.c.0.s8 %v5737
        %v5739 = vlaneseq
        %v5740 = vshrl.u32 %v5739, 7
        %v5741 = vsub.s32 %v5738, %v5740
        %v5742 = vrot.slane %v5728, %v5741
        %v5743 = vcombine.low %v5735, %v5742
        %v5745 = vunpack.c.l.s4 1935823168
        %v5746 = vunpack.c.0.s8 %v5745
        %v5747 = vlaneseq
        %v5748 = vshrl.u32 %v5747, 7
        %v5749 = vsub.s32 %v5746, %v5748
        %v5750 = vrot.slane %v5743, %v5749
        %v5751 = vcombine.low %v3753, %v3767
        %v5752 = vcombine.low %v3760, %v3774
        %v5754 = vunpack.c.l.s4 1935823168
        %v5755 = vunpack.c.0.s8 %v5754
        %v5756 = vlaneseq
        %v5757 = vshrl.u32 %v5756, 7
        %v5758 = vsub.s32 %v5755, %v5757
        %v5759 = vrot.slane %v5751, %v5758
        %v5761 = vunpack.c.l.s4 1935823168
        %v5762 = vunpack.c.0.s8 %v5761
        %v5763 = vlaneseq
        %v5764 = vshrl.u32 %v5763, 7
        %v5765 = vsub.s32 %v5762, %v5764
        %v5766 = vrot.slane %v5752, %v5765
        %v5767 = vcombine.low %v5759, %v5766
        %v5769 = vunpack.c.l.s4 1935823168
        %v5770 = vunpack.c.0.s8 %v5769
        %v5771 = vlaneseq
        %v5772 = vshrl.u32 %v5771, 7
        %v5773 = vsub.s32 %v5770, %v5772
        %v5774 = vrot.slane %v5767, %v5773
        %v5775 = vcombine.low %v3781, %v3795
        %v5776 = vcombine.low %v3788, %v3802
        %v5778 = vunpack.c.l.s4 1935823168
        %v5779 = vunpack.c.0.s8 %v5778
        %v5780 = vlaneseq
        %v5781 = vshrl.u32 %v5780, 7
        %v5782 = vsub.s32 %v5779, %v5781
        %v5783 = vrot.slane %v5775, %v5782
        %v5785 = vunpack.c.l.s4 1935823168
        %v5786 = vunpack.c.0.s8 %v5785
        %v5787 = vlaneseq
        %v5788 = vshrl.u32 %v5787, 7
        %v5789 = vsub.s32 %v5786, %v5788
        %v5790 = vrot.slane %v5776, %v5789
        %v5791 = vcombine.low %v5783, %v5790
        %v5793 = vunpack.c.l.s4 1935823168
        %v5794 = vunpack.c.0.s8 %v5793
        %v5795 = vlaneseq
        %v5796 = vshrl.u32 %v5795, 7
        %v5797 = vsub.s32 %v5794, %v5796
        %v5798 = vrot.slane %v5791, %v5797
        %v5799 = vcombine.low %v3809, %v3823
        %v5800 = vcombine.low %v3816, %v3830
        %v5802 = vunpack.c.l.s4 1935823168
        %v5803 = vunpack.c.0.s8 %v5802
        %v5804 = vlaneseq
        %v5805 = vshrl.u32 %v5804, 7
        %v5806 = vsub.s32 %v5803, %v5805
        %v5807 = vrot.slane %v5799, %v5806
        %v5809 = vunpack.c.l.s4 1935823168
        %v5810 = vunpack.c.0.s8 %v5809
        %v5811 = vlaneseq
        %v5812 = vshrl.u32 %v5811, 7
        %v5813 = vsub.s32 %v5810, %v5812
        %v5814 = vrot.slane %v5800, %v5813
        %v5815 = vcombine.low %v5807, %v5814
        %v5817 = vunpack.c.l.s4 1935823168
        %v5818 = vunpack.c.0.s8 %v5817
        %v5819 = vlaneseq
        %v5820 = vshrl.u32 %v5819, 7
        %v5821 = vsub.s32 %v5818, %v5820
        %v5822 = vrot.slane %v5815, %v5821
        %v5823 = vcombine.low %v3837, %v3851
        %v5824 = vcombine.low %v3844, %v3858
        %v5826 = vunpack.c.l.s4 1935823168
        %v5827 = vunpack.c.0.s8 %v5826
        %v5828 = vlaneseq
        %v5829 = vshrl.u32 %v5828, 7
        %v5830 = vsub.s32 %v5827, %v5829
        %v5831 = vrot.slane %v5823, %v5830
        %v5833 = vunpack.c.l.s4 1935823168
        %v5834 = vunpack.c.0.s8 %v5833
        %v5835 = vlaneseq
        %v5836 = vshrl.u32 %v5835, 7
        %v5837 = vsub.s32 %v5834, %v5836
        %v5838 = vrot.slane %v5824, %v5837
        %v5839 = vcombine.low %v5831, %v5838
        %v5841 = vunpack.c.l.s4 1935823168
        %v5842 = vunpack.c.0.s8 %v5841
        %v5843 = vlaneseq
        %v5844 = vshrl.u32 %v5843, 7
        %v5845 = vsub.s32 %v5842, %v5844
        %v5846 = vrot.slane %v5839, %v5845
        %v5847 = vcombine.low %v3865, %v3879
        %v5848 = vcombine.low %v3872, %v3886
        %v5850 = vunpack.c.l.s4 1935823168
        %v5851 = vunpack.c.0.s8 %v5850
        %v5852 = vlaneseq
        %v5853 = vshrl.u32 %v5852, 7
        %v5854 = vsub.s32 %v5851, %v5853
        %v5855 = vrot.slane %v5847, %v5854
        %v5857 = vunpack.c.l.s4 1935823168
        %v5858 = vunpack.c.0.s8 %v5857
        %v5859 = vlaneseq
        %v5860 = vshrl.u32 %v5859, 7
        %v5861 = vsub.s32 %v5858, %v5860
        %v5862 = vrot.slane %v5848, %v5861
        %v5863 = vcombine.low %v5855, %v5862
        %v5865 = vunpack.c.l.s4 1935823168
        %v5866 = vunpack.c.0.s8 %v5865
        %v5867 = vlaneseq
        %v5868 = vshrl.u32 %v5867, 7
        %v5869 = vsub.s32 %v5866, %v5868
        %v5870 = vrot.slane %v5863, %v5869
        %v5871 = vcombine.low %v3893, %v3907
        %v5872 = vcombine.low %v3900, %v3914
        %v5874 = vunpack.c.l.s4 1935823168
        %v5875 = vunpack.c.0.s8 %v5874
        %v5876 = vlaneseq
        %v5877 = vshrl.u32 %v5876, 7
        %v5878 = vsub.s32 %v5875, %v5877
        %v5879 = vrot.slane %v5871, %v5878
        %v5881 = vunpack.c.l.s4 1935823168
        %v5882 = vunpack.c.0.s8 %v5881
        %v5883 = vlaneseq
        %v5884 = vshrl.u32 %v5883, 7
        %v5885 = vsub.s32 %v5882, %v5884
        %v5886 = vrot.slane %v5872, %v5885
        %v5887 = vcombine.low %v5879, %v5886
        %v5889 = vunpack.c.l.s4 1935823168
        %v5890 = vunpack.c.0.s8 %v5889
        %v5891 = vlaneseq
        %v5892 = vshrl.u32 %v5891, 7
        %v5893 = vsub.s32 %v5890, %v5892
        %v5894 = vrot.slane %v5887, %v5893
        %v5895 = vcombine.low %v3921, %v3935
        %v5896 = vcombine.low %v3928, %v3942
        %v5898 = vunpack.c.l.s4 1935823168
        %v5899 = vunpack.c.0.s8 %v5898
        %v5900 = vlaneseq
        %v5901 = vshrl.u32 %v5900, 7
        %v5902 = vsub.s32 %v5899, %v5901
        %v5903 = vrot.slane %v5895, %v5902
        %v5905 = vunpack.c.l.s4 1935823168
        %v5906 = vunpack.c.0.s8 %v5905
        %v5907 = vlaneseq
        %v5908 = vshrl.u32 %v5907, 7
        %v5909 = vsub.s32 %v5906, %v5908
        %v5910 = vrot.slane %v5896, %v5909
        %v5911 = vcombine.low %v5903, %v5910
        %v5913 = vunpack.c.l.s4 1935823168
        %v5914 = vunpack.c.0.s8 %v5913
        %v5915 = vlaneseq
        %v5916 = vshrl.u32 %v5915, 7
        %v5917 = vsub.s32 %v5914, %v5916
        %v5918 = vrot.slane %v5911, %v5917
        %v5919 = vcombine.low %v3949, %v3963
        %v5920 = vcombine.low %v3956, %v3970
        %v5922 = vunpack.c.l.s4 1935823168
        %v5923 = vunpack.c.0.s8 %v5922
        %v5924 = vlaneseq
        %v5925 = vshrl.u32 %v5924, 7
        %v5926 = vsub.s32 %v5923, %v5925
        %v5927 = vrot.slane %v5919, %v5926
        %v5929 = vunpack.c.l.s4 1935823168
        %v5930 = vunpack.c.0.s8 %v5929
        %v5931 = vlaneseq
        %v5932 = vshrl.u32 %v5931, 7
        %v5933 = vsub.s32 %v5930, %v5932
        %v5934 = vrot.slane %v5920, %v5933
        %v5935 = vcombine.low %v5927, %v5934
        %v5937 = vunpack.c.l.s4 1935823168
        %v5938 = vunpack.c.0.s8 %v5937
        %v5939 = vlaneseq
        %v5940 = vshrl.u32 %v5939, 7
        %v5941 = vsub.s32 %v5938, %v5940
        %v5942 = vrot.slane %v5935, %v5941
        %v5943 = vcombine.low %v3977, %v3991
        %v5944 = vcombine.low %v3984, %v3998
        %v5946 = vunpack.c.l.s4 1935823168
        %v5947 = vunpack.c.0.s8 %v5946
        %v5948 = vlaneseq
        %v5949 = vshrl.u32 %v5948, 7
        %v5950 = vsub.s32 %v5947, %v5949
        %v5951 = vrot.slane %v5943, %v5950
        %v5953 = vunpack.c.l.s4 1935823168
        %v5954 = vunpack.c.0.s8 %v5953
        %v5955 = vlaneseq
        %v5956 = vshrl.u32 %v5955, 7
        %v5957 = vsub.s32 %v5954, %v5956
        %v5958 = vrot.slane %v5944, %v5957
        %v5959 = vcombine.low %v5951, %v5958
        %v5961 = vunpack.c.l.s4 1935823168
        %v5962 = vunpack.c.0.s8 %v5961
        %v5963 = vlaneseq
        %v5964 = vshrl.u32 %v5963, 7
        %v5965 = vsub.s32 %v5962, %v5964
        %v5966 = vrot.slane %v5959, %v5965
        %v5967 = vcombine.low %v4005, %v4019
        %v5968 = vcombine.low %v4012, %v4026
        %v5970 = vunpack.c.l.s4 1935823168
        %v5971 = vunpack.c.0.s8 %v5970
        %v5972 = vlaneseq
        %v5973 = vshrl.u32 %v5972, 7
        %v5974 = vsub.s32 %v5971, %v5973
        %v5975 = vrot.slane %v5967, %v5974
        %v5977 = vunpack.c.l.s4 1935823168
        %v5978 = vunpack.c.0.s8 %v5977
        %v5979 = vlaneseq
        %v5980 = vshrl.u32 %v5979, 7
        %v5981 = vsub.s32 %v5978, %v5980
        %v5982 = vrot.slane %v5968, %v5981
        %v5983 = vcombine.low %v5975, %v5982
        %v5985 = vunpack.c.l.s4 1935823168
        %v5986 = vunpack.c.0.s8 %v5985
        %v5987 = vlaneseq
        %v5988 = vshrl.u32 %v5987, 7
        %v5989 = vsub.s32 %v5986, %v5988
        %v5990 = vrot.slane %v5983, %v5989
        %v5991 = vcombine.low %v4033, %v4047
        %v5992 = vcombine.low %v4040, %v4054
        %v5994 = vunpack.c.l.s4 1935823168
        %v5995 = vunpack.c.0.s8 %v5994
        %v5996 = vlaneseq
        %v5997 = vshrl.u32 %v5996, 7
        %v5998 = vsub.s32 %v5995, %v5997
        %v5999 = vrot.slane %v5991, %v5998
        %v6001 = vunpack.c.l.s4 1935823168
        %v6002 = vunpack.c.0.s8 %v6001
        %v6003 = vlaneseq
        %v6004 = vshrl.u32 %v6003, 7
        %v6005 = vsub.s32 %v6002, %v6004
        %v6006 = vrot.slane %v5992, %v6005
        %v6007 = vcombine.low %v5999, %v6006
        %v6009 = vunpack.c.l.s4 1935823168
        %v6010 = vunpack.c.0.s8 %v6009
        %v6011 = vlaneseq
        %v6012 = vshrl.u32 %v6011, 7
        %v6013 = vsub.s32 %v6010, %v6012
        %v6014 = vrot.slane %v6007, %v6013
        %v6015 = vcombine.low %v4061, %v4075
        %v6016 = vcombine.low %v4068, %v4082
        %v6018 = vunpack.c.l.s4 1935823168
        %v6019 = vunpack.c.0.s8 %v6018
        %v6020 = vlaneseq
        %v6021 = vshrl.u32 %v6020, 7
        %v6022 = vsub.s32 %v6019, %v6021
        %v6023 = vrot.slane %v6015, %v6022
        %v6025 = vunpack.c.l.s4 1935823168
        %v6026 = vunpack.c.0.s8 %v6025
        %v6027 = vlaneseq
        %v6028 = vshrl.u32 %v6027, 7
        %v6029 = vsub.s32 %v6026, %v6028
        %v6030 = vrot.slane %v6016, %v6029
        %v6031 = vcombine.low %v6023, %v6030
        %v6033 = vunpack.c.l.s4 1935823168
        %v6034 = vunpack.c.0.s8 %v6033
        %v6035 = vlaneseq
        %v6036 = vshrl.u32 %v6035, 7
        %v6037 = vsub.s32 %v6034, %v6036
        %v6038 = vrot.slane %v6031, %v6037
        %v6039 = vcombine.low %v4089, %v4103
        %v6040 = vcombine.low %v4096, %v4110
        %v6042 = vunpack.c.l.s4 1935823168
        %v6043 = vunpack.c.0.s8 %v6042
        %v6044 = vlaneseq
        %v6045 = vshrl.u32 %v6044, 7
        %v6046 = vsub.s32 %v6043, %v6045
        %v6047 = vrot.slane %v6039, %v6046
        %v6049 = vunpack.c.l.s4 1935823168
        %v6050 = vunpack.c.0.s8 %v6049
        %v6051 = vlaneseq
        %v6052 = vshrl.u32 %v6051, 7
        %v6053 = vsub.s32 %v6050, %v6052
        %v6054 = vrot.slane %v6040, %v6053
        %v6055 = vcombine.low %v6047, %v6054
        %v6057 = vunpack.c.l.s4 1935823168
        %v6058 = vunpack.c.0.s8 %v6057
        %v6059 = vlaneseq
        %v6060 = vshrl.u32 %v6059, 7
        %v6061 = vsub.s32 %v6058, %v6060
        %v6062 = vrot.slane %v6055, %v6061
        %v6063 = vcombine.low %v4117, %v4131
        %v6064 = vcombine.low %v4124, %v4138
        %v6066 = vunpack.c.l.s4 1935823168
        %v6067 = vunpack.c.0.s8 %v6066
        %v6068 = vlaneseq
        %v6069 = vshrl.u32 %v6068, 7
        %v6070 = vsub.s32 %v6067, %v6069
        %v6071 = vrot.slane %v6063, %v6070
        %v6073 = vunpack.c.l.s4 1935823168
        %v6074 = vunpack.c.0.s8 %v6073
        %v6075 = vlaneseq
        %v6076 = vshrl.u32 %v6075, 7
        %v6077 = vsub.s32 %v6074, %v6076
        %v6078 = vrot.slane %v6064, %v6077
        %v6079 = vcombine.low %v6071, %v6078
        %v6081 = vunpack.c.l.s4 1935823168
        %v6082 = vunpack.c.0.s8 %v6081
        %v6083 = vlaneseq
        %v6084 = vshrl.u32 %v6083, 7
        %v6085 = vsub.s32 %v6082, %v6084
        %v6086 = vrot.slane %v6079, %v6085
        %v6087 = vcombine.low %v4145, %v4159
        %v6088 = vcombine.low %v4152, %v4166
        %v6090 = vunpack.c.l.s4 1935823168
        %v6091 = vunpack.c.0.s8 %v6090
        %v6092 = vlaneseq
        %v6093 = vshrl.u32 %v6092, 7
        %v6094 = vsub.s32 %v6091, %v6093
        %v6095 = vrot.slane %v6087, %v6094
        %v6097 = vunpack.c.l.s4 1935823168
        %v6098 = vunpack.c.0.s8 %v6097
        %v6099 = vlaneseq
        %v6100 = vshrl.u32 %v6099, 7
        %v6101 = vsub.s32 %v6098, %v6100
        %v6102 = vrot.slane %v6088, %v6101
        %v6103 = vcombine.low %v6095, %v6102
        %v6105 = vunpack.c.l.s4 1935823168
        %v6106 = vunpack.c.0.s8 %v6105
        %v6107 = vlaneseq
        %v6108 = vshrl.u32 %v6107, 7
        %v6109 = vsub.s32 %v6106, %v6108
        %v6110 = vrot.slane %v6103, %v6109
        %v6111 = vcombine.low %v4173, %v4187
        %v6112 = vcombine.low %v4180, %v4194
        %v6114 = vunpack.c.l.s4 1935823168
        %v6115 = vunpack.c.0.s8 %v6114
        %v6116 = vlaneseq
        %v6117 = vshrl.u32 %v6116, 7
        %v6118 = vsub.s32 %v6115, %v6117
        %v6119 = vrot.slane %v6111, %v6118
        %v6121 = vunpack.c.l.s4 1935823168
        %v6122 = vunpack.c.0.s8 %v6121
        %v6123 = vlaneseq
        %v6124 = vshrl.u32 %v6123, 7
        %v6125 = vsub.s32 %v6122, %v6124
        %v6126 = vrot.slane %v6112, %v6125
        %v6127 = vcombine.low %v6119, %v6126
        %v6129 = vunpack.c.l.s4 1935823168
        %v6130 = vunpack.c.0.s8 %v6129
        %v6131 = vlaneseq
        %v6132 = vshrl.u32 %v6131, 7
        %v6133 = vsub.s32 %v6130, %v6132
        %v6134 = vrot.slane %v6127, %v6133
        %v6135 = vcombine.low %v4201, %v4215
        %v6136 = vcombine.low %v4208, %v4222
        %v6138 = vunpack.c.l.s4 1935823168
        %v6139 = vunpack.c.0.s8 %v6138
        %v6140 = vlaneseq
        %v6141 = vshrl.u32 %v6140, 7
        %v6142 = vsub.s32 %v6139, %v6141
        %v6143 = vrot.slane %v6135, %v6142
        %v6145 = vunpack.c.l.s4 1935823168
        %v6146 = vunpack.c.0.s8 %v6145
        %v6147 = vlaneseq
        %v6148 = vshrl.u32 %v6147, 7
        %v6149 = vsub.s32 %v6146, %v6148
        %v6150 = vrot.slane %v6136, %v6149
        %v6151 = vcombine.low %v6143, %v6150
        %v6153 = vunpack.c.l.s4 1935823168
        %v6154 = vunpack.c.0.s8 %v6153
        %v6155 = vlaneseq
        %v6156 = vshrl.u32 %v6155, 7
        %v6157 = vsub.s32 %v6154, %v6156
        %v6158 = vrot.slane %v6151, %v6157
        %v6159 = vcombine.low %v4229, %v4243
        %v6160 = vcombine.low %v4236, %v4250
        %v6162 = vunpack.c.l.s4 1935823168
        %v6163 = vunpack.c.0.s8 %v6162
        %v6164 = vlaneseq
        %v6165 = vshrl.u32 %v6164, 7
        %v6166 = vsub.s32 %v6163, %v6165
        %v6167 = vrot.slane %v6159, %v6166
        %v6169 = vunpack.c.l.s4 1935823168
        %v6170 = vunpack.c.0.s8 %v6169
        %v6171 = vlaneseq
        %v6172 = vshrl.u32 %v6171, 7
        %v6173 = vsub.s32 %v6170, %v6172
        %v6174 = vrot.slane %v6160, %v6173
        %v6175 = vcombine.low %v6167, %v6174
        %v6177 = vunpack.c.l.s4 1935823168
        %v6178 = vunpack.c.0.s8 %v6177
        %v6179 = vlaneseq
        %v6180 = vshrl.u32 %v6179, 7
        %v6181 = vsub.s32 %v6178, %v6180
        %v6182 = vrot.slane %v6175, %v6181
        %v6183 = vcombine.low %v4257, %v4271
        %v6184 = vcombine.low %v4264, %v4278
        %v6186 = vunpack.c.l.s4 1935823168
        %v6187 = vunpack.c.0.s8 %v6186
        %v6188 = vlaneseq
        %v6189 = vshrl.u32 %v6188, 7
        %v6190 = vsub.s32 %v6187, %v6189
        %v6191 = vrot.slane %v6183, %v6190
        %v6193 = vunpack.c.l.s4 1935823168
        %v6194 = vunpack.c.0.s8 %v6193
        %v6195 = vlaneseq
        %v6196 = vshrl.u32 %v6195, 7
        %v6197 = vsub.s32 %v6194, %v6196
        %v6198 = vrot.slane %v6184, %v6197
        %v6199 = vcombine.low %v6191, %v6198
        %v6201 = vunpack.c.l.s4 1935823168
        %v6202 = vunpack.c.0.s8 %v6201
        %v6203 = vlaneseq
        %v6204 = vshrl.u32 %v6203, 7
        %v6205 = vsub.s32 %v6202, %v6204
        %v6206 = vrot.slane %v6199, %v6205
        %v6207 = vcombine.low %v4285, %v4299
        %v6208 = vcombine.low %v4292, %v4306
        %v6210 = vunpack.c.l.s4 1935823168
        %v6211 = vunpack.c.0.s8 %v6210
        %v6212 = vlaneseq
        %v6213 = vshrl.u32 %v6212, 7
        %v6214 = vsub.s32 %v6211, %v6213
        %v6215 = vrot.slane %v6207, %v6214
        %v6217 = vunpack.c.l.s4 1935823168
        %v6218 = vunpack.c.0.s8 %v6217
        %v6219 = vlaneseq
        %v6220 = vshrl.u32 %v6219, 7
        %v6221 = vsub.s32 %v6218, %v6220
        %v6222 = vrot.slane %v6208, %v6221
        %v6223 = vcombine.low %v6215, %v6222
        %v6225 = vunpack.c.l.s4 1935823168
        %v6226 = vunpack.c.0.s8 %v6225
        %v6227 = vlaneseq
        %v6228 = vshrl.u32 %v6227, 7
        %v6229 = vsub.s32 %v6226, %v6228
        %v6230 = vrot.slane %v6223, %v6229
        %v6231 = vcombine.low %v4313, %v4327
        %v6232 = vcombine.low %v4320, %v4334
        %v6234 = vunpack.c.l.s4 1935823168
        %v6235 = vunpack.c.0.s8 %v6234
        %v6236 = vlaneseq
        %v6237 = vshrl.u32 %v6236, 7
        %v6238 = vsub.s32 %v6235, %v6237
        %v6239 = vrot.slane %v6231, %v6238
        %v6241 = vunpack.c.l.s4 1935823168
        %v6242 = vunpack.c.0.s8 %v6241
        %v6243 = vlaneseq
        %v6244 = vshrl.u32 %v6243, 7
        %v6245 = vsub.s32 %v6242, %v6244
        %v6246 = vrot.slane %v6232, %v6245
        %v6247 = vcombine.low %v6239, %v6246
        %v6249 = vunpack.c.l.s4 1935823168
        %v6250 = vunpack.c.0.s8 %v6249
        %v6251 = vlaneseq
        %v6252 = vshrl.u32 %v6251, 7
        %v6253 = vsub.s32 %v6250, %v6252
        %v6254 = vrot.slane %v6247, %v6253
        %v6255 = vcombine.low %v4341, %v4355
        %v6256 = vcombine.low %v4348, %v4362
        %v6258 = vunpack.c.l.s4 1935823168
        %v6259 = vunpack.c.0.s8 %v6258
        %v6260 = vlaneseq
        %v6261 = vshrl.u32 %v6260, 7
        %v6262 = vsub.s32 %v6259, %v6261
        %v6263 = vrot.slane %v6255, %v6262
        %v6265 = vunpack.c.l.s4 1935823168
        %v6266 = vunpack.c.0.s8 %v6265
        %v6267 = vlaneseq
        %v6268 = vshrl.u32 %v6267, 7
        %v6269 = vsub.s32 %v6266, %v6268
        %v6270 = vrot.slane %v6256, %v6269
        %v6271 = vcombine.low %v6263, %v6270
        %v6273 = vunpack.c.l.s4 1935823168
        %v6274 = vunpack.c.0.s8 %v6273
        %v6275 = vlaneseq
        %v6276 = vshrl.u32 %v6275, 7
        %v6277 = vsub.s32 %v6274, %v6276
        %v6278 = vrot.slane %v6271, %v6277
        %v6279 = vcombine.low %v4369, %v4383
        %v6280 = vcombine.low %v4376, %v4390
        %v6282 = vunpack.c.l.s4 1935823168
        %v6283 = vunpack.c.0.s8 %v6282
        %v6284 = vlaneseq
        %v6285 = vshrl.u32 %v6284, 7
        %v6286 = vsub.s32 %v6283, %v6285
        %v6287 = vrot.slane %v6279, %v6286
        %v6289 = vunpack.c.l.s4 1935823168
        %v6290 = vunpack.c.0.s8 %v6289
        %v6291 = vlaneseq
        %v6292 = vshrl.u32 %v6291, 7
        %v6293 = vsub.s32 %v6290, %v6292
        %v6294 = vrot.slane %v6280, %v6293
        %v6295 = vcombine.low %v6287, %v6294
        %v6297 = vunpack.c.l.s4 1935823168
        %v6298 = vunpack.c.0.s8 %v6297
        %v6299 = vlaneseq
        %v6300 = vshrl.u32 %v6299, 7
        %v6301 = vsub.s32 %v6298, %v6300
        %v6302 = vrot.slane %v6295, %v6301
        %v6303 = vcombine.low %v4397, %v4411
        %v6304 = vcombine.low %v4404, %v4418
        %v6306 = vunpack.c.l.s4 1935823168
        %v6307 = vunpack.c.0.s8 %v6306
        %v6308 = vlaneseq
        %v6309 = vshrl.u32 %v6308, 7
        %v6310 = vsub.s32 %v6307, %v6309
        %v6311 = vrot.slane %v6303, %v6310
        %v6313 = vunpack.c.l.s4 1935823168
        %v6314 = vunpack.c.0.s8 %v6313
        %v6315 = vlaneseq
        %v6316 = vshrl.u32 %v6315, 7
        %v6317 = vsub.s32 %v6314, %v6316
        %v6318 = vrot.slane %v6304, %v6317
        %v6319 = vcombine.low %v6311, %v6318
        %v6321 = vunpack.c.l.s4 1935823168
        %v6322 = vunpack.c.0.s8 %v6321
        %v6323 = vlaneseq
        %v6324 = vshrl.u32 %v6323, 7
        %v6325 = vsub.s32 %v6322, %v6324
        %v6326 = vrot.slane %v6319, %v6325
        %v6327 = vcombine.low %v4425, %v4439
        %v6328 = vcombine.low %v4432, %v4446
        %v6330 = vunpack.c.l.s4 1935823168
        %v6331 = vunpack.c.0.s8 %v6330
        %v6332 = vlaneseq
        %v6333 = vshrl.u32 %v6332, 7
        %v6334 = vsub.s32 %v6331, %v6333
        %v6335 = vrot.slane %v6327, %v6334
        %v6337 = vunpack.c.l.s4 1935823168
        %v6338 = vunpack.c.0.s8 %v6337
        %v6339 = vlaneseq
        %v6340 = vshrl.u32 %v6339, 7
        %v6341 = vsub.s32 %v6338, %v6340
        %v6342 = vrot.slane %v6328, %v6341
        %v6343 = vcombine.low %v6335, %v6342
        %v6345 = vunpack.c.l.s4 1935823168
        %v6346 = vunpack.c.0.s8 %v6345
        %v6347 = vlaneseq
        %v6348 = vshrl.u32 %v6347, 7
        %v6349 = vsub.s32 %v6346, %v6348
        %v6350 = vrot.slane %v6343, %v6349
        %v6351 = vcombine.low %v4453, %v4467
        %v6352 = vcombine.low %v4460, %v4474
        %v6354 = vunpack.c.l.s4 1935823168
        %v6355 = vunpack.c.0.s8 %v6354
        %v6356 = vlaneseq
        %v6357 = vshrl.u32 %v6356, 7
        %v6358 = vsub.s32 %v6355, %v6357
        %v6359 = vrot.slane %v6351, %v6358
        %v6361 = vunpack.c.l.s4 1935823168
        %v6362 = vunpack.c.0.s8 %v6361
        %v6363 = vlaneseq
        %v6364 = vshrl.u32 %v6363, 7
        %v6365 = vsub.s32 %v6362, %v6364
        %v6366 = vrot.slane %v6352, %v6365
        %v6367 = vcombine.low %v6359, %v6366
        %v6369 = vunpack.c.l.s4 1935823168
        %v6370 = vunpack.c.0.s8 %v6369
        %v6371 = vlaneseq
        %v6372 = vshrl.u32 %v6371, 7
        %v6373 = vsub.s32 %v6370, %v6372
        %v6374 = vrot.slane %v6367, %v6373
        %v6375 = vcombine.low %v4481, %v4495
        %v6376 = vcombine.low %v4488, %v4502
        %v6378 = vunpack.c.l.s4 1935823168
        %v6379 = vunpack.c.0.s8 %v6378
        %v6380 = vlaneseq
        %v6381 = vshrl.u32 %v6380, 7
        %v6382 = vsub.s32 %v6379, %v6381
        %v6383 = vrot.slane %v6375, %v6382
        %v6385 = vunpack.c.l.s4 1935823168
        %v6386 = vunpack.c.0.s8 %v6385
        %v6387 = vlaneseq
        %v6388 = vshrl.u32 %v6387, 7
        %v6389 = vsub.s32 %v6386, %v6388
        %v6390 = vrot.slane %v6376, %v6389
        %v6391 = vcombine.low %v6383, %v6390
        %v6393 = vunpack.c.l.s4 1935823168
        %v6394 = vunpack.c.0.s8 %v6393
        %v6395 = vlaneseq
        %v6396 = vshrl.u32 %v6395, 7
        %v6397 = vsub.s32 %v6394, %v6396
        %v6398 = vrot.slane %v6391, %v6397
        %v6399 = vcombine.low %v4509, %v4523
        %v6400 = vcombine.low %v4516, %v4530
        %v6402 = vunpack.c.l.s4 1935823168
        %v6403 = vunpack.c.0.s8 %v6402
        %v6404 = vlaneseq
        %v6405 = vshrl.u32 %v6404, 7
        %v6406 = vsub.s32 %v6403, %v6405
        %v6407 = vrot.slane %v6399, %v6406
        %v6409 = vunpack.c.l.s4 1935823168
        %v6410 = vunpack.c.0.s8 %v6409
        %v6411 = vlaneseq
        %v6412 = vshrl.u32 %v6411, 7
        %v6413 = vsub.s32 %v6410, %v6412
        %v6414 = vrot.slane %v6400, %v6413
        %v6415 = vcombine.low %v6407, %v6414
        %v6417 = vunpack.c.l.s4 1935823168
        %v6418 = vunpack.c.0.s8 %v6417
        %v6419 = vlaneseq
        %v6420 = vshrl.u32 %v6419, 7
        %v6421 = vsub.s32 %v6418, %v6420
        %v6422 = vrot.slane %v6415, %v6421
        %v6423 = vcombine.low %v4537, %v4551
        %v6424 = vcombine.low %v4544, %v4558
        %v6426 = vunpack.c.l.s4 1935823168
        %v6427 = vunpack.c.0.s8 %v6426
        %v6428 = vlaneseq
        %v6429 = vshrl.u32 %v6428, 7
        %v6430 = vsub.s32 %v6427, %v6429
        %v6431 = vrot.slane %v6423, %v6430
        %v6433 = vunpack.c.l.s4 1935823168
        %v6434 = vunpack.c.0.s8 %v6433
        %v6435 = vlaneseq
        %v6436 = vshrl.u32 %v6435, 7
        %v6437 = vsub.s32 %v6434, %v6436
        %v6438 = vrot.slane %v6424, %v6437
        %v6439 = vcombine.low %v6431, %v6438
        %v6441 = vunpack.c.l.s4 1935823168
        %v6442 = vunpack.c.0.s8 %v6441
        %v6443 = vlaneseq
        %v6444 = vshrl.u32 %v6443, 7
        %v6445 = vsub.s32 %v6442, %v6444
        %v6446 = vrot.slane %v6439, %v6445
        %v6447 = vcombine.low %v4565, %v4579
        %v6448 = vcombine.low %v4572, %v4586
        %v6450 = vunpack.c.l.s4 1935823168
        %v6451 = vunpack.c.0.s8 %v6450
        %v6452 = vlaneseq
        %v6453 = vshrl.u32 %v6452, 7
        %v6454 = vsub.s32 %v6451, %v6453
        %v6455 = vrot.slane %v6447, %v6454
        %v6457 = vunpack.c.l.s4 1935823168
        %v6458 = vunpack.c.0.s8 %v6457
        %v6459 = vlaneseq
        %v6460 = vshrl.u32 %v6459, 7
        %v6461 = vsub.s32 %v6458, %v6460
        %v6462 = vrot.slane %v6448, %v6461
        %v6463 = vcombine.low %v6455, %v6462
        %v6465 = vunpack.c.l.s4 1935823168
        %v6466 = vunpack.c.0.s8 %v6465
        %v6467 = vlaneseq
        %v6468 = vshrl.u32 %v6467, 7
        %v6469 = vsub.s32 %v6466, %v6468
        %v6470 = vrot.slane %v6463, %v6469
        %v6471 = vcombine.low %v4593, %v4607
        %v6472 = vcombine.low %v4600, %v4614
        %v6474 = vunpack.c.l.s4 1935823168
        %v6475 = vunpack.c.0.s8 %v6474
        %v6476 = vlaneseq
        %v6477 = vshrl.u32 %v6476, 7
        %v6478 = vsub.s32 %v6475, %v6477
        %v6479 = vrot.slane %v6471, %v6478
        %v6481 = vunpack.c.l.s4 1935823168
        %v6482 = vunpack.c.0.s8 %v6481
        %v6483 = vlaneseq
        %v6484 = vshrl.u32 %v6483, 7
        %v6485 = vsub.s32 %v6482, %v6484
        %v6486 = vrot.slane %v6472, %v6485
        %v6487 = vcombine.low %v6479, %v6486
        %v6489 = vunpack.c.l.s4 1935823168
        %v6490 = vunpack.c.0.s8 %v6489
        %v6491 = vlaneseq
        %v6492 = vshrl.u32 %v6491, 7
        %v6493 = vsub.s32 %v6490, %v6492
        %v6494 = vrot.slane %v6487, %v6493
        %v6495 = vcombine.low %v4621, %v4635
        %v6496 = vcombine.low %v4628, %v4642
        %v6498 = vunpack.c.l.s4 1935823168
        %v6499 = vunpack.c.0.s8 %v6498
        %v6500 = vlaneseq
        %v6501 = vshrl.u32 %v6500, 7
        %v6502 = vsub.s32 %v6499, %v6501
        %v6503 = vrot.slane %v6495, %v6502
        %v6505 = vunpack.c.l.s4 1935823168
        %v6506 = vunpack.c.0.s8 %v6505
        %v6507 = vlaneseq
        %v6508 = vshrl.u32 %v6507, 7
        %v6509 = vsub.s32 %v6506, %v6508
        %v6510 = vrot.slane %v6496, %v6509
        %v6511 = vcombine.low %v6503, %v6510
        %v6513 = vunpack.c.l.s4 1935823168
        %v6514 = vunpack.c.0.s8 %v6513
        %v6515 = vlaneseq
        %v6516 = vshrl.u32 %v6515, 7
        %v6517 = vsub.s32 %v6514, %v6516
        %v6518 = vrot.slane %v6511, %v6517
        %v6519 = vcombine.low %v4649, %v4663
        %v6520 = vcombine.low %v4656, %v4670
        %v6522 = vunpack.c.l.s4 1935823168
        %v6523 = vunpack.c.0.s8 %v6522
        %v6524 = vlaneseq
        %v6525 = vshrl.u32 %v6524, 7
        %v6526 = vsub.s32 %v6523, %v6525
        %v6527 = vrot.slane %v6519, %v6526
        %v6529 = vunpack.c.l.s4 1935823168
        %v6530 = vunpack.c.0.s8 %v6529
        %v6531 = vlaneseq
        %v6532 = vshrl.u32 %v6531, 7
        %v6533 = vsub.s32 %v6530, %v6532
        %v6534 = vrot.slane %v6520, %v6533
        %v6535 = vcombine.low %v6527, %v6534
        %v6537 = vunpack.c.l.s4 1935823168
        %v6538 = vunpack.c.0.s8 %v6537
        %v6539 = vlaneseq
        %v6540 = vshrl.u32 %v6539, 7
        %v6541 = vsub.s32 %v6538, %v6540
        %v6542 = vrot.slane %v6535, %v6541
        %v6543 = vcombine.low %v4677, %v4691
        %v6544 = vcombine.low %v4684, %v4698
        %v6546 = vunpack.c.l.s4 1935823168
        %v6547 = vunpack.c.0.s8 %v6546
        %v6548 = vlaneseq
        %v6549 = vshrl.u32 %v6548, 7
        %v6550 = vsub.s32 %v6547, %v6549
        %v6551 = vrot.slane %v6543, %v6550
        %v6553 = vunpack.c.l.s4 1935823168
        %v6554 = vunpack.c.0.s8 %v6553
        %v6555 = vlaneseq
        %v6556 = vshrl.u32 %v6555, 7
        %v6557 = vsub.s32 %v6554, %v6556
        %v6558 = vrot.slane %v6544, %v6557
        %v6559 = vcombine.low %v6551, %v6558
        %v6561 = vunpack.c.l.s4 1935823168
        %v6562 = vunpack.c.0.s8 %v6561
        %v6563 = vlaneseq
        %v6564 = vshrl.u32 %v6563, 7
        %v6565 = vsub.s32 %v6562, %v6564
        %v6566 = vrot.slane %v6559, %v6565
        %v6567 = vcombine.low %v4705, %v4719
        %v6568 = vcombine.low %v4712, %v4726
        %v6570 = vunpack.c.l.s4 1935823168
        %v6571 = vunpack.c.0.s8 %v6570
        %v6572 = vlaneseq
        %v6573 = vshrl.u32 %v6572, 7
        %v6574 = vsub.s32 %v6571, %v6573
        %v6575 = vrot.slane %v6567, %v6574
        %v6577 = vunpack.c.l.s4 1935823168
        %v6578 = vunpack.c.0.s8 %v6577
        %v6579 = vlaneseq
        %v6580 = vshrl.u32 %v6579, 7
        %v6581 = vsub.s32 %v6578, %v6580
        %v6582 = vrot.slane %v6568, %v6581
        %v6583 = vcombine.low %v6575, %v6582
        %v6585 = vunpack.c.l.s4 1935823168
        %v6586 = vunpack.c.0.s8 %v6585
        %v6587 = vlaneseq
        %v6588 = vshrl.u32 %v6587, 7
        %v6589 = vsub.s32 %v6586, %v6588
        %v6590 = vrot.slane %v6583, %v6589
        %v6591 = vcombine.low %v4733, %v4747
        %v6592 = vcombine.low %v4740, %v4754
        %v6594 = vunpack.c.l.s4 1935823168
        %v6595 = vunpack.c.0.s8 %v6594
        %v6596 = vlaneseq
        %v6597 = vshrl.u32 %v6596, 7
        %v6598 = vsub.s32 %v6595, %v6597
        %v6599 = vrot.slane %v6591, %v6598
        %v6601 = vunpack.c.l.s4 1935823168
        %v6602 = vunpack.c.0.s8 %v6601
        %v6603 = vlaneseq
        %v6604 = vshrl.u32 %v6603, 7
        %v6605 = vsub.s32 %v6602, %v6604
        %v6606 = vrot.slane %v6592, %v6605
        %v6607 = vcombine.low %v6599, %v6606
        %v6609 = vunpack.c.l.s4 1935823168
        %v6610 = vunpack.c.0.s8 %v6609
        %v6611 = vlaneseq
        %v6612 = vshrl.u32 %v6611, 7
        %v6613 = vsub.s32 %v6610, %v6612
        %v6614 = vrot.slane %v6607, %v6613
        %v6615 = vcombine.low %v4761, %v4775
        %v6616 = vcombine.low %v4768, %v4782
        %v6618 = vunpack.c.l.s4 1935823168
        %v6619 = vunpack.c.0.s8 %v6618
        %v6620 = vlaneseq
        %v6621 = vshrl.u32 %v6620, 7
        %v6622 = vsub.s32 %v6619, %v6621
        %v6623 = vrot.slane %v6615, %v6622
        %v6625 = vunpack.c.l.s4 1935823168
        %v6626 = vunpack.c.0.s8 %v6625
        %v6627 = vlaneseq
        %v6628 = vshrl.u32 %v6627, 7
        %v6629 = vsub.s32 %v6626, %v6628
        %v6630 = vrot.slane %v6616, %v6629
        %v6631 = vcombine.low %v6623, %v6630
        %v6633 = vunpack.c.l.s4 1935823168
        %v6634 = vunpack.c.0.s8 %v6633
        %v6635 = vlaneseq
        %v6636 = vshrl.u32 %v6635, 7
        %v6637 = vsub.s32 %v6634, %v6636
        %v6638 = vrot.slane %v6631, %v6637
        %v6639 = vcombine.low %v4789, %v4803
        %v6640 = vcombine.low %v4796, %v4810
        %v6642 = vunpack.c.l.s4 1935823168
        %v6643 = vunpack.c.0.s8 %v6642
        %v6644 = vlaneseq
        %v6645 = vshrl.u32 %v6644, 7
        %v6646 = vsub.s32 %v6643, %v6645
        %v6647 = vrot.slane %v6639, %v6646
        %v6649 = vunpack.c.l.s4 1935823168
        %v6650 = vunpack.c.0.s8 %v6649
        %v6651 = vlaneseq
        %v6652 = vshrl.u32 %v6651, 7
        %v6653 = vsub.s32 %v6650, %v6652
        %v6654 = vrot.slane %v6640, %v6653
        %v6655 = vcombine.low %v6647, %v6654
        %v6657 = vunpack.c.l.s4 1935823168
        %v6658 = vunpack.c.0.s8 %v6657
        %v6659 = vlaneseq
        %v6660 = vshrl.u32 %v6659, 7
        %v6661 = vsub.s32 %v6658, %v6660
        %v6662 = vrot.slane %v6655, %v6661
        %v6663 = vcombine.low %v4817, %v4831
        %v6664 = vcombine.low %v4824, %v4838
        %v6666 = vunpack.c.l.s4 1935823168
        %v6667 = vunpack.c.0.s8 %v6666
        %v6668 = vlaneseq
        %v6669 = vshrl.u32 %v6668, 7
        %v6670 = vsub.s32 %v6667, %v6669
        %v6671 = vrot.slane %v6663, %v6670
        %v6673 = vunpack.c.l.s4 1935823168
        %v6674 = vunpack.c.0.s8 %v6673
        %v6675 = vlaneseq
        %v6676 = vshrl.u32 %v6675, 7
        %v6677 = vsub.s32 %v6674, %v6676
        %v6678 = vrot.slane %v6664, %v6677
        %v6679 = vcombine.low %v6671, %v6678
        %v6681 = vunpack.c.l.s4 1935823168
        %v6682 = vunpack.c.0.s8 %v6681
        %v6683 = vlaneseq
        %v6684 = vshrl.u32 %v6683, 7
        %v6685 = vsub.s32 %v6682, %v6684
        %v6686 = vrot.slane %v6679, %v6685
        %v6687 = vcombine.low %v4845, %v4859
        %v6688 = vcombine.low %v4852, %v4866
        %v6690 = vunpack.c.l.s4 1935823168
        %v6691 = vunpack.c.0.s8 %v6690
        %v6692 = vlaneseq
        %v6693 = vshrl.u32 %v6692, 7
        %v6694 = vsub.s32 %v6691, %v6693
        %v6695 = vrot.slane %v6687, %v6694
        %v6697 = vunpack.c.l.s4 1935823168
        %v6698 = vunpack.c.0.s8 %v6697
        %v6699 = vlaneseq
        %v6700 = vshrl.u32 %v6699, 7
        %v6701 = vsub.s32 %v6698, %v6700
        %v6702 = vrot.slane %v6688, %v6701
        %v6703 = vcombine.low %v6695, %v6702
        %v6705 = vunpack.c.l.s4 1935823168
        %v6706 = vunpack.c.0.s8 %v6705
        %v6707 = vlaneseq
        %v6708 = vshrl.u32 %v6707, 7
        %v6709 = vsub.s32 %v6706, %v6708
        %v6710 = vrot.slane %v6703, %v6709
        %v6711 = vcombine.low %v4873, %v4887
        %v6712 = vcombine.low %v4880, %v4894
        %v6714 = vunpack.c.l.s4 1935823168
        %v6715 = vunpack.c.0.s8 %v6714
        %v6716 = vlaneseq
        %v6717 = vshrl.u32 %v6716, 7
        %v6718 = vsub.s32 %v6715, %v6717
        %v6719 = vrot.slane %v6711, %v6718
        %v6721 = vunpack.c.l.s4 1935823168
        %v6722 = vunpack.c.0.s8 %v6721
        %v6723 = vlaneseq
        %v6724 = vshrl.u32 %v6723, 7
        %v6725 = vsub.s32 %v6722, %v6724
        %v6726 = vrot.slane %v6712, %v6725
        %v6727 = vcombine.low %v6719, %v6726
        %v6729 = vunpack.c.l.s4 1935823168
        %v6730 = vunpack.c.0.s8 %v6729
        %v6731 = vlaneseq
        %v6732 = vshrl.u32 %v6731, 7
        %v6733 = vsub.s32 %v6730, %v6732
        %v6734 = vrot.slane %v6727, %v6733
        %v6735 = vcombine.low %v4901, %v4915
        %v6736 = vcombine.low %v4908, %v4922
        %v6738 = vunpack.c.l.s4 1935823168
        %v6739 = vunpack.c.0.s8 %v6738
        %v6740 = vlaneseq
        %v6741 = vshrl.u32 %v6740, 7
        %v6742 = vsub.s32 %v6739, %v6741
        %v6743 = vrot.slane %v6735, %v6742
        %v6745 = vunpack.c.l.s4 1935823168
        %v6746 = vunpack.c.0.s8 %v6745
        %v6747 = vlaneseq
        %v6748 = vshrl.u32 %v6747, 7
        %v6749 = vsub.s32 %v6746, %v6748
        %v6750 = vrot.slane %v6736, %v6749
        %v6751 = vcombine.low %v6743, %v6750
        %v6753 = vunpack.c.l.s4 1935823168
        %v6754 = vunpack.c.0.s8 %v6753
        %v6755 = vlaneseq
        %v6756 = vshrl.u32 %v6755, 7
        %v6757 = vsub.s32 %v6754, %v6756
        %v6758 = vrot.slane %v6751, %v6757
        %v6759 = vcombine.low %v4929, %v4943
        %v6760 = vcombine.low %v4936, %v4950
        %v6762 = vunpack.c.l.s4 1935823168
        %v6763 = vunpack.c.0.s8 %v6762
        %v6764 = vlaneseq
        %v6765 = vshrl.u32 %v6764, 7
        %v6766 = vsub.s32 %v6763, %v6765
        %v6767 = vrot.slane %v6759, %v6766
        %v6769 = vunpack.c.l.s4 1935823168
        %v6770 = vunpack.c.0.s8 %v6769
        %v6771 = vlaneseq
        %v6772 = vshrl.u32 %v6771, 7
        %v6773 = vsub.s32 %v6770, %v6772
        %v6774 = vrot.slane %v6760, %v6773
        %v6775 = vcombine.low %v6767, %v6774
        %v6777 = vunpack.c.l.s4 1935823168
        %v6778 = vunpack.c.0.s8 %v6777
        %v6779 = vlaneseq
        %v6780 = vshrl.u32 %v6779, 7
        %v6781 = vsub.s32 %v6778, %v6780
        %v6782 = vrot.slane %v6775, %v6781
        %v6783 = vcombine.low %v4957, %v4971
        %v6784 = vcombine.low %v4964, %v4978
        %v6786 = vunpack.c.l.s4 1935823168
        %v6787 = vunpack.c.0.s8 %v6786
        %v6788 = vlaneseq
        %v6789 = vshrl.u32 %v6788, 7
        %v6790 = vsub.s32 %v6787, %v6789
        %v6791 = vrot.slane %v6783, %v6790
        %v6793 = vunpack.c.l.s4 1935823168
        %v6794 = vunpack.c.0.s8 %v6793
        %v6795 = vlaneseq
        %v6796 = vshrl.u32 %v6795, 7
        %v6797 = vsub.s32 %v6794, %v6796
        %v6798 = vrot.slane %v6784, %v6797
        %v6799 = vcombine.low %v6791, %v6798
        %v6801 = vunpack.c.l.s4 1935823168
        %v6802 = vunpack.c.0.s8 %v6801
        %v6803 = vlaneseq
        %v6804 = vshrl.u32 %v6803, 7
        %v6805 = vsub.s32 %v6802, %v6804
        %v6806 = vrot.slane %v6799, %v6805
        %v6807 = vcombine.low %v4985, %v4999
        %v6808 = vcombine.low %v4992, %v5006
        %v6810 = vunpack.c.l.s4 1935823168
        %v6811 = vunpack.c.0.s8 %v6810
        %v6812 = vlaneseq
        %v6813 = vshrl.u32 %v6812, 7
        %v6814 = vsub.s32 %v6811, %v6813
        %v6815 = vrot.slane %v6807, %v6814
        %v6817 = vunpack.c.l.s4 1935823168
        %v6818 = vunpack.c.0.s8 %v6817
        %v6819 = vlaneseq
        %v6820 = vshrl.u32 %v6819, 7
        %v6821 = vsub.s32 %v6818, %v6820
        %v6822 = vrot.slane %v6808, %v6821
        %v6823 = vcombine.low %v6815, %v6822
        %v6825 = vunpack.c.l.s4 1935823168
        %v6826 = vunpack.c.0.s8 %v6825
        %v6827 = vlaneseq
        %v6828 = vshrl.u32 %v6827, 7
        %v6829 = vsub.s32 %v6826, %v6828
        %v6830 = vrot.slane %v6823, %v6829
        %v6831 = vcombine.low %v5013, %v5027
        %v6832 = vcombine.low %v5020, %v5034
        %v6834 = vunpack.c.l.s4 1935823168
        %v6835 = vunpack.c.0.s8 %v6834
        %v6836 = vlaneseq
        %v6837 = vshrl.u32 %v6836, 7
        %v6838 = vsub.s32 %v6835, %v6837
        %v6839 = vrot.slane %v6831, %v6838
        %v6841 = vunpack.c.l.s4 1935823168
        %v6842 = vunpack.c.0.s8 %v6841
        %v6843 = vlaneseq
        %v6844 = vshrl.u32 %v6843, 7
        %v6845 = vsub.s32 %v6842, %v6844
        %v6846 = vrot.slane %v6832, %v6845
        %v6847 = vcombine.low %v6839, %v6846
        %v6849 = vunpack.c.l.s4 1935823168
        %v6850 = vunpack.c.0.s8 %v6849
        %v6851 = vlaneseq
        %v6852 = vshrl.u32 %v6851, 7
        %v6853 = vsub.s32 %v6850, %v6852
        %v6854 = vrot.slane %v6847, %v6853
        %v6855 = vcombine.low %v5041, %v5055
        %v6856 = vcombine.low %v5048, %v5062
        %v6858 = vunpack.c.l.s4 1935823168
        %v6859 = vunpack.c.0.s8 %v6858
        %v6860 = vlaneseq
        %v6861 = vshrl.u32 %v6860, 7
        %v6862 = vsub.s32 %v6859, %v6861
        %v6863 = vrot.slane %v6855, %v6862
        %v6865 = vunpack.c.l.s4 1935823168
        %v6866 = vunpack.c.0.s8 %v6865
        %v6867 = vlaneseq
        %v6868 = vshrl.u32 %v6867, 7
        %v6869 = vsub.s32 %v6866, %v6868
        %v6870 = vrot.slane %v6856, %v6869
        %v6871 = vcombine.low %v6863, %v6870
        %v6873 = vunpack.c.l.s4 1935823168
        %v6874 = vunpack.c.0.s8 %v6873
        %v6875 = vlaneseq
        %v6876 = vshrl.u32 %v6875, 7
        %v6877 = vsub.s32 %v6874, %v6876
        %v6878 = vrot.slane %v6871, %v6877
        %v6879 = vcombine.low %v5069, %v5083
        %v6880 = vcombine.low %v5076, %v5090
        %v6882 = vunpack.c.l.s4 1935823168
        %v6883 = vunpack.c.0.s8 %v6882
        %v6884 = vlaneseq
        %v6885 = vshrl.u32 %v6884, 7
        %v6886 = vsub.s32 %v6883, %v6885
        %v6887 = vrot.slane %v6879, %v6886
        %v6889 = vunpack.c.l.s4 1935823168
        %v6890 = vunpack.c.0.s8 %v6889
        %v6891 = vlaneseq
        %v6892 = vshrl.u32 %v6891, 7
        %v6893 = vsub.s32 %v6890, %v6892
        %v6894 = vrot.slane %v6880, %v6893
        %v6895 = vcombine.low %v6887, %v6894
        %v6897 = vunpack.c.l.s4 1935823168
        %v6898 = vunpack.c.0.s8 %v6897
        %v6899 = vlaneseq
        %v6900 = vshrl.u32 %v6899, 7
        %v6901 = vsub.s32 %v6898, %v6900
        %v6902 = vrot.slane %v6895, %v6901
        %v6903 = vcombine.low %v5097, %v5111
        %v6904 = vcombine.low %v5104, %v5118
        %v6906 = vunpack.c.l.s4 1935823168
        %v6907 = vunpack.c.0.s8 %v6906
        %v6908 = vlaneseq
        %v6909 = vshrl.u32 %v6908, 7
        %v6910 = vsub.s32 %v6907, %v6909
        %v6911 = vrot.slane %v6903, %v6910
        %v6913 = vunpack.c.l.s4 1935823168
        %v6914 = vunpack.c.0.s8 %v6913
        %v6915 = vlaneseq
        %v6916 = vshrl.u32 %v6915, 7
        %v6917 = vsub.s32 %v6914, %v6916
        %v6918 = vrot.slane %v6904, %v6917
        %v6919 = vcombine.low %v6911, %v6918
        %v6921 = vunpack.c.l.s4 1935823168
        %v6922 = vunpack.c.0.s8 %v6921
        %v6923 = vlaneseq
        %v6924 = vshrl.u32 %v6923, 7
        %v6925 = vsub.s32 %v6922, %v6924
        %v6926 = vrot.slane %v6919, %v6925
        %v6927 = vcombine.low %v5125, %v5139
        %v6928 = vcombine.low %v5132, %v5146
        %v6930 = vunpack.c.l.s4 1935823168
        %v6931 = vunpack.c.0.s8 %v6930
        %v6932 = vlaneseq
        %v6933 = vshrl.u32 %v6932, 7
        %v6934 = vsub.s32 %v6931, %v6933
        %v6935 = vrot.slane %v6927, %v6934
        %v6937 = vunpack.c.l.s4 1935823168
        %v6938 = vunpack.c.0.s8 %v6937
        %v6939 = vlaneseq
        %v6940 = vshrl.u32 %v6939, 7
        %v6941 = vsub.s32 %v6938, %v6940
        %v6942 = vrot.slane %v6928, %v6941
        %v6943 = vcombine.low %v6935, %v6942
        %v6945 = vunpack.c.l.s4 1935823168
        %v6946 = vunpack.c.0.s8 %v6945
        %v6947 = vlaneseq
        %v6948 = vshrl.u32 %v6947, 7
        %v6949 = vsub.s32 %v6946, %v6948
        %v6950 = vrot.slane %v6943, %v6949
        %v6951 = vcombine.low %v5153, %v5167
        %v6952 = vcombine.low %v5160, %v5174
        %v6954 = vunpack.c.l.s4 1935823168
        %v6955 = vunpack.c.0.s8 %v6954
        %v6956 = vlaneseq
        %v6957 = vshrl.u32 %v6956, 7
        %v6958 = vsub.s32 %v6955, %v6957
        %v6959 = vrot.slane %v6951, %v6958
        %v6961 = vunpack.c.l.s4 1935823168
        %v6962 = vunpack.c.0.s8 %v6961
        %v6963 = vlaneseq
        %v6964 = vshrl.u32 %v6963, 7
        %v6965 = vsub.s32 %v6962, %v6964
        %v6966 = vrot.slane %v6952, %v6965
        %v6967 = vcombine.low %v6959, %v6966
        %v6969 = vunpack.c.l.s4 1935823168
        %v6970 = vunpack.c.0.s8 %v6969
        %v6971 = vlaneseq
        %v6972 = vshrl.u32 %v6971, 7
        %v6973 = vsub.s32 %v6970, %v6972
        %v6974 = vrot.slane %v6967, %v6973
        %v6975 = vcombine.low %v5181, %v5195
        %v6976 = vcombine.low %v5188, %v5202
        %v6978 = vunpack.c.l.s4 1935823168
        %v6979 = vunpack.c.0.s8 %v6978
        %v6980 = vlaneseq
        %v6981 = vshrl.u32 %v6980, 7
        %v6982 = vsub.s32 %v6979, %v6981
        %v6983 = vrot.slane %v6975, %v6982
        %v6985 = vunpack.c.l.s4 1935823168
        %v6986 = vunpack.c.0.s8 %v6985
        %v6987 = vlaneseq
        %v6988 = vshrl.u32 %v6987, 7
        %v6989 = vsub.s32 %v6986, %v6988
        %v6990 = vrot.slane %v6976, %v6989
        %v6991 = vcombine.low %v6983, %v6990
        %v6993 = vunpack.c.l.s4 1935823168
        %v6994 = vunpack.c.0.s8 %v6993
        %v6995 = vlaneseq
        %v6996 = vshrl.u32 %v6995, 7
        %v6997 = vsub.s32 %v6994, %v6996
        %v6998 = vrot.slane %v6991, %v6997
        %v6999 = vcombine.low %v5209, %v5223
        %v7000 = vcombine.low %v5216, %v5230
        %v7002 = vunpack.c.l.s4 1935823168
        %v7003 = vunpack.c.0.s8 %v7002
        %v7004 = vlaneseq
        %v7005 = vshrl.u32 %v7004, 7
        %v7006 = vsub.s32 %v7003, %v7005
        %v7007 = vrot.slane %v6999, %v7006
        %v7009 = vunpack.c.l.s4 1935823168
        %v7010 = vunpack.c.0.s8 %v7009
        %v7011 = vlaneseq
        %v7012 = vshrl.u32 %v7011, 7
        %v7013 = vsub.s32 %v7010, %v7012
        %v7014 = vrot.slane %v7000, %v7013
        %v7015 = vcombine.low %v7007, %v7014
        %v7017 = vunpack.c.l.s4 1935823168
        %v7018 = vunpack.c.0.s8 %v7017
        %v7019 = vlaneseq
        %v7020 = vshrl.u32 %v7019, 7
        %v7021 = vsub.s32 %v7018, %v7020
        %v7022 = vrot.slane %v7015, %v7021
        %7087 = vst [vmem:[%s242] sm:$0xf] %v5510
        %7088 = vst [vmem:[%s242 + $0x4] sm:$0xf] %v5534
        %7089 = vst [vmem:[%s242 + $0x8] sm:$0xf] %v5558
        %7090 = vst [vmem:[%s242 + $0xc] sm:$0xf] %v5582
        %7091 = vst [vmem:[%s242 + $0x20] sm:$0xf] %v5606
        %7092 = vst [vmem:[%s242 + $0x24] sm:$0xf] %v5630
        %7093 = vst [vmem:[%s242 + $0x28] sm:$0xf] %v5654
        %7094 = vst [vmem:[%s242 + $0x2c] sm:$0xf] %v5678
        %7095 = vst [vmem:[%s242 + $0x40] sm:$0xf] %v5702
        %7096 = vst [vmem:[%s242 + $0x44] sm:$0xf] %v5726
        %7097 = vst [vmem:[%s242 + $0x48] sm:$0xf] %v5750
        %7098 = vst [vmem:[%s242 + $0x4c] sm:$0xf] %v5774
        %7099 = vst [vmem:[%s242 + $0x60] sm:$0xf] %v5798
        %7100 = vst [vmem:[%s242 + $0x64] sm:$0xf] %v5822
        %7101 = vst [vmem:[%s242 + $0x68] sm:$0xf] %v5846
        %7102 = vst [vmem:[%s242 + $0x6c] sm:$0xf] %v5870
        %7103 = vst [vmem:[%s242 + $0x80] sm:$0xf] %v5894
        %7104 = vst [vmem:[%s242 + $0x84] sm:$0xf] %v5918
        %7105 = vst [vmem:[%s242 + $0x88] sm:$0xf] %v5942
        %7106 = vst [vmem:[%s242 + $0x8c] sm:$0xf] %v5966
        %7107 = vst [vmem:[%s242 + $0xa0] sm:$0xf] %v5990
        %7108 = vst [vmem:[%s242 + $0xa4] sm:$0xf] %v6014
        %7109 = vst [vmem:[%s242 + $0xa8] sm:$0xf] %v6038
        %7110 = vst [vmem:[%s242 + $0xac] sm:$0xf] %v6062
        %7111 = vst [vmem:[%s242 + $0xc0] sm:$0xf] %v6086
        %7112 = vst [vmem:[%s242 + $0xc4] sm:$0xf] %v6110
        %7113 = vst [vmem:[%s242 + $0xc8] sm:$0xf] %v6134
        %7114 = vst [vmem:[%s242 + $0xcc] sm:$0xf] %v6158
        %7115 = vst [vmem:[%s242 + $0xe0] sm:$0xf] %v6182
        %7116 = vst [vmem:[%s242 + $0xe4] sm:$0xf] %v6206
        %7117 = vst [vmem:[%s242 + $0xe8] sm:$0xf] %v6230
        %7118 = vst [vmem:[%s242 + $0xec] sm:$0xf] %v6254
        %7119 = vst [vmem:[%s242 + $0x100] sm:$0xf] %v6278
        %7120 = vst [vmem:[%s242 + $0x104] sm:$0xf] %v6302
        %7121 = vst [vmem:[%s242 + $0x108] sm:$0xf] %v6326
        %7122 = vst [vmem:[%s242 + $0x10c] sm:$0xf] %v6350
        %7123 = vst [vmem:[%s242 + $0x120] sm:$0xf] %v6374
        %7124 = vst [vmem:[%s242 + $0x124] sm:$0xf] %v6398
        %7125 = vst [vmem:[%s242 + $0x128] sm:$0xf] %v6422
        %7126 = vst [vmem:[%s242 + $0x12c] sm:$0xf] %v6446
        %7127 = vst [vmem:[%s242 + $0x140] sm:$0xf] %v6470
        %7128 = vst [vmem:[%s242 + $0x144] sm:$0xf] %v6494
        %7129 = vst [vmem:[%s242 + $0x148] sm:$0xf] %v6518
        %7130 = vst [vmem:[%s242 + $0x14c] sm:$0xf] %v6542
        %7131 = vst [vmem:[%s242 + $0x160] sm:$0xf] %v6566
        %7132 = vst [vmem:[%s242 + $0x164] sm:$0xf] %v6590
        %7133 = vst [vmem:[%s242 + $0x168] sm:$0xf] %v6614
        %7134 = vst [vmem:[%s242 + $0x16c] sm:$0xf] %v6638
        %7135 = vst [vmem:[%s242 + $0x180] sm:$0xf] %v6662
        %7136 = vst [vmem:[%s242 + $0x184] sm:$0xf] %v6686
        %7137 = vst [vmem:[%s242 + $0x188] sm:$0xf] %v6710
        %7138 = vst [vmem:[%s242 + $0x18c] sm:$0xf] %v6734
        %7139 = vst [vmem:[%s242 + $0x1a0] sm:$0xf] %v6758
        %7140 = vst [vmem:[%s242 + $0x1a4] sm:$0xf] %v6782
        %7141 = vst [vmem:[%s242 + $0x1a8] sm:$0xf] %v6806
        %7142 = vst [vmem:[%s242 + $0x1ac] sm:$0xf] %v6830
        %7143 = vst [vmem:[%s242 + $0x1c0] sm:$0xf] %v6854
        %7144 = vst [vmem:[%s242 + $0x1c4] sm:$0xf] %v6878
        %7145 = vst [vmem:[%s242 + $0x1c8] sm:$0xf] %v6902
        %7146 = vst [vmem:[%s242 + $0x1cc] sm:$0xf] %v6926
        %7147 = vst [vmem:[%s242 + $0x1e0] sm:$0xf] %v6950
        %7148 = vst [vmem:[%s242 + $0x1e4] sm:$0xf] %v6974
        %7149 = vst [vmem:[%s242 + $0x1e8] sm:$0xf] %v6998
        %7150 = vst [vmem:[%s242 + $0x1ec] sm:$0xf] %v7022
        %s7151 = scalar_lea.vmem %s242, 16 [#allocation8]
        %7152 = vst [vmem:[%s7151] sm:$0xf] %v5510
        %7153 = vst [vmem:[%s7151 + $0x4] sm:$0xf] %v5534
        %7154 = vst [vmem:[%s7151 + $0x8] sm:$0xf] %v5558
        %7155 = vst [vmem:[%s7151 + $0xc] sm:$0xf] %v5582
        %7156 = vst [vmem:[%s7151 + $0x20] sm:$0xf] %v5606
        %7157 = vst [vmem:[%s7151 + $0x24] sm:$0xf] %v5630
        %7158 = vst [vmem:[%s7151 + $0x28] sm:$0xf] %v5654
        %7159 = vst [vmem:[%s7151 + $0x2c] sm:$0xf] %v5678
        %7160 = vst [vmem:[%s7151 + $0x40] sm:$0xf] %v5702
        %7161 = vst [vmem:[%s7151 + $0x44] sm:$0xf] %v5726
        %7162 = vst [vmem:[%s7151 + $0x48] sm:$0xf] %v5750
        %7163 = vst [vmem:[%s7151 + $0x4c] sm:$0xf] %v5774
        %7164 = vst [vmem:[%s7151 + $0x60] sm:$0xf] %v5798
        %7165 = vst [vmem:[%s7151 + $0x64] sm:$0xf] %v5822
        %7166 = vst [vmem:[%s7151 + $0x68] sm:$0xf] %v5846
        %7167 = vst [vmem:[%s7151 + $0x6c] sm:$0xf] %v5870
        %7168 = vst [vmem:[%s7151 + $0x80] sm:$0xf] %v5894
        %7169 = vst [vmem:[%s7151 + $0x84] sm:$0xf] %v5918
        %7170 = vst [vmem:[%s7151 + $0x88] sm:$0xf] %v5942
        %7171 = vst [vmem:[%s7151 + $0x8c] sm:$0xf] %v5966
        %7172 = vst [vmem:[%s7151 + $0xa0] sm:$0xf] %v5990
        %7173 = vst [vmem:[%s7151 + $0xa4] sm:$0xf] %v6014
        %7174 = vst [vmem:[%s7151 + $0xa8] sm:$0xf] %v6038
        %7175 = vst [vmem:[%s7151 + $0xac] sm:$0xf] %v6062
        %7176 = vst [vmem:[%s7151 + $0xc0] sm:$0xf] %v6086
        %7177 = vst [vmem:[%s7151 + $0xc4] sm:$0xf] %v6110
        %7178 = vst [vmem:[%s7151 + $0xc8] sm:$0xf] %v6134
        %7179 = vst [vmem:[%s7151 + $0xcc] sm:$0xf] %v6158
        %7180 = vst [vmem:[%s7151 + $0xe0] sm:$0xf] %v6182
        %7181 = vst [vmem:[%s7151 + $0xe4] sm:$0xf] %v6206
        %7182 = vst [vmem:[%s7151 + $0xe8] sm:$0xf] %v6230
        %7183 = vst [vmem:[%s7151 + $0xec] sm:$0xf] %v6254
        %7184 = vst [vmem:[%s7151 + $0x100] sm:$0xf] %v6278
        %7185 = vst [vmem:[%s7151 + $0x104] sm:$0xf] %v6302
        %7186 = vst [vmem:[%s7151 + $0x108] sm:$0xf] %v6326
        %7187 = vst [vmem:[%s7151 + $0x10c] sm:$0xf] %v6350
        %7188 = vst [vmem:[%s7151 + $0x120] sm:$0xf] %v6374
        %7189 = vst [vmem:[%s7151 + $0x124] sm:$0xf] %v6398
        %7190 = vst [vmem:[%s7151 + $0x128] sm:$0xf] %v6422
        %7191 = vst [vmem:[%s7151 + $0x12c] sm:$0xf] %v6446
        %7192 = vst [vmem:[%s7151 + $0x140] sm:$0xf] %v6470
        %7193 = vst [vmem:[%s7151 + $0x144] sm:$0xf] %v6494
        %7194 = vst [vmem:[%s7151 + $0x148] sm:$0xf] %v6518
        %7195 = vst [vmem:[%s7151 + $0x14c] sm:$0xf] %v6542
        %7196 = vst [vmem:[%s7151 + $0x160] sm:$0xf] %v6566
        %7197 = vst [vmem:[%s7151 + $0x164] sm:$0xf] %v6590
        %7198 = vst [vmem:[%s7151 + $0x168] sm:$0xf] %v6614
        %7199 = vst [vmem:[%s7151 + $0x16c] sm:$0xf] %v6638
        %7200 = vst [vmem:[%s7151 + $0x180] sm:$0xf] %v6662
        %7201 = vst [vmem:[%s7151 + $0x184] sm:$0xf] %v6686
        %7202 = vst [vmem:[%s7151 + $0x188] sm:$0xf] %v6710
        %7203 = vst [vmem:[%s7151 + $0x18c] sm:$0xf] %v6734
        %7204 = vst [vmem:[%s7151 + $0x1a0] sm:$0xf] %v6758
        %7205 = vst [vmem:[%s7151 + $0x1a4] sm:$0xf] %v6782
        %7206 = vst [vmem:[%s7151 + $0x1a8] sm:$0xf] %v6806
        %7207 = vst [vmem:[%s7151 + $0x1ac] sm:$0xf] %v6830
        %7208 = vst [vmem:[%s7151 + $0x1c0] sm:$0xf] %v6854
        %7209 = vst [vmem:[%s7151 + $0x1c4] sm:$0xf] %v6878
        %7210 = vst [vmem:[%s7151 + $0x1c8] sm:$0xf] %v6902
        %7211 = vst [vmem:[%s7151 + $0x1cc] sm:$0xf] %v6926
        %7212 = vst [vmem:[%s7151 + $0x1e0] sm:$0xf] %v6950
        %7213 = vst [vmem:[%s7151 + $0x1e4] sm:$0xf] %v6974
        %7214 = vst [vmem:[%s7151 + $0x1e8] sm:$0xf] %v6998
        %7215 = vst [vmem:[%s7151 + $0x1ec] sm:$0xf] %v7022
        %s7216 = sand.u32 %s102, 1
        %s7217 = scalar_lea.sflag [#allocation4], %s7216
        %s7218 = sand.u32 %s102, 1
        %s7219 = smul.addr %s7218, 128
        %s7220 = scalar_lea.vmem [#allocation7], %s7219
        %s7221 = sand.u32 %s128, 1
        %s7222 = scalar_lea.sflag [#allocation9], %s7221
        %s7223 = sand.u32 %s128, 1
        %s7224 = smul.addr %s7223, 512
        %s7225 = scalar_lea.vmem [#allocation8], %s7224
        // Predicated region
        $region41: #{tpu_custom_call.1} parent=31 // pred_check
          %p7226 = pneg %p112
        $region42: #{tpu_custom_call.1} parent=31 // pred_check_branch
          %7228 = sbr.rel (%p7226) target = $region44
        $region43: #{tpu_custom_call.1} parent=31 // pred_region
          %s7229 = smul.u32 32, %s26
          %s7231 = ssub.s32 2048, 2048
          %7232 = vsyncadd %s7217, %s7231
          %s7233 = smul.addr %s7229, 64
          %s7234 = scalar_lea.hbm %s3, %s7233
          %s7235 = sshll.u32 %s7220, 4
          %s7236 = int_to_ptr.vmem [resolvable:$true] %s7235
          %7241 = dma.vmem_to_hbm [thread:$0]  %s7236, 2048, %s7234, %s7217, 64, 64, 4
        $region44: #{tpu_custom_call.1} parent=31 // pred_fallthru
          _
        // Predicated region
        $region45: #{tpu_custom_call.1} parent=31 // pred_check
          %p7242 = pneg %p138
        $region46: #{tpu_custom_call.1} parent=31 // pred_check_branch
          %7244 = sbr.rel (%p7242) target = $region48
        $region47: #{tpu_custom_call.1} parent=31 // pred_region
          %s7245 = smul.u32 16, %s26
          %s7247 = ssub.s32 8192, 8192
          %7248 = vsyncadd %s7222, %s7247
          %s7249 = smul.addr %s7245, 8
          %s7250 = smul.addr %s7249, 64
          %s7251 = scalar_lea.hbm %s4, %s7250
          %s7252 = sshll.u32 %s7225, 4
          %s7253 = int_to_ptr.vmem [resolvable:$true] %s7252
          %7258 = dma.vmem_to_hbm [thread:$0]  %s7253, 8192, %s7251, %s7222, 64, 64, 4
        $region48: #{tpu_custom_call.1} parent=31 // pred_fallthru
          _
      $region32: #{tpu_custom_call.1} parent=5 // pred_fallthru
        _
      %p7259 = scmp.le.s32.totalorder 2, %s21
      // Predicated region
      $region49: #{tpu_custom_call.1} parent=5 // pred_check
        %p7260 = pneg %p7259
      $region50: #{tpu_custom_call.1} parent=5 // pred_check_branch
        %7262 = sbr.rel (%p7260) target = $region52
      $region51: #{tpu_custom_call.1} parent=5 // pred_region
        %s7263 = ssub.s32 %s21, 2
        // Predicated region
        $region53: #{tpu_custom_call.1} parent=51 // pred_check
          %p7264 = pneg %p118
        $region54: #{tpu_custom_call.1} parent=51 // pred_check_branch
          %7266 = sbr.rel (%p7264) target = $region56
        $region55: #{tpu_custom_call.1} parent=51 // pred_region
          %s7267 = sand.u32 %s103, 1
          %s7268 = scalar_lea.sflag [#allocation4], %s7267
          %s7269 = sand.u32 %s103, 1
          %s7270 = smul.addr %s7269, 128
          %s7271 = scalar_lea.vmem [#allocation7], %s7270
          %7272 = dma.done %s7268, 2048
        $region56: #{tpu_custom_call.1} parent=51 // pred_fallthru
          _
        // Predicated region
        $region57: #{tpu_custom_call.1} parent=51 // pred_check
          %p7273 = pneg %p144
        $region58: #{tpu_custom_call.1} parent=51 // pred_check_branch
          %7275 = sbr.rel (%p7273) target = $region60
        $region59: #{tpu_custom_call.1} parent=51 // pred_region
          %s7276 = sand.u32 %s129, 1
          %s7277 = scalar_lea.sflag [#allocation9], %s7276
          %s7278 = sand.u32 %s129, 1
          %s7279 = smul.addr %s7278, 512
          %s7280 = scalar_lea.vmem [#allocation8], %s7279
          %7281 = dma.done %s7277, 8192
        $region60: #{tpu_custom_call.1} parent=51 // pred_fallthru
          _
      $region52: #{tpu_custom_call.1} parent=5 // pred_fallthru
        _
    $region6: #{tpu_custom_call.1} parent=1 // loop_footer
      %s25 = sadd.s32 1, %s21
    $region7: #{tpu_custom_call.1} parent=1 // loop_footer_branch
      %20 = sbr.rel target = $region3
    $region8: #{tpu_custom_call.1} parent=1 // loop_exit
      _
    %7282 = vsyncpa [#allocation3], 1
    %s7283 = scalar_lea.sflag [#allocation3], 1
    %7284 = vsyncpa %s7283, 1
    %7285 = vsyncpa [#allocation6], 1
    %7286 = vsyncpa [#allocation4], 1
    %s7287 = scalar_lea.sflag [#allocation4], 1
    %7288 = vsyncpa %s7287, 1
    %7289 = vsyncpa [#allocation9], 1
    %s7290 = scalar_lea.sflag [#allocation9], 1
    %7291 = vsyncpa %s7290, 1

</llo_original>
